<compile_context>
chip_gen: v5e
topology: v5e:2x2
jax: 0.10.0
libtpu: 0.0.40
codegen_flags: <defaults>
</compile_context>

<pallas_src>
import jax
import jax.numpy as jnp
import numpy as np
from jax.experimental import pallas as pl
from jax.experimental.pallas import tpu as pltpu

HIDDEN = 32        # hidden_dim
N_HEADS = 4        # n_heads
HEAD_DIM = HIDDEN // N_HEADS
LN_EPS = 1e-5
NEG_INF = -1e30
TILE = 128         # query/key row tile (lane-dense score tensors)


def ddi_kernel(xq_ref, peq_ref, xk_ref, pek_ref, ga_ref, qid_ref, kid_ref,
               w_ref, vec_ref, out_ref, q_scr, acc_scr, m_scr, l_scr):
    """One (query-tile, key-tile) grid step.

    xq_ref, peq_ref, ga_ref : (TQ, C)   query-row tiles of x, pe, ga_output
    xk_ref, pek_ref         : (TK, C)   key-row tiles of x, pe
    qid_ref                 : (TQ, 1)   int32 batch id per query row (-2 pad)
    kid_ref                 : (1, TK)   int32 batch id per valid key row (-1 pad/masked)
    w_ref                   : (C, 4C)   [Wq*scale | Wk | Wv | Wo]
    vec_ref                 : (6, C)    [bq*scale, bk, bv, bo, gamma, beta]
    out_ref                 : (TQ, C)
    scratch: q_scr (TQ,C) f32, acc_scr (TQ,C) f32, m_scr/l_scr (TQ,H) f32
    """
    C = HIDDEN
    D = HEAD_DIM
    ki = pl.program_id(1)
    nk = pl.num_programs(1)
    vecs = vec_ref[...]

    @pl.when(ki == 0)
    def _init():
        # Q projection for this query tile (1/sqrt(head_dim) pre-folded into Wq/bq).
        q_in = xq_ref[...] + peq_ref[...]
        q_scr[...] = jnp.dot(q_in, w_ref[:, 0:C],
                             preferred_element_type=jnp.float32) + vecs[0:1]
        m_scr[...] = jnp.full(m_scr.shape, -jnp.inf, jnp.float32)
        l_scr[...] = jnp.zeros(l_scr.shape, jnp.float32)
        acc_scr[...] = jnp.zeros(acc_scr.shape, jnp.float32)

    # K / V projections for this key tile.
    k_in = xk_ref[...] + pek_ref[...]
    k = (jnp.dot(k_in, w_ref[:, C:2 * C],
                 preferred_element_type=jnp.float32) + vecs[1:2]).astype(jnp.bfloat16)
    v = (jnp.dot(xk_ref[...], w_ref[:, 2 * C:3 * C],
                 preferred_element_type=jnp.float32) + vecs[2:3]).astype(jnp.bfloat16)

    # In-kernel mask: same-batch AND key valid (invalid keys carry id -1).
    bias = jnp.where(qid_ref[...] == kid_ref[...],
                     jnp.float32(0.0), jnp.float32(NEG_INF))        # (TQ, TK)

    q = q_scr[...].astype(jnp.bfloat16)
    dn = (((1,), (1,)), ((), ()))                                    # q @ k^T
    for h in range(N_HEADS):                                         # static, H=4
        sl = slice(h * D, (h + 1) * D)
        s = jax.lax.dot_general(q[:, sl], k[:, sl], dn,
                                preferred_element_type=jnp.float32) + bias
        m_prev = m_scr[:, h:h + 1]
        m_new = jnp.maximum(m_prev, jnp.max(s, axis=-1, keepdims=True))
        alpha = jnp.exp(m_prev - m_new)
        p = jnp.exp(s - m_new)
        l_scr[:, h:h + 1] = alpha * l_scr[:, h:h + 1] + jnp.sum(p, axis=-1,
                                                                keepdims=True)
        acc_scr[:, sl] = alpha * acc_scr[:, sl] + jnp.dot(
            p.astype(jnp.bfloat16), v[:, sl], preferred_element_type=jnp.float32)
        m_scr[:, h:h + 1] = m_new

    @pl.when(ki == nk - 1)
    def _finalize():
        # Normalize each head's accumulator (EUP reciprocal on (TQ, D), not (TQ, TK)).
        for h in range(N_HEADS):
            sl = slice(h * D, (h + 1) * D)
            inv_l = pl.reciprocal(l_scr[:, h:h + 1], approx=True)
            acc_scr[:, sl] = acc_scr[:, sl] * inv_l
        # Single K=32 output projection (f32: runs once per query tile, cheap).
        sa = jnp.dot(acc_scr[...], w_ref[:, 3 * C:4 * C],
                     preferred_element_type=jnp.float32)
        out = sa + vecs[3:4] + ga_ref[...] + xq_ref[...]             # + bo, dropout=id
        mu = jnp.mean(out, axis=-1, keepdims=True)
        diff = out - mu
        var = jnp.mean(diff * diff, axis=-1, keepdims=True)
        out_ref[...] = diff * jax.lax.rsqrt(var + LN_EPS) * vecs[4:5] + vecs[5:6]


def ddi_forward(x, pe, x_mask, ga_output, batch_e, params, *, tile=TILE):
    B, N, C = x.shape
    assert C == HIDDEN
    M = B * N
    m_pad = ((M + tile - 1) // tile) * tile
    pad = m_pad - M

    def pad_rows(a):
        return jnp.pad(a.reshape(M, C), ((0, pad), (0, 0)))

    x_f = pad_rows(x)
    pe_f = pad_rows(pe)
    ga_f = pad_rows(ga_output)

    batch_id = jnp.repeat(jnp.arange(B, dtype=jnp.int32), N)         # (M,)
    qid = jnp.pad(batch_id, (0, pad), constant_values=-2).reshape(m_pad, 1)
    key_valid = jnp.logical_not(x_mask.reshape(M))
    kid_core = jnp.where(key_valid, batch_id, jnp.int32(-1))
    kid = jnp.pad(kid_core, (0, pad), constant_values=-1).reshape(1, m_pad)

    nq = m_pad // tile
    nk = m_pad // tile

    grid_spec = pltpu.PrefetchScalarGridSpec(
        num_scalar_prefetch=0,
        grid=(nq, nk),
        in_specs=[
            pl.BlockSpec((tile, C), lambda qi, ki: (qi, 0)),        # x   (query tile)
            pl.BlockSpec((tile, C), lambda qi, ki: (qi, 0)),        # pe  (query tile)
            pl.BlockSpec((tile, C), lambda qi, ki: (ki, 0)),        # x   (key tile)
            pl.BlockSpec((tile, C), lambda qi, ki: (ki, 0)),        # pe  (key tile)
            pl.BlockSpec((tile, C), lambda qi, ki: (qi, 0)),        # ga  (query tile)
            pl.BlockSpec((tile, 1), lambda qi, ki: (qi, 0)),        # qid
            pl.BlockSpec((1, tile), lambda qi, ki: (0, ki)),        # kid
            pl.BlockSpec((C, 4 * C), lambda qi, ki: (0, 0)),        # packed weights
            pl.BlockSpec((6, C), lambda qi, ki: (0, 0)),            # packed vectors
        ],
        out_specs=pl.BlockSpec((tile, C), lambda qi, ki: (qi, 0)),
        scratch_shapes=[
            pltpu.VMEM((tile, C), jnp.float32),                     # q tile
            pltpu.VMEM((tile, C), jnp.float32),                     # per-head acc
            pltpu.VMEM((tile, N_HEADS), jnp.float32),               # online max
            pltpu.VMEM((tile, N_HEADS), jnp.float32),               # online sum
        ],
    )

    out_flat = pl.pallas_call(
        ddi_kernel,
        out_shape=jax.ShapeDtypeStruct((m_pad, C), jnp.float32),
        grid_spec=grid_spec,
        compiler_params=pltpu.CompilerParams(
            dimension_semantics=("parallel", "arbitrary"),
            vmem_limit_bytes=32 * 1024 * 1024),
    )(x_f, pe_f, x_f, pe_f, ga_f, qid, kid, params["w_all"], params["vec_all"])

    return out_flat[:M].reshape(B, N, C), batch_e


def ddi_reference(x, pe, x_mask, ga_output, params):
    """Pure-JAX f32 reference mirroring nn.MultiheadAttention + LayerNorm."""
    B, N, C = x.shape
    H, D = N_HEADS, HEAD_DIM
    qk = x + pe
    q = qk @ params["wq"] + params["bq"]
    k = qk @ params["wk"] + params["bk"]
    v = x @ params["wv"] + params["bv"]
    q = q.reshape(B, N, H, D).transpose(0, 2, 1, 3)
    k = k.reshape(B, N, H, D).transpose(0, 2, 1, 3)
    v = v.reshape(B, N, H, D).transpose(0, 2, 1, 3)
    s = jnp.einsum("bhnd,bhmd->bhnm", q, k) / jnp.sqrt(jnp.float32(D))
    bias = x_mask.astype(jnp.float32)[:, None, None, :] * NEG_INF
    p = jax.nn.softmax(s + bias, axis=-1)
    o = jnp.einsum("bhnm,bhmd->bhnd", p, v).transpose(0, 2, 1, 3).reshape(B, N, C)
    sa = o @ params["wo"] + params["bo"]
    out = sa + ga_output + x
    mu = out.mean(-1, keepdims=True)
    var = ((out - mu) ** 2).mean(-1, keepdims=True)
    return (out - mu) * jax.lax.rsqrt(var + LN_EPS) * params["gamma"] + params["beta"]


def make_params(key, hidden):
    ks = jax.random.split(key, 4)
    C = hidden
    # nn.MultiheadAttention: in_proj_weight (3C, C), in_proj_bias (3C,)
    in_proj_w = 0.05 * jax.random.normal(ks[0], (3 * C, C), jnp.float32)
    in_proj_b = 0.05 * jax.random.normal(ks[1], (3 * C,), jnp.float32)
    out_proj_w = 0.05 * jax.random.normal(ks[2], (C, C), jnp.float32)
    out_proj_b = 0.05 * jax.random.normal(ks[3], (C,), jnp.float32)

    wq = in_proj_w[0 * C:1 * C].T
    wk = in_proj_w[1 * C:2 * C].T
    wv = in_proj_w[2 * C:3 * C].T
    wo = out_proj_w.T
    bq = in_proj_b[0 * C:1 * C].reshape(1, C)
    bk = in_proj_b[1 * C:2 * C].reshape(1, C)
    bv = in_proj_b[2 * C:3 * C].reshape(1, C)
    bo = out_proj_b.reshape(1, C)
    gamma = jnp.ones((1, C), jnp.float32)    # LayerNorm default init
    beta = jnp.zeros((1, C), jnp.float32)

    # packed kernel operands: fold 1/sqrt(head_dim) into Wq / bq host-side
    scale = 1.0 / np.sqrt(HEAD_DIM).astype(np.float32)
    w_all = jnp.concatenate([wq * scale, wk, wv, wo], axis=1)          # (C, 4C)
    vec_all = jnp.concatenate([bq * scale, bk, bv, bo, gamma, beta],
                              axis=0)                                  # (6, C)

    return {
        "wq": wq, "wk": wk, "wv": wv, "wo": wo,
        "bq": bq, "bk": bk, "bv": bv, "bo": bo,
        "gamma": gamma, "beta": beta,
        "w_all": w_all, "vec_all": vec_all,
    }


if __name__ == "__main__":
    # B*N = 160 -> padded to 256 rows -> a 2x2 (query-tile, key-tile) grid, so the
    # online-softmax accumulation across key tiles and the batch-id mask are exercised.
    B, N, C = 2, 80, HIDDEN
    key = jax.random.PRNGKey(0)
    k_x, k_pe, k_ga, k_e, k_p = jax.random.split(key, 5)

    x = jax.random.normal(k_x, (B, N, C), jnp.float32)
    pe = 0.1 * jax.random.normal(k_pe, (B, N, C), jnp.float32)

    # key padding mask (True = padded key): batch 0 last 5, batch 1 last 12 positions
    valid_lens = jnp.array([75, 68])
    x_mask = jnp.arange(N)[None, :] >= valid_lens[:, None]

    # stand-in for the (graph2batch + zero-pad) graph branch output:
    # node counts [70, 60] -> zero padding to N
    ga_raw = jax.random.normal(k_ga, (B, N, C), jnp.float32)
    node_valid = jnp.arange(N)[None, :] < jnp.array([70, 60])[:, None]
    ga_output = ga_raw * node_valid[:, :, None].astype(jnp.float32)

    # batch_e is produced by the (untranslated) graph sublayer; pass-through dummy
    batch_e = jax.random.normal(k_e, (130, C), jnp.float32)

    params = make_params(k_p, C)

    out, e_out = ddi_forward(x, pe, x_mask, ga_output, batch_e, params)
    out = jax.block_until_ready(out)

    ref = ddi_reference(x, pe, x_mask, ga_output, params)
    # bf16 MXU operands + approximate reciprocal -> slightly looser tolerance than
    # the f32 reference, still far below any structural-error scale.
    np.testing.assert_allclose(np.asarray(out), np.asarray(ref), rtol=2e-3, atol=2e-3)

    print("KERNEL_OK")
</pallas_src>

<mosaic_0001>
module attributes {stable_mosaic.version = 11 : i64} {
  func.func @ddi_kernel(%arg0: i32, %arg1: i32, %arg2: memref<128x32xf32, #tpu.memory_space<vmem>>, %arg3: memref<128x32xf32, #tpu.memory_space<vmem>>, %arg4: memref<128x32xf32, #tpu.memory_space<vmem>>, %arg5: memref<128x32xf32, #tpu.memory_space<vmem>>, %arg6: memref<128x32xf32, #tpu.memory_space<vmem>>, %arg7: memref<128x1xi32, #tpu.memory_space<vmem>>, %arg8: memref<1x128xi32, #tpu.memory_space<vmem>>, %arg9: memref<32x128xf32, #tpu.memory_space<vmem>>, %arg10: memref<6x32xf32, #tpu.memory_space<vmem>>, %arg11: memref<128x32xf32, #tpu.memory_space<vmem>>, %arg12: memref<128x32xf32, #tpu.memory_space<vmem>>, %arg13: memref<128x32xf32, #tpu.memory_space<vmem>>, %arg14: memref<128x4xf32, #tpu.memory_space<vmem>>, %arg15: memref<128x4xf32, #tpu.memory_space<vmem>>) attributes {dimension_semantics = [#tpu.dimension_semantics<parallel>, #tpu.dimension_semantics<arbitrary>], iteration_bounds = array<i64: 2, 2>, scalar_prefetch = 0 : i64, scratch_operands = 4 : i64, tpu.core_type = #tpu.core_type<tc>, window_params = [{transform_indices = @transform_0, window_bounds = array<i64: 128, 32>}, {transform_indices = @transform_1, window_bounds = array<i64: 128, 32>}, {transform_indices = @transform_2, window_bounds = array<i64: 128, 32>}, {transform_indices = @transform_3, window_bounds = array<i64: 128, 32>}, {transform_indices = @transform_4, window_bounds = array<i64: 128, 32>}, {transform_indices = @transform_5, window_bounds = array<i64: 128, 1>}, {transform_indices = @transform_6, window_bounds = array<i64: 1, 128>}, {pipeline_mode = #tpu.pipeline_mode<synchronous>, transform_indices = @transform_7, window_bounds = array<i64: 32, 128>}, {pipeline_mode = #tpu.pipeline_mode<synchronous>, transform_indices = @transform_8, window_bounds = array<i64: 6, 32>}, {transform_indices = @transform_9, window_bounds = array<i64: 128, 32>}]} {
    %c0 = arith.constant 0 : index
    %c0_0 = arith.constant 0 : index
    %0 = vector.load %arg10[%c0, %c0_0] : memref<6x32xf32, #tpu.memory_space<vmem>>, vector<6x32xf32>
    %c0_i32 = arith.constant 0 : i32
    %1 = arith.cmpi eq, %arg1, %c0_i32 : i32
    %2 = arith.extui %1 : i1 to i32
    %c0_i32_1 = arith.constant 0 : i32
    %3 = arith.cmpi ne, %2, %c0_i32_1 : i32
    scf.if %3 {
      %c0_78 = arith.constant 0 : index
      %c0_79 = arith.constant 0 : index
      %145 = vector.load %arg2[%c0_78, %c0_79] : memref<128x32xf32, #tpu.memory_space<vmem>>, vector<128x32xf32>
      %c0_80 = arith.constant 0 : index
      %c0_81 = arith.constant 0 : index
      %146 = vector.load %arg3[%c0_80, %c0_81] : memref<128x32xf32, #tpu.memory_space<vmem>>, vector<128x32xf32>
      %147 = arith.addf %145, %146 : vector<128x32xf32>
      %c0_82 = arith.constant 0 : index
      %c0_83 = arith.constant 0 : index
      %148 = vector.load %arg9[%c0_82, %c0_83] : memref<32x128xf32, #tpu.memory_space<vmem>>, vector<32x32xf32>
      %cst_84 = arith.constant dense<0.000000e+00> : vector<128x32xf32>
      %149 = tpu.matmul %147, %148, %cst_84 {dimension_numbers = #tpu.dot_dimension_numbers<[1], [0], [0], [1], [0, 0, 1, 1], [], []>} : vector<128x32xf32>, vector<32x32xf32>, vector<128x32xf32> -> vector<128x32xf32>
      %150 = vector.extract_strided_slice %0 {offsets = [0, 0], sizes = [1, 32], strides = [1, 1]} : vector<6x32xf32> to vector<1x32xf32>
      %151 = vector.broadcast %150 : vector<1x32xf32> to vector<128x32xf32>
      %152 = arith.addf %149, %151 : vector<128x32xf32>
      %c0_85 = arith.constant 0 : index
      %c0_86 = arith.constant 0 : index
      %153 = vector.load %arg12[%c0_85, %c0_86] : memref<128x32xf32, #tpu.memory_space<vmem>>, vector<128x32xf32>
      tpu.vector_store %arg12[%c0_85, %c0_86], %152 {strides = array<i32>} : memref<128x32xf32, #tpu.memory_space<vmem>>, vector<128x32xf32>,
      %cst_87 = arith.constant 0xFF800000 : f32
      %154 = vector.broadcast %cst_87 : f32 to vector<128x4xf32>
      %c0_88 = arith.constant 0 : index
      %c0_89 = arith.constant 0 : index
      %155 = vector.load %arg14[%c0_88, %c0_89] : memref<128x4xf32, #tpu.memory_space<vmem>>, vector<128x4xf32>
      tpu.vector_store %arg14[%c0_88, %c0_89], %154 {strides = array<i32>} : memref<128x4xf32, #tpu.memory_space<vmem>>, vector<128x4xf32>,
      %cst_90 = arith.constant 0.000000e+00 : f32
      %156 = vector.broadcast %cst_90 : f32 to vector<128x4xf32>
      %c0_91 = arith.constant 0 : index
      %c0_92 = arith.constant 0 : index
      %157 = vector.load %arg15[%c0_91, %c0_92] : memref<128x4xf32, #tpu.memory_space<vmem>>, vector<128x4xf32>
      tpu.vector_store %arg15[%c0_91, %c0_92], %156 {strides = array<i32>} : memref<128x4xf32, #tpu.memory_space<vmem>>, vector<128x4xf32>,
      %cst_93 = arith.constant 0.000000e+00 : f32
      %158 = vector.broadcast %cst_93 : f32 to vector<128x32xf32>
      %c0_94 = arith.constant 0 : index
      %c0_95 = arith.constant 0 : index
      %159 = vector.load %arg13[%c0_94, %c0_95] : memref<128x32xf32, #tpu.memory_space<vmem>>, vector<128x32xf32>
      tpu.vector_store %arg13[%c0_94, %c0_95], %158 {strides = array<i32>} : memref<128x32xf32, #tpu.memory_space<vmem>>, vector<128x32xf32>,
    } else {
    }
    %c0_2 = arith.constant 0 : index
    %c0_3 = arith.constant 0 : index
    %4 = vector.load %arg4[%c0_2, %c0_3] : memref<128x32xf32, #tpu.memory_space<vmem>>, vector<128x32xf32>
    %c0_4 = arith.constant 0 : index
    %c0_5 = arith.constant 0 : index
    %5 = vector.load %arg5[%c0_4, %c0_5] : memref<128x32xf32, #tpu.memory_space<vmem>>, vector<128x32xf32>
    %6 = arith.addf %4, %5 : vector<128x32xf32>
    %c0_6 = arith.constant 0 : index
    %c32 = arith.constant 32 : index
    %7 = vector.load %arg9[%c0_6, %c32] : memref<32x128xf32, #tpu.memory_space<vmem>>, vector<32x32xf32>
    %cst = arith.constant dense<0.000000e+00> : vector<128x32xf32>
    %8 = tpu.matmul %6, %7, %cst {dimension_numbers = #tpu.dot_dimension_numbers<[1], [0], [0], [1], [0, 0, 1, 1], [], []>} : vector<128x32xf32>, vector<32x32xf32>, vector<128x32xf32> -> vector<128x32xf32>
    %9 = vector.extract_strided_slice %0 {offsets = [1, 0], sizes = [1, 32], strides = [1, 1]} : vector<6x32xf32> to vector<1x32xf32>
    %10 = vector.broadcast %9 : vector<1x32xf32> to vector<128x32xf32>
    %11 = arith.addf %8, %10 : vector<128x32xf32>
    %12 = arith.truncf %11 : vector<128x32xf32> to vector<128x32xbf16>
    %c0_7 = arith.constant 0 : index
    %c0_8 = arith.constant 0 : index
    %13 = vector.load %arg4[%c0_7, %c0_8] : memref<128x32xf32, #tpu.memory_space<vmem>>, vector<128x32xf32>
    %c0_9 = arith.constant 0 : index
    %c64 = arith.constant 64 : index
    %14 = vector.load %arg9[%c0_9, %c64] : memref<32x128xf32, #tpu.memory_space<vmem>>, vector<32x32xf32>
    %cst_10 = arith.constant dense<0.000000e+00> : vector<128x32xf32>
    %15 = tpu.matmul %13, %14, %cst_10 {dimension_numbers = #tpu.dot_dimension_numbers<[1], [0], [0], [1], [0, 0, 1, 1], [], []>} : vector<128x32xf32>, vector<32x32xf32>, vector<128x32xf32> -> vector<128x32xf32>
    %16 = vector.extract_strided_slice %0 {offsets = [2, 0], sizes = [1, 32], strides = [1, 1]} : vector<6x32xf32> to vector<1x32xf32>
    %17 = vector.broadcast %16 : vector<1x32xf32> to vector<128x32xf32>
    %18 = arith.addf %15, %17 : vector<128x32xf32>
    %19 = arith.truncf %18 : vector<128x32xf32> to vector<128x32xbf16>
    %c0_11 = arith.constant 0 : index
    %c0_12 = arith.constant 0 : index
    %20 = vector.load %arg7[%c0_11, %c0_12] : memref<128x1xi32, #tpu.memory_space<vmem>>, vector<128x1xi32>
    %c0_13 = arith.constant 0 : index
    %c0_14 = arith.constant 0 : index
    %21 = vector.load %arg8[%c0_13, %c0_14] : memref<1x128xi32, #tpu.memory_space<vmem>>, vector<1x128xi32>
    %22 = vector.broadcast %20 : vector<128x1xi32> to vector<128x128xi32>
    %23 = vector.broadcast %21 : vector<1x128xi32> to vector<128x128xi32>
    %24 = arith.cmpi eq, %22, %23 : vector<128x128xi32>
    %cst_15 = arith.constant 0.000000e+00 : f32
    %cst_16 = arith.constant -1.000000e+30 : f32
    %25 = vector.broadcast %cst_15 : f32 to vector<128x128xf32>
    %26 = vector.broadcast %cst_16 : f32 to vector<128x128xf32>
    %27 = arith.select %24, %25, %26 : vector<128x128xi1>, vector<128x128xf32>
    %c0_17 = arith.constant 0 : index
    %c0_18 = arith.constant 0 : index
    %28 = vector.load %arg12[%c0_17, %c0_18] : memref<128x32xf32, #tpu.memory_space<vmem>>, vector<128x32xf32>
    %29 = arith.truncf %28 : vector<128x32xf32> to vector<128x32xbf16>
    %30 = vector.extract_strided_slice %29 {offsets = [0, 0], sizes = [128, 8], strides = [1, 1]} : vector<128x32xbf16> to vector<128x8xbf16>
    %31 = vector.extract_strided_slice %12 {offsets = [0, 0], sizes = [128, 8], strides = [1, 1]} : vector<128x32xbf16> to vector<128x8xbf16>
    %cst_19 = arith.constant dense<0.000000e+00> : vector<128x128xf32>
    %32 = tpu.matmul %30, %31, %cst_19 {dimension_numbers = #tpu.dot_dimension_numbers<[1], [1], [0], [0], [0, 0, 1, 0], [], []>} : vector<128x8xbf16>, vector<128x8xbf16>, vector<128x128xf32> -> vector<128x128xf32>
    %33 = arith.addf %32, %27 : vector<128x128xf32>
    %c0_20 = arith.constant 0 : index
    %c0_21 = arith.constant 0 : index
    %34 = vector.load %arg14[%c0_20, %c0_21] : memref<128x4xf32, #tpu.memory_space<vmem>>, vector<128x1xf32>
    %cst_22 = arith.constant dense<0xFF800000> : vector<128xf32>
    %35 = vector.multi_reduction <maximumf>, %33, %cst_22 [1] : vector<128x128xf32> to vector<128xf32>
    %36 = vector.shape_cast %35 : vector<128xf32> to vector<128x1xf32>
    %37 = arith.maximumf %34, %36 : vector<128x1xf32>
    %38 = arith.subf %34, %37 : vector<128x1xf32>
    %39 = math.exp %38 : vector<128x1xf32>
    %40 = vector.broadcast %37 : vector<128x1xf32> to vector<128x128xf32>
    %41 = arith.subf %33, %40 : vector<128x128xf32>
    %42 = math.exp %41 : vector<128x128xf32>
    %c0_23 = arith.constant 0 : index
    %c0_24 = arith.constant 0 : index
    %43 = vector.load %arg15[%c0_23, %c0_24] : memref<128x4xf32, #tpu.memory_space<vmem>>, vector<128x1xf32>
    %44 = arith.mulf %39, %43 : vector<128x1xf32>
    %cst_25 = arith.constant dense<0.000000e+00> : vector<128xf32>
    %45 = vector.multi_reduction <add>, %42, %cst_25 [1] : vector<128x128xf32> to vector<128xf32>
    %46 = vector.shape_cast %45 : vector<128xf32> to vector<128x1xf32>
    %47 = arith.addf %44, %46 : vector<128x1xf32>
    %c0_26 = arith.constant 0 : index
    %c0_27 = arith.constant 0 : index
    %48 = vector.load %arg15[%c0_26, %c0_27] : memref<128x4xf32, #tpu.memory_space<vmem>>, vector<128x1xf32>
    tpu.vector_store %arg15[%c0_26, %c0_27], %47 {strides = array<i32>} : memref<128x4xf32, #tpu.memory_space<vmem>>, vector<128x1xf32>,
    %c0_28 = arith.constant 0 : index
    %c0_29 = arith.constant 0 : index
    %49 = vector.load %arg13[%c0_28, %c0_29] : memref<128x32xf32, #tpu.memory_space<vmem>>, vector<128x8xf32>
    %50 = vector.broadcast %39 : vector<128x1xf32> to vector<128x8xf32>
    %51 = arith.mulf %50, %49 : vector<128x8xf32>
    %52 = arith.truncf %42 : vector<128x128xf32> to vector<128x128xbf16>
    %53 = vector.extract_strided_slice %19 {offsets = [0, 0], sizes = [128, 8], strides = [1, 1]} : vector<128x32xbf16> to vector<128x8xbf16>
    %cst_30 = arith.constant dense<0.000000e+00> : vector<128x8xf32>
    %54 = tpu.matmul %52, %53, %cst_30 {dimension_numbers = #tpu.dot_dimension_numbers<[1], [0], [0], [1], [0, 0, 1, 1], [], []>} : vector<128x128xbf16>, vector<128x8xbf16>, vector<128x8xf32> -> vector<128x8xf32>
    %55 = arith.addf %51, %54 : vector<128x8xf32>
    %c0_31 = arith.constant 0 : index
    %c0_32 = arith.constant 0 : index
    %56 = vector.load %arg13[%c0_31, %c0_32] : memref<128x32xf32, #tpu.memory_space<vmem>>, vector<128x8xf32>
    tpu.vector_store %arg13[%c0_31, %c0_32], %55 {strides = array<i32>} : memref<128x32xf32, #tpu.memory_space<vmem>>, vector<128x8xf32>,
    %c0_33 = arith.constant 0 : index
    %c0_34 = arith.constant 0 : index
    %57 = vector.load %arg14[%c0_33, %c0_34] : memref<128x4xf32, #tpu.memory_space<vmem>>, vector<128x1xf32>
    tpu.vector_store %arg14[%c0_33, %c0_34], %37 {strides = array<i32>} : memref<128x4xf32, #tpu.memory_space<vmem>>, vector<128x1xf32>,
    %58 = vector.extract_strided_slice %29 {offsets = [0, 8], sizes = [128, 8], strides = [1, 1]} : vector<128x32xbf16> to vector<128x8xbf16>
    %59 = vector.extract_strided_slice %12 {offsets = [0, 8], sizes = [128, 8], strides = [1, 1]} : vector<128x32xbf16> to vector<128x8xbf16>
    %cst_35 = arith.constant dense<0.000000e+00> : vector<128x128xf32>
    %60 = tpu.matmul %58, %59, %cst_35 {dimension_numbers = #tpu.dot_dimension_numbers<[1], [1], [0], [0], [0, 0, 1, 0], [], []>} : vector<128x8xbf16>, vector<128x8xbf16>, vector<128x128xf32> -> vector<128x128xf32>
    %61 = arith.addf %60, %27 : vector<128x128xf32>
    %c0_36 = arith.constant 0 : index
    %c1 = arith.constant 1 : index
    %62 = vector.load %arg14[%c0_36, %c1] : memref<128x4xf32, #tpu.memory_space<vmem>>, vector<128x1xf32>
    %cst_37 = arith.constant dense<0xFF800000> : vector<128xf32>
    %63 = vector.multi_reduction <maximumf>, %61, %cst_37 [1] : vector<128x128xf32> to vector<128xf32>
    %64 = vector.shape_cast %63 : vector<128xf32> to vector<128x1xf32>
    %65 = arith.maximumf %62, %64 : vector<128x1xf32>
    %66 = arith.subf %62, %65 : vector<128x1xf32>
    %67 = math.exp %66 : vector<128x1xf32>
    %68 = vector.broadcast %65 : vector<128x1xf32> to vector<128x128xf32>
    %69 = arith.subf %61, %68 : vector<128x128xf32>
    %70 = math.exp %69 : vector<128x128xf32>
    %c0_38 = arith.constant 0 : index
    %c1_39 = arith.constant 1 : index
    %71 = vector.load %arg15[%c0_38, %c1_39] : memref<128x4xf32, #tpu.memory_space<vmem>>, vector<128x1xf32>
    %72 = arith.mulf %67, %71 : vector<128x1xf32>
    %cst_40 = arith.constant dense<0.000000e+00> : vector<128xf32>
    %73 = vector.multi_reduction <add>, %70, %cst_40 [1] : vector<128x128xf32> to vector<128xf32>
    %74 = vector.shape_cast %73 : vector<128xf32> to vector<128x1xf32>
    %75 = arith.addf %72, %74 : vector<128x1xf32>
    %c0_41 = arith.constant 0 : index
    %c1_42 = arith.constant 1 : index
    %76 = vector.load %arg15[%c0_41, %c1_42] : memref<128x4xf32, #tpu.memory_space<vmem>>, vector<128x1xf32>
    tpu.vector_store %arg15[%c0_41, %c1_42], %75 {strides = array<i32>} : memref<128x4xf32, #tpu.memory_space<vmem>>, vector<128x1xf32>,
    %c0_43 = arith.constant 0 : index
    %c8 = arith.constant 8 : index
    %77 = vector.load %arg13[%c0_43, %c8] : memref<128x32xf32, #tpu.memory_space<vmem>>, vector<128x8xf32>
    %78 = vector.broadcast %67 : vector<128x1xf32> to vector<128x8xf32>
    %79 = arith.mulf %78, %77 : vector<128x8xf32>
    %80 = arith.truncf %70 : vector<128x128xf32> to vector<128x128xbf16>
    %81 = vector.extract_strided_slice %19 {offsets = [0, 8], sizes = [128, 8], strides = [1, 1]} : vector<128x32xbf16> to vector<128x8xbf16>
    %cst_44 = arith.constant dense<0.000000e+00> : vector<128x8xf32>
    %82 = tpu.matmul %80, %81, %cst_44 {dimension_numbers = #tpu.dot_dimension_numbers<[1], [0], [0], [1], [0, 0, 1, 1], [], []>} : vector<128x128xbf16>, vector<128x8xbf16>, vector<128x8xf32> -> vector<128x8xf32>
    %83 = arith.addf %79, %82 : vector<128x8xf32>
    %c0_45 = arith.constant 0 : index
    %c8_46 = arith.constant 8 : index
    %84 = vector.load %arg13[%c0_45, %c8_46] : memref<128x32xf32, #tpu.memory_space<vmem>>, vector<128x8xf32>
    tpu.vector_store %arg13[%c0_45, %c8_46], %83 {strides = array<i32>} : memref<128x32xf32, #tpu.memory_space<vmem>>, vector<128x8xf32>,
    %c0_47 = arith.constant 0 : index
    %c1_48 = arith.constant 1 : index
    %85 = vector.load %arg14[%c0_47, %c1_48] : memref<128x4xf32, #tpu.memory_space<vmem>>, vector<128x1xf32>
    tpu.vector_store %arg14[%c0_47, %c1_48], %65 {strides = array<i32>} : memref<128x4xf32, #tpu.memory_space<vmem>>, vector<128x1xf32>,
    %86 = vector.extract_strided_slice %29 {offsets = [0, 16], sizes = [128, 8], strides = [1, 1]} : vector<128x32xbf16> to vector<128x8xbf16>
    %87 = vector.extract_strided_slice %12 {offsets = [0, 16], sizes = [128, 8], strides = [1, 1]} : vector<128x32xbf16> to vector<128x8xbf16>
    %cst_49 = arith.constant dense<0.000000e+00> : vector<128x128xf32>
    %88 = tpu.matmul %86, %87, %cst_49 {dimension_numbers = #tpu.dot_dimension_numbers<[1], [1], [0], [0], [0, 0, 1, 0], [], []>} : vector<128x8xbf16>, vector<128x8xbf16>, vector<128x128xf32> -> vector<128x128xf32>
    %89 = arith.addf %88, %27 : vector<128x128xf32>
    %c0_50 = arith.constant 0 : index
    %c2 = arith.constant 2 : index
    %90 = vector.load %arg14[%c0_50, %c2] : memref<128x4xf32, #tpu.memory_space<vmem>>, vector<128x1xf32>
    %cst_51 = arith.constant dense<0xFF800000> : vector<128xf32>
    %91 = vector.multi_reduction <maximumf>, %89, %cst_51 [1] : vector<128x128xf32> to vector<128xf32>
    %92 = vector.shape_cast %91 : vector<128xf32> to vector<128x1xf32>
    %93 = arith.maximumf %90, %92 : vector<128x1xf32>
    %94 = arith.subf %90, %93 : vector<128x1xf32>
    %95 = math.exp %94 : vector<128x1xf32>
    %96 = vector.broadcast %93 : vector<128x1xf32> to vector<128x128xf32>
    %97 = arith.subf %89, %96 : vector<128x128xf32>
    %98 = math.exp %97 : vector<128x128xf32>
    %c0_52 = arith.constant 0 : index
    %c2_53 = arith.constant 2 : index
    %99 = vector.load %arg15[%c0_52, %c2_53] : memref<128x4xf32, #tpu.memory_space<vmem>>, vector<128x1xf32>
    %100 = arith.mulf %95, %99 : vector<128x1xf32>
    %cst_54 = arith.constant dense<0.000000e+00> : vector<128xf32>
    %101 = vector.multi_reduction <add>, %98, %cst_54 [1] : vector<128x128xf32> to vector<128xf32>
    %102 = vector.shape_cast %101 : vector<128xf32> to vector<128x1xf32>
    %103 = arith.addf %100, %102 : vector<128x1xf32>
    %c0_55 = arith.constant 0 : index
    %c2_56 = arith.constant 2 : index
    %104 = vector.load %arg15[%c0_55, %c2_56] : memref<128x4xf32, #tpu.memory_space<vmem>>, vector<128x1xf32>
    tpu.vector_store %arg15[%c0_55, %c2_56], %103 {strides = array<i32>} : memref<128x4xf32, #tpu.memory_space<vmem>>, vector<128x1xf32>,
    %c0_57 = arith.constant 0 : index
    %c16 = arith.constant 16 : index
    %105 = vector.load %arg13[%c0_57, %c16] : memref<128x32xf32, #tpu.memory_space<vmem>>, vector<128x8xf32>
    %106 = vector.broadcast %95 : vector<128x1xf32> to vector<128x8xf32>
    %107 = arith.mulf %106, %105 : vector<128x8xf32>
    %108 = arith.truncf %98 : vector<128x128xf32> to vector<128x128xbf16>
    %109 = vector.extract_strided_slice %19 {offsets = [0, 16], sizes = [128, 8], strides = [1, 1]} : vector<128x32xbf16> to vector<128x8xbf16>
    %cst_58 = arith.constant dense<0.000000e+00> : vector<128x8xf32>
    %110 = tpu.matmul %108, %109, %cst_58 {dimension_numbers = #tpu.dot_dimension_numbers<[1], [0], [0], [1], [0, 0, 1, 1], [], []>} : vector<128x128xbf16>, vector<128x8xbf16>, vector<128x8xf32> -> vector<128x8xf32>
    %111 = arith.addf %107, %110 : vector<128x8xf32>
    %c0_59 = arith.constant 0 : index
    %c16_60 = arith.constant 16 : index
    %112 = vector.load %arg13[%c0_59, %c16_60] : memref<128x32xf32, #tpu.memory_space<vmem>>, vector<128x8xf32>
    tpu.vector_store %arg13[%c0_59, %c16_60], %111 {strides = array<i32>} : memref<128x32xf32, #tpu.memory_space<vmem>>, vector<128x8xf32>,
    %c0_61 = arith.constant 0 : index
    %c2_62 = arith.constant 2 : index
    %113 = vector.load %arg14[%c0_61, %c2_62] : memref<128x4xf32, #tpu.memory_space<vmem>>, vector<128x1xf32>
    tpu.vector_store %arg14[%c0_61, %c2_62], %93 {strides = array<i32>} : memref<128x4xf32, #tpu.memory_space<vmem>>, vector<128x1xf32>,
    %114 = vector.extract_strided_slice %29 {offsets = [0, 24], sizes = [128, 8], strides = [1, 1]} : vector<128x32xbf16> to vector<128x8xbf16>
    %115 = vector.extract_strided_slice %12 {offsets = [0, 24], sizes = [128, 8], strides = [1, 1]} : vector<128x32xbf16> to vector<128x8xbf16>
    %cst_63 = arith.constant dense<0.000000e+00> : vector<128x128xf32>
    %116 = tpu.matmul %114, %115, %cst_63 {dimension_numbers = #tpu.dot_dimension_numbers<[1], [1], [0], [0], [0, 0, 1, 0], [], []>} : vector<128x8xbf16>, vector<128x8xbf16>, vector<128x128xf32> -> vector<128x128xf32>
    %117 = arith.addf %116, %27 : vector<128x128xf32>
    %c0_64 = arith.constant 0 : index
    %c3 = arith.constant 3 : index
    %118 = vector.load %arg14[%c0_64, %c3] : memref<128x4xf32, #tpu.memory_space<vmem>>, vector<128x1xf32>
    %cst_65 = arith.constant dense<0xFF800000> : vector<128xf32>
    %119 = vector.multi_reduction <maximumf>, %117, %cst_65 [1] : vector<128x128xf32> to vector<128xf32>
    %120 = vector.shape_cast %119 : vector<128xf32> to vector<128x1xf32>
    %121 = arith.maximumf %118, %120 : vector<128x1xf32>
    %122 = arith.subf %118, %121 : vector<128x1xf32>
    %123 = math.exp %122 : vector<128x1xf32>
    %124 = vector.broadcast %121 : vector<128x1xf32> to vector<128x128xf32>
    %125 = arith.subf %117, %124 : vector<128x128xf32>
    %126 = math.exp %125 : vector<128x128xf32>
    %c0_66 = arith.constant 0 : index
    %c3_67 = arith.constant 3 : index
    %127 = vector.load %arg15[%c0_66, %c3_67] : memref<128x4xf32, #tpu.memory_space<vmem>>, vector<128x1xf32>
    %128 = arith.mulf %123, %127 : vector<128x1xf32>
    %cst_68 = arith.constant dense<0.000000e+00> : vector<128xf32>
    %129 = vector.multi_reduction <add>, %126, %cst_68 [1] : vector<128x128xf32> to vector<128xf32>
    %130 = vector.shape_cast %129 : vector<128xf32> to vector<128x1xf32>
    %131 = arith.addf %128, %130 : vector<128x1xf32>
    %c0_69 = arith.constant 0 : index
    %c3_70 = arith.constant 3 : index
    %132 = vector.load %arg15[%c0_69, %c3_70] : memref<128x4xf32, #tpu.memory_space<vmem>>, vector<128x1xf32>
    tpu.vector_store %arg15[%c0_69, %c3_70], %131 {strides = array<i32>} : memref<128x4xf32, #tpu.memory_space<vmem>>, vector<128x1xf32>,
    %c0_71 = arith.constant 0 : index
    %c24 = arith.constant 24 : index
    %133 = vector.load %arg13[%c0_71, %c24] : memref<128x32xf32, #tpu.memory_space<vmem>>, vector<128x8xf32>
    %134 = vector.broadcast %123 : vector<128x1xf32> to vector<128x8xf32>
    %135 = arith.mulf %134, %133 : vector<128x8xf32>
    %136 = arith.truncf %126 : vector<128x128xf32> to vector<128x128xbf16>
    %137 = vector.extract_strided_slice %19 {offsets = [0, 24], sizes = [128, 8], strides = [1, 1]} : vector<128x32xbf16> to vector<128x8xbf16>
    %cst_72 = arith.constant dense<0.000000e+00> : vector<128x8xf32>
    %138 = tpu.matmul %136, %137, %cst_72 {dimension_numbers = #tpu.dot_dimension_numbers<[1], [0], [0], [1], [0, 0, 1, 1], [], []>} : vector<128x128xbf16>, vector<128x8xbf16>, vector<128x8xf32> -> vector<128x8xf32>
    %139 = arith.addf %135, %138 : vector<128x8xf32>
    %c0_73 = arith.constant 0 : index
    %c24_74 = arith.constant 24 : index
    %140 = vector.load %arg13[%c0_73, %c24_74] : memref<128x32xf32, #tpu.memory_space<vmem>>, vector<128x8xf32>
    tpu.vector_store %arg13[%c0_73, %c24_74], %139 {strides = array<i32>} : memref<128x32xf32, #tpu.memory_space<vmem>>, vector<128x8xf32>,
    %c0_75 = arith.constant 0 : index
    %c3_76 = arith.constant 3 : index
    %141 = vector.load %arg14[%c0_75, %c3_76] : memref<128x4xf32, #tpu.memory_space<vmem>>, vector<128x1xf32>
    tpu.vector_store %arg14[%c0_75, %c3_76], %121 {strides = array<i32>} : memref<128x4xf32, #tpu.memory_space<vmem>>, vector<128x1xf32>,
    %c1_i32 = arith.constant 1 : i32
    %142 = arith.cmpi eq, %arg1, %c1_i32 : i32
    %143 = arith.extui %142 : i1 to i32
    %c0_i32_77 = arith.constant 0 : i32
    %144 = arith.cmpi ne, %143, %c0_i32_77 : i32
    scf.if %144 {
      %c0_78 = arith.constant 0 : index
      %c0_79 = arith.constant 0 : index
      %145 = vector.load %arg15[%c0_78, %c0_79] : memref<128x4xf32, #tpu.memory_space<vmem>>, vector<128x1xf32>
      %146 = tpu.reciprocal %145 {approx = true} : vector<128x1xf32> -> vector<128x1xf32>
      %c0_80 = arith.constant 0 : index
      %c0_81 = arith.constant 0 : index
      %147 = vector.load %arg13[%c0_80, %c0_81] : memref<128x32xf32, #tpu.memory_space<vmem>>, vector<128x8xf32>
      %148 = vector.broadcast %146 : vector<128x1xf32> to vector<128x8xf32>
      %149 = arith.mulf %147, %148 : vector<128x8xf32>
      %c0_82 = arith.constant 0 : index
      %c0_83 = arith.constant 0 : index
      %150 = vector.load %arg13[%c0_82, %c0_83] : memref<128x32xf32, #tpu.memory_space<vmem>>, vector<128x8xf32>
      tpu.vector_store %arg13[%c0_82, %c0_83], %149 {strides = array<i32>} : memref<128x32xf32, #tpu.memory_space<vmem>>, vector<128x8xf32>,
      %c0_84 = arith.constant 0 : index
      %c1_85 = arith.constant 1 : index
      %151 = vector.load %arg15[%c0_84, %c1_85] : memref<128x4xf32, #tpu.memory_space<vmem>>, vector<128x1xf32>
      %152 = tpu.reciprocal %151 {approx = true} : vector<128x1xf32> -> vector<128x1xf32>
      %c0_86 = arith.constant 0 : index
      %c8_87 = arith.constant 8 : index
      %153 = vector.load %arg13[%c0_86, %c8_87] : memref<128x32xf32, #tpu.memory_space<vmem>>, vector<128x8xf32>
      %154 = vector.broadcast %152 : vector<128x1xf32> to vector<128x8xf32>
      %155 = arith.mulf %153, %154 : vector<128x8xf32>
      %c0_88 = arith.constant 0 : index
      %c8_89 = arith.constant 8 : index
      %156 = vector.load %arg13[%c0_88, %c8_89] : memref<128x32xf32, #tpu.memory_space<vmem>>, vector<128x8xf32>
      tpu.vector_store %arg13[%c0_88, %c8_89], %155 {strides = array<i32>} : memref<128x32xf32, #tpu.memory_space<vmem>>, vector<128x8xf32>,
      %c0_90 = arith.constant 0 : index
      %c2_91 = arith.constant 2 : index
      %157 = vector.load %arg15[%c0_90, %c2_91] : memref<128x4xf32, #tpu.memory_space<vmem>>, vector<128x1xf32>
      %158 = tpu.reciprocal %157 {approx = true} : vector<128x1xf32> -> vector<128x1xf32>
      %c0_92 = arith.constant 0 : index
      %c16_93 = arith.constant 16 : index
      %159 = vector.load %arg13[%c0_92, %c16_93] : memref<128x32xf32, #tpu.memory_space<vmem>>, vector<128x8xf32>
      %160 = vector.broadcast %158 : vector<128x1xf32> to vector<128x8xf32>
      %161 = arith.mulf %159, %160 : vector<128x8xf32>
      %c0_94 = arith.constant 0 : index
      %c16_95 = arith.constant 16 : index
      %162 = vector.load %arg13[%c0_94, %c16_95] : memref<128x32xf32, #tpu.memory_space<vmem>>, vector<128x8xf32>
      tpu.vector_store %arg13[%c0_94, %c16_95], %161 {strides = array<i32>} : memref<128x32xf32, #tpu.memory_space<vmem>>, vector<128x8xf32>,
      %c0_96 = arith.constant 0 : index
      %c3_97 = arith.constant 3 : index
      %163 = vector.load %arg15[%c0_96, %c3_97] : memref<128x4xf32, #tpu.memory_space<vmem>>, vector<128x1xf32>
      %164 = tpu.reciprocal %163 {approx = true} : vector<128x1xf32> -> vector<128x1xf32>
      %c0_98 = arith.constant 0 : index
      %c24_99 = arith.constant 24 : index
      %165 = vector.load %arg13[%c0_98, %c24_99] : memref<128x32xf32, #tpu.memory_space<vmem>>, vector<128x8xf32>
      %166 = vector.broadcast %164 : vector<128x1xf32> to vector<128x8xf32>
      %167 = arith.mulf %165, %166 : vector<128x8xf32>
      %c0_100 = arith.constant 0 : index
      %c24_101 = arith.constant 24 : index
      %168 = vector.load %arg13[%c0_100, %c24_101] : memref<128x32xf32, #tpu.memory_space<vmem>>, vector<128x8xf32>
      tpu.vector_store %arg13[%c0_100, %c24_101], %167 {strides = array<i32>} : memref<128x32xf32, #tpu.memory_space<vmem>>, vector<128x8xf32>,
      %c0_102 = arith.constant 0 : index
      %c0_103 = arith.constant 0 : index
      %169 = vector.load %arg13[%c0_102, %c0_103] : memref<128x32xf32, #tpu.memory_space<vmem>>, vector<128x32xf32>
      %c0_104 = arith.constant 0 : index
      %c96 = arith.constant 96 : index
      %170 = vector.load %arg9[%c0_104, %c96] : memref<32x128xf32, #tpu.memory_space<vmem>>, vector<32x32xf32>
      %cst_105 = arith.constant dense<0.000000e+00> : vector<128x32xf32>
      %171 = tpu.matmul %169, %170, %cst_105 {dimension_numbers = #tpu.dot_dimension_numbers<[1], [0], [0], [1], [0, 0, 1, 1], [], []>} : vector<128x32xf32>, vector<32x32xf32>, vector<128x32xf32> -> vector<128x32xf32>
      %172 = vector.extract_strided_slice %0 {offsets = [3, 0], sizes = [1, 32], strides = [1, 1]} : vector<6x32xf32> to vector<1x32xf32>
      %173 = vector.broadcast %172 : vector<1x32xf32> to vector<128x32xf32>
      %174 = arith.addf %171, %173 : vector<128x32xf32>
      %c0_106 = arith.constant 0 : index
      %c0_107 = arith.constant 0 : index
      %175 = vector.load %arg6[%c0_106, %c0_107] : memref<128x32xf32, #tpu.memory_space<vmem>>, vector<128x32xf32>
      %176 = arith.addf %174, %175 : vector<128x32xf32>
      %c0_108 = arith.constant 0 : index
      %c0_109 = arith.constant 0 : index
      %177 = vector.load %arg2[%c0_108, %c0_109] : memref<128x32xf32, #tpu.memory_space<vmem>>, vector<128x32xf32>
      %178 = arith.addf %176, %177 : vector<128x32xf32>
      %cst_110 = arith.constant dense<0.000000e+00> : vector<128xf32>
      %179 = vector.multi_reduction <add>, %178, %cst_110 [1] : vector<128x32xf32> to vector<128xf32>
      %180 = vector.shape_cast %179 : vector<128xf32> to vector<128x1xf32>
      %cst_111 = arith.constant 3.200000e+01 : f32
      %181 = vector.broadcast %cst_111 : f32 to vector<128x1xf32>
      %182 = arith.divf %180, %181 : vector<128x1xf32>
      %183 = vector.broadcast %182 : vector<128x1xf32> to vector<128x32xf32>
      %184 = arith.subf %178, %183 : vector<128x32xf32>
      %185 = arith.mulf %184, %184 : vector<128x32xf32>
      %cst_112 = arith.constant dense<0.000000e+00> : vector<128xf32>
      %186 = vector.multi_reduction <add>, %185, %cst_112 [1] : vector<128x32xf32> to vector<128xf32>
      %187 = vector.shape_cast %186 : vector<128xf32> to vector<128x1xf32>
      %cst_113 = arith.constant 3.200000e+01 : f32
      %188 = vector.broadcast %cst_113 : f32 to vector<128x1xf32>
      %189 = arith.divf %187, %188 : vector<128x1xf32>
      %cst_114 = arith.constant 9.99999974E-6 : f32
      %190 = vector.broadcast %cst_114 : f32 to vector<128x1xf32>
      %191 = arith.addf %189, %190 : vector<128x1xf32>
      %192 = math.rsqrt %191 : vector<128x1xf32>
      %193 = vector.broadcast %192 : vector<128x1xf32> to vector<128x32xf32>
      %194 = arith.mulf %184, %193 : vector<128x32xf32>
      %195 = vector.extract_strided_slice %0 {offsets = [4, 0], sizes = [1, 32], strides = [1, 1]} : vector<6x32xf32> to vector<1x32xf32>
      %196 = vector.broadcast %195 : vector<1x32xf32> to vector<128x32xf32>
      %197 = arith.mulf %194, %196 : vector<128x32xf32>
      %198 = vector.extract_strided_slice %0 {offsets = [5, 0], sizes = [1, 32], strides = [1, 1]} : vector<6x32xf32> to vector<1x32xf32>
      %199 = vector.broadcast %198 : vector<1x32xf32> to vector<128x32xf32>
      %200 = arith.addf %197, %199 : vector<128x32xf32>
      %c0_115 = arith.constant 0 : index
      %c0_116 = arith.constant 0 : index
      %201 = vector.load %arg11[%c0_115, %c0_116] : memref<128x32xf32, #tpu.memory_space<vmem>>, vector<128x32xf32>
      tpu.vector_store %arg11[%c0_115, %c0_116], %200 {strides = array<i32>} : memref<128x32xf32, #tpu.memory_space<vmem>>, vector<128x32xf32>,
    } else {
    }
    return
  }
  func.func @transform_0(%arg0: i32, %arg1: i32) -> (i32, i32) {
    %c0_i32 = arith.constant 0 : i32
    %c0_i32_0 = arith.constant 0 : i32
    return %arg0, %c0_i32 : i32, i32
  }
  func.func @transform_1(%arg0: i32, %arg1: i32) -> (i32, i32) {
    %c0_i32 = arith.constant 0 : i32
    %c0_i32_0 = arith.constant 0 : i32
    return %arg0, %c0_i32 : i32, i32
  }
  func.func @transform_2(%arg0: i32, %arg1: i32) -> (i32, i32) {
    %c0_i32 = arith.constant 0 : i32
    %c0_i32_0 = arith.constant 0 : i32
    return %arg1, %c0_i32 : i32, i32
  }
  func.func @transform_3(%arg0: i32, %arg1: i32) -> (i32, i32) {
    %c0_i32 = arith.constant 0 : i32
    %c0_i32_0 = arith.constant 0 : i32
    return %arg1, %c0_i32 : i32, i32
  }
  func.func @transform_4(%arg0: i32, %arg1: i32) -> (i32, i32) {
    %c0_i32 = arith.constant 0 : i32
    %c0_i32_0 = arith.constant 0 : i32
    return %arg0, %c0_i32 : i32, i32
  }
  func.func @transform_5(%arg0: i32, %arg1: i32) -> (i32, i32) {
    %c0_i32 = arith.constant 0 : i32
    %c0_i32_0 = arith.constant 0 : i32
    return %arg0, %c0_i32 : i32, i32
  }
  func.func @transform_6(%arg0: i32, %arg1: i32) -> (i32, i32) {
    %c0_i32 = arith.constant 0 : i32
    %c0_i32_0 = arith.constant 0 : i32
    return %c0_i32, %arg1 : i32, i32
  }
  func.func @transform_7(%arg0: i32, %arg1: i32) -> (i32, i32) {
    %c0_i32 = arith.constant 0 : i32
    %c0_i32_0 = arith.constant 0 : i32
    %c0_i32_1 = arith.constant 0 : i32
    return %c0_i32, %c0_i32_0 : i32, i32
  }
  func.func @transform_8(%arg0: i32, %arg1: i32) -> (i32, i32) {
    %c0_i32 = arith.constant 0 : i32
    %c0_i32_0 = arith.constant 0 : i32
    %c0_i32_1 = arith.constant 0 : i32
    return %c0_i32, %c0_i32_0 : i32, i32
  }
  func.func @transform_9(%arg0: i32, %arg1: i32) -> (i32, i32) {
    %c0_i32 = arith.constant 0 : i32
    %c0_i32_0 = arith.constant 0 : i32
    return %arg0, %c0_i32 : i32, i32
  }
}

</mosaic_0001>

<llo_original>
// kernel: tpu_custom_call.1
$region0: #{tpu_custom_call.1}
  #allocation0 [shape = 'u32[]', space=smem, size = 0x4, offset = 0x4, fixed_abs, tag = 'smem constant byte address 0x4 - core index']
  #allocation1 [shape = 'u32[72,128]{1,0:T(1,128)}', space=vmem, size = 0x9000, scoped, tag = 'internal scratch']
  #allocation2 [shape = 'f32[128,32]{1,0:T(8,128)}', space=vmem, size = 0x10000, scoped, tag = 'scratch operand']
  #allocation3 [shape = 'f32[128,32]{1,0:T(8,128)}', space=vmem, size = 0x10000, scoped, tag = 'scratch operand']
  #allocation4 [shape = 'f32[128,4]{1,0:T(8,128)}', space=vmem, size = 0x10000, scoped, tag = 'scratch operand']
  #allocation5 [shape = 'f32[128,4]{1,0:T(8,128)}', space=vmem, size = 0x10000, scoped, tag = 'scratch operand']
  %s0 = inlined_call_operand.vmem [shape: f32[256,32], index: 0, kind: input, shape index: {}]
  %s1 = inlined_call_operand.vmem [shape: f32[256,32], index: 1, kind: input, shape index: {}]
  %s2 = inlined_call_operand.vmem [shape: f32[256,32], index: 2, kind: input, shape index: {}]
  %s3 = inlined_call_operand.vmem [shape: f32[256,32], index: 3, kind: input, shape index: {}]
  %s4 = inlined_call_operand.vmem [shape: f32[256,32], index: 4, kind: input, shape index: {}]
  %s5 = inlined_call_operand.vmem [shape: s32[256,1], index: 5, kind: input, shape index: {}]
  %s6 = inlined_call_operand.vmem [shape: s32[1,256], index: 6, kind: input, shape index: {}]
  %s7 = inlined_call_operand.vmem [shape: f32[32,128], index: 7, kind: input, shape index: {}]
  %s8 = inlined_call_operand.vmem [shape: f32[6,32], index: 8, kind: input, shape index: {}]
  %s9 = inlined_call_operand.vmem [shape: f32[256,32], index: 9, kind: output, shape index: {}]
  %s10 = sld [smem:[#allocation0]]
  $region77: #{tpu_custom_call.1} parent=0
    _
  %s12 = ssub.s32 1, %s10
  %s13 = scalar_select 0, %s12, %s10
  loop: start=0, step=1, limit=6
  $region2: #{tpu_custom_call.1} parent=0 // loop_pre_header
    _
  $region3: #{tpu_custom_call.1} parent=0 // loop_header
    %s15 = sphi 0, %s19
    %p16 = scmp.ge.s32.totalorder %s15, 6
    %s22 = sphi 0, %s34
    %s23 = sphi 0, %s30
    %s24 = sphi 0, %s22
    %s25 = sphi 0, %s23
    %s26 = sphi 0, %s24
    %s27 = sphi 0, %s25
    %s37 = sphi 0, %s39
    %s40 = sphi 0, %s37
    %s41 = sphi 0, %s40
    %s57 = sphi 0, %s41
    %s63 = sphi 0, %s65
    %s66 = sphi 0, %s63
    %s67 = sphi 0, %s66
    %s83 = sphi 0, %s67
    %s89 = sphi 0, %s91
    %s92 = sphi 0, %s89
    %s93 = sphi 0, %s92
    %s109 = sphi 0, %s93
    %s115 = sphi 0, %s117
    %s118 = sphi 0, %s115
    %s119 = sphi 0, %s118
    %s135 = sphi 0, %s119
    %s141 = sphi 0, %s143
    %s144 = sphi 0, %s141
    %s145 = sphi 0, %s144
    %s161 = sphi 0, %s145
    %s167 = sphi 0, %s169
    %s170 = sphi 0, %s167
    %s171 = sphi 0, %s170
    %s187 = sphi 0, %s171
    %s193 = sphi 0, %s195
    %s196 = sphi 0, %s193
    %s197 = sphi 0, %s196
    %s213 = sphi 0, %s197
    %s217 = sphi 0, %s217
    %s219 = sphi 0, %s217
    %s220 = sphi 0, %s219
    %s234 = sphi 0, %s220
    %s238 = sphi 0, %s238
    %s240 = sphi 0, %s238
    %s241 = sphi 0, %s240
    %s255 = sphi 0, %s241
    %s261 = sphi 0, %s263
    %s264 = sphi 0, %s261
    %s265 = sphi 0, %s264
    %s281 = sphi 0, %s265
  $region4: #{tpu_custom_call.1} parent=0 // loop_header_branch
    %18 = sbr.rel (%p16) target = $region8
  $region5: #{tpu_custom_call.1} parent=0 // loop_body
    %s20 = ssub.s32 %s15, 1
    %s21 = ssub.s32 %s15, 2
    %s28 = sadd.s32 1, %s23
    %p29 = scmp.ge.s32.totalorder %s28, 2
    %s30 = scalar_select %p29, 0, %s28
    %s31 = sadd.s32 1, %s22
    %s32 = scalar_select %p29, %s31, %s22
    %p33 = scmp.ge.s32.totalorder %s32, 2
    %s34 = scalar_select %p33, 0, %s32
    %s35 = ssub.s32 %s22, %s34
    %p36 = scmp.eq.s32.totalorder %s35, 0
    %s38 = sadd.s32 %s37, 1
    %s39 = scalar_select %p36, %s37, %s38
    %p42 = pneg %p36
    %p43 = scmp.eq.s32.totalorder %s15, 3
    %p44 = por %p42, %p43
    %p45 = scmp.ne.s32.totalorder %s37, %s40
    %p46 = scmp.eq.s32.totalorder %s15, 0
    %p47 = por %p45, %p46
    %p48 = scmp.ne.s32.totalorder %s37, %s40
    %p49 = scmp.eq.s32.totalorder %s20, 3
    %p50 = por %p48, %p49
    %p51 = scmp.ne.s32.totalorder %s40, %s41
    %p52 = scmp.eq.s32.totalorder %s20, 0
    %p53 = por %p51, %p52
    %p54 = scmp.ne.s32.totalorder %s40, %s41
    %p55 = scmp.eq.s32.totalorder %s21, 3
    %p56 = por %p54, %p55
    %p58 = scmp.ne.s32.totalorder %s41, %s57
    %p59 = scmp.eq.s32.totalorder %s21, 0
    %p60 = por %p58, %p59
    %s61 = ssub.s32 %s22, %s34
    %p62 = scmp.eq.s32.totalorder %s61, 0
    %s64 = sadd.s32 %s63, 1
    %s65 = scalar_select %p62, %s63, %s64
    %p68 = pneg %p62
    %p69 = scmp.eq.s32.totalorder %s15, 3
    %p70 = por %p68, %p69
    %p71 = scmp.ne.s32.totalorder %s63, %s66
    %p72 = scmp.eq.s32.totalorder %s15, 0
    %p73 = por %p71, %p72
    %p74 = scmp.ne.s32.totalorder %s63, %s66
    %p75 = scmp.eq.s32.totalorder %s20, 3
    %p76 = por %p74, %p75
    %p77 = scmp.ne.s32.totalorder %s66, %s67
    %p78 = scmp.eq.s32.totalorder %s20, 0
    %p79 = por %p77, %p78
    %p80 = scmp.ne.s32.totalorder %s66, %s67
    %p81 = scmp.eq.s32.totalorder %s21, 3
    %p82 = por %p80, %p81
    %p84 = scmp.ne.s32.totalorder %s67, %s83
    %p85 = scmp.eq.s32.totalorder %s21, 0
    %p86 = por %p84, %p85
    %s87 = ssub.s32 %s23, %s30
    %p88 = scmp.eq.s32.totalorder %s87, 0
    %s90 = sadd.s32 %s89, 1
    %s91 = scalar_select %p88, %s89, %s90
    %p94 = pneg %p88
    %p95 = scmp.eq.s32.totalorder %s15, 3
    %p96 = por %p94, %p95
    %p97 = scmp.ne.s32.totalorder %s89, %s92
    %p98 = scmp.eq.s32.totalorder %s15, 0
    %p99 = por %p97, %p98
    %p100 = scmp.ne.s32.totalorder %s89, %s92
    %p101 = scmp.eq.s32.totalorder %s20, 3
    %p102 = por %p100, %p101
    %p103 = scmp.ne.s32.totalorder %s92, %s93
    %p104 = scmp.eq.s32.totalorder %s20, 0
    %p105 = por %p103, %p104
    %p106 = scmp.ne.s32.totalorder %s92, %s93
    %p107 = scmp.eq.s32.totalorder %s21, 3
    %p108 = por %p106, %p107
    %p110 = scmp.ne.s32.totalorder %s93, %s109
    %p111 = scmp.eq.s32.totalorder %s21, 0
    %p112 = por %p110, %p111
    %s113 = ssub.s32 %s23, %s30
    %p114 = scmp.eq.s32.totalorder %s113, 0
    %s116 = sadd.s32 %s115, 1
    %s117 = scalar_select %p114, %s115, %s116
    %p120 = pneg %p114
    %p121 = scmp.eq.s32.totalorder %s15, 3
    %p122 = por %p120, %p121
    %p123 = scmp.ne.s32.totalorder %s115, %s118
    %p124 = scmp.eq.s32.totalorder %s15, 0
    %p125 = por %p123, %p124
    %p126 = scmp.ne.s32.totalorder %s115, %s118
    %p127 = scmp.eq.s32.totalorder %s20, 3
    %p128 = por %p126, %p127
    %p129 = scmp.ne.s32.totalorder %s118, %s119
    %p130 = scmp.eq.s32.totalorder %s20, 0
    %p131 = por %p129, %p130
    %p132 = scmp.ne.s32.totalorder %s118, %s119
    %p133 = scmp.eq.s32.totalorder %s21, 3
    %p134 = por %p132, %p133
    %p136 = scmp.ne.s32.totalorder %s119, %s135
    %p137 = scmp.eq.s32.totalorder %s21, 0
    %p138 = por %p136, %p137
    %s139 = ssub.s32 %s22, %s34
    %p140 = scmp.eq.s32.totalorder %s139, 0
    %s142 = sadd.s32 %s141, 1
    %s143 = scalar_select %p140, %s141, %s142
    %p146 = pneg %p140
    %p147 = scmp.eq.s32.totalorder %s15, 3
    %p148 = por %p146, %p147
    %p149 = scmp.ne.s32.totalorder %s141, %s144
    %p150 = scmp.eq.s32.totalorder %s15, 0
    %p151 = por %p149, %p150
    %p152 = scmp.ne.s32.totalorder %s141, %s144
    %p153 = scmp.eq.s32.totalorder %s20, 3
    %p154 = por %p152, %p153
    %p155 = scmp.ne.s32.totalorder %s144, %s145
    %p156 = scmp.eq.s32.totalorder %s20, 0
    %p157 = por %p155, %p156
    %p158 = scmp.ne.s32.totalorder %s144, %s145
    %p159 = scmp.eq.s32.totalorder %s21, 3
    %p160 = por %p158, %p159
    %p162 = scmp.ne.s32.totalorder %s145, %s161
    %p163 = scmp.eq.s32.totalorder %s21, 0
    %p164 = por %p162, %p163
    %s165 = ssub.s32 %s22, %s34
    %p166 = scmp.eq.s32.totalorder %s165, 0
    %s168 = sadd.s32 %s167, 1
    %s169 = scalar_select %p166, %s167, %s168
    %p172 = pneg %p166
    %p173 = scmp.eq.s32.totalorder %s15, 3
    %p174 = por %p172, %p173
    %p175 = scmp.ne.s32.totalorder %s167, %s170
    %p176 = scmp.eq.s32.totalorder %s15, 0
    %p177 = por %p175, %p176
    %p178 = scmp.ne.s32.totalorder %s167, %s170
    %p179 = scmp.eq.s32.totalorder %s20, 3
    %p180 = por %p178, %p179
    %p181 = scmp.ne.s32.totalorder %s170, %s171
    %p182 = scmp.eq.s32.totalorder %s20, 0
    %p183 = por %p181, %p182
    %p184 = scmp.ne.s32.totalorder %s170, %s171
    %p185 = scmp.eq.s32.totalorder %s21, 3
    %p186 = por %p184, %p185
    %p188 = scmp.ne.s32.totalorder %s171, %s187
    %p189 = scmp.eq.s32.totalorder %s21, 0
    %p190 = por %p188, %p189
    %s191 = ssub.s32 %s23, %s30
    %p192 = scmp.eq.s32.totalorder %s191, 0
    %s194 = sadd.s32 %s193, 1
    %s195 = scalar_select %p192, %s193, %s194
    %p198 = pneg %p192
    %p199 = scmp.eq.s32.totalorder %s15, 3
    %p200 = por %p198, %p199
    %p201 = scmp.ne.s32.totalorder %s193, %s196
    %p202 = scmp.eq.s32.totalorder %s15, 0
    %p203 = por %p201, %p202
    %p204 = scmp.ne.s32.totalorder %s193, %s196
    %p205 = scmp.eq.s32.totalorder %s20, 3
    %p206 = por %p204, %p205
    %p207 = scmp.ne.s32.totalorder %s196, %s197
    %p208 = scmp.eq.s32.totalorder %s20, 0
    %p209 = por %p207, %p208
    %p210 = scmp.ne.s32.totalorder %s196, %s197
    %p211 = scmp.eq.s32.totalorder %s21, 3
    %p212 = por %p210, %p211
    %p214 = scmp.ne.s32.totalorder %s197, %s213
    %p215 = scmp.eq.s32.totalorder %s21, 0
    %p216 = por %p214, %p215
    %s218 = sadd.s32 %s217, 1
    %p221 = scmp.eq.s32.totalorder %s15, 3
    %p222 = scmp.ne.s32.totalorder %s217, %s219
    %p223 = scmp.eq.s32.totalorder %s15, 0
    %p224 = por %p222, %p223
    %p225 = scmp.ne.s32.totalorder %s217, %s219
    %p226 = scmp.eq.s32.totalorder %s20, 3
    %p227 = por %p225, %p226
    %p228 = scmp.ne.s32.totalorder %s219, %s220
    %p229 = scmp.eq.s32.totalorder %s20, 0
    %p230 = por %p228, %p229
    %p231 = scmp.ne.s32.totalorder %s219, %s220
    %p232 = scmp.eq.s32.totalorder %s21, 3
    %p233 = por %p231, %p232
    %p235 = scmp.ne.s32.totalorder %s220, %s234
    %p236 = scmp.eq.s32.totalorder %s21, 0
    %p237 = por %p235, %p236
    %s239 = sadd.s32 %s238, 1
    %p242 = scmp.eq.s32.totalorder %s15, 3
    %p243 = scmp.ne.s32.totalorder %s238, %s240
    %p244 = scmp.eq.s32.totalorder %s15, 0
    %p245 = por %p243, %p244
    %p246 = scmp.ne.s32.totalorder %s238, %s240
    %p247 = scmp.eq.s32.totalorder %s20, 3
    %p248 = por %p246, %p247
    %p249 = scmp.ne.s32.totalorder %s240, %s241
    %p250 = scmp.eq.s32.totalorder %s20, 0
    %p251 = por %p249, %p250
    %p252 = scmp.ne.s32.totalorder %s240, %s241
    %p253 = scmp.eq.s32.totalorder %s21, 3
    %p254 = por %p252, %p253
    %p256 = scmp.ne.s32.totalorder %s241, %s255
    %p257 = scmp.eq.s32.totalorder %s21, 0
    %p258 = por %p256, %p257
    %s259 = ssub.s32 %s22, %s34
    %p260 = scmp.eq.s32.totalorder %s259, 0
    %s262 = sadd.s32 %s261, 1
    %s263 = scalar_select %p260, %s261, %s262
    %p266 = pneg %p260
    %p267 = scmp.eq.s32.totalorder %s15, 3
    %p268 = por %p266, %p267
    %p269 = scmp.ne.s32.totalorder %s261, %s264
    %p270 = scmp.eq.s32.totalorder %s15, 0
    %p271 = por %p269, %p270
    %p272 = scmp.ne.s32.totalorder %s261, %s264
    %p273 = scmp.eq.s32.totalorder %s20, 3
    %p274 = por %p272, %p273
    %p275 = scmp.ne.s32.totalorder %s264, %s265
    %p276 = scmp.eq.s32.totalorder %s20, 0
    %p277 = por %p275, %p276
    %p278 = scmp.ne.s32.totalorder %s264, %s265
    %p279 = scmp.eq.s32.totalorder %s21, 3
    %p280 = por %p278, %p279
    %p282 = scmp.ne.s32.totalorder %s265, %s281
    %p283 = scmp.eq.s32.totalorder %s21, 0
    %p284 = por %p282, %p283
    %p285 = scmp.le.s32.totalorder 1, %s15
    %p286 = scmp.lt.s32.totalorder %s15, 5
    %p287 = pnand %p285, %p286
    %p288 = pneg %p287
    // Predicated region
    $region9: #{tpu_custom_call.1} parent=5 // pred_check
      _
    $region10: #{tpu_custom_call.1} parent=5 // pred_check_branch
      %290 = sbr.rel (%p287) target = $region12
    $region11: #{tpu_custom_call.1} parent=5 // pred_region
      %s291 = ssub.s32 %s15, 1
      // Predicated region
      $region13: #{tpu_custom_call.1} parent=11 // pred_check
        %p292 = pneg %p230
      $region14: #{tpu_custom_call.1} parent=11 // pred_check_branch
        %294 = sbr.rel (%p292) target = $region16
      $region15: #{tpu_custom_call.1} parent=11 // pred_region
        _
      $region16: #{tpu_custom_call.1} parent=11 // pred_fallthru
        _
      // Predicated region
      $region17: #{tpu_custom_call.1} parent=11 // pred_check
        %p295 = pneg %p251
      $region18: #{tpu_custom_call.1} parent=11 // pred_check_branch
        %297 = sbr.rel (%p295) target = $region20
      $region19: #{tpu_custom_call.1} parent=11 // pred_region
        _
      $region20: #{tpu_custom_call.1} parent=11 // pred_fallthru
        _
    $region12: #{tpu_custom_call.1} parent=5 // pred_fallthru
      _
    %p298 = scmp.lt.s32.totalorder %s15, 4
    // Predicated region
    $region21: #{tpu_custom_call.1} parent=5 // pred_check
      %p299 = pneg %p298
    $region22: #{tpu_custom_call.1} parent=5 // pred_check_branch
      %301 = sbr.rel (%p299) target = $region24
    $region23: #{tpu_custom_call.1} parent=5 // pred_region
      // Predicated region
      $region25: #{tpu_custom_call.1} parent=23 // pred_check
        %p302 = pneg %p47
      $region26: #{tpu_custom_call.1} parent=23 // pred_check_branch
        %304 = sbr.rel (%p302) target = $region28
      $region27: #{tpu_custom_call.1} parent=23 // pred_region
        %s305 = smul.u32 16, %s22
        %p306 = scmp.lt.s32.totalorder %s305, 31
        %s307 = scalar_select %p306, %s305, 31
        %s308 = smul.addr %s307, 8
        %s309 = scalar_lea.vmem %s0, %s308
        %s310 = smul.u32 16, %s22
      $region28: #{tpu_custom_call.1} parent=23 // pred_fallthru
        _
      // Predicated region
      $region29: #{tpu_custom_call.1} parent=23 // pred_check
        %p311 = pneg %p73
      $region30: #{tpu_custom_call.1} parent=23 // pred_check_branch
        %313 = sbr.rel (%p311) target = $region32
      $region31: #{tpu_custom_call.1} parent=23 // pred_region
        %s314 = smul.u32 16, %s22
        %p315 = scmp.lt.s32.totalorder %s314, 31
        %s316 = scalar_select %p315, %s314, 31
        %s317 = smul.addr %s316, 8
        %s318 = scalar_lea.vmem %s1, %s317
        %s319 = smul.u32 16, %s22
      $region32: #{tpu_custom_call.1} parent=23 // pred_fallthru
        _
      // Predicated region
      $region33: #{tpu_custom_call.1} parent=23 // pred_check
        %p320 = pneg %p99
      $region34: #{tpu_custom_call.1} parent=23 // pred_check_branch
        %322 = sbr.rel (%p320) target = $region36
      $region35: #{tpu_custom_call.1} parent=23 // pred_region
        %s323 = smul.u32 16, %s23
        %p324 = scmp.lt.s32.totalorder %s323, 31
        %s325 = scalar_select %p324, %s323, 31
        %s326 = smul.addr %s325, 8
        %s327 = scalar_lea.vmem %s2, %s326
        %s328 = smul.u32 16, %s23
      $region36: #{tpu_custom_call.1} parent=23 // pred_fallthru
        _
      // Predicated region
      $region37: #{tpu_custom_call.1} parent=23 // pred_check
        %p329 = pneg %p125
      $region38: #{tpu_custom_call.1} parent=23 // pred_check_branch
        %331 = sbr.rel (%p329) target = $region40
      $region39: #{tpu_custom_call.1} parent=23 // pred_region
        %s332 = smul.u32 16, %s23
        %p333 = scmp.lt.s32.totalorder %s332, 31
        %s334 = scalar_select %p333, %s332, 31
        %s335 = smul.addr %s334, 8
        %s336 = scalar_lea.vmem %s3, %s335
        %s337 = smul.u32 16, %s23
      $region40: #{tpu_custom_call.1} parent=23 // pred_fallthru
        _
      // Predicated region
      $region41: #{tpu_custom_call.1} parent=23 // pred_check
        %p338 = pneg %p151
      $region42: #{tpu_custom_call.1} parent=23 // pred_check_branch
        %340 = sbr.rel (%p338) target = $region44
      $region43: #{tpu_custom_call.1} parent=23 // pred_region
        %s341 = smul.u32 16, %s22
        %p342 = scmp.lt.s32.totalorder %s341, 31
        %s343 = scalar_select %p342, %s341, 31
        %s344 = smul.addr %s343, 8
        %s345 = scalar_lea.vmem %s4, %s344
        %s346 = smul.u32 16, %s22
      $region44: #{tpu_custom_call.1} parent=23 // pred_fallthru
        _
      // Predicated region
      $region45: #{tpu_custom_call.1} parent=23 // pred_check
        %p347 = pneg %p177
      $region46: #{tpu_custom_call.1} parent=23 // pred_check_branch
        %349 = sbr.rel (%p347) target = $region48
      $region47: #{tpu_custom_call.1} parent=23 // pred_region
        %s350 = smul.u32 16, %s22
        %p351 = scmp.lt.s32.totalorder %s350, 31
        %s352 = scalar_select %p351, %s350, 31
        %s353 = smul.addr %s352, 8
        %s354 = scalar_lea.vmem %s5, %s353
        %s355 = smul.u32 16, %s22
      $region48: #{tpu_custom_call.1} parent=23 // pred_fallthru
        _
      // Predicated region
      $region49: #{tpu_custom_call.1} parent=23 // pred_check
        %p356 = pneg %p203
      $region50: #{tpu_custom_call.1} parent=23 // pred_check_branch
        %358 = sbr.rel (%p356) target = $region52
      $region51: #{tpu_custom_call.1} parent=23 // pred_region
        %p359 = scmp.lt.s32.totalorder %s23, 1
        %s360 = scalar_select %p359, %s23, 1
        %s361 = scalar_lea.vmem %s6, %s360
      $region52: #{tpu_custom_call.1} parent=23 // pred_fallthru
        _
    $region24: #{tpu_custom_call.1} parent=5 // pred_fallthru
      _
    %p362 = scmp.le.s32.totalorder 1, %s15
    %p363 = scmp.lt.s32.totalorder %s15, 5
    %p364 = pnand %p362, %p363
    %p365 = pneg %p364
    // Predicated region
    $region53: #{tpu_custom_call.1} parent=5 // pred_check
      _
    $region54: #{tpu_custom_call.1} parent=5 // pred_check_branch
      %367 = sbr.rel (%p364) target = $region56
    $region55: #{tpu_custom_call.1} parent=5 // pred_region
      %s368 = ssub.s32 %s15, 1
      %s369 = smul.u32 16, %s24
      %p370 = scmp.lt.s32.totalorder %s369, 31
      %s371 = scalar_select %p370, %s369, 31
      %s372 = smul.addr %s371, 8
      %s373 = scalar_lea.vmem %s0, %s372
      %p374 = pneg %p53
      %p375 = pneg %p50
      %s376 = smul.u32 16, %s24
      %p377 = scmp.lt.s32.totalorder %s376, 31
      %s378 = scalar_select %p377, %s376, 31
      %s379 = smul.addr %s378, 8
      %s380 = scalar_lea.vmem %s1, %s379
      %p381 = pneg %p79
      %p382 = pneg %p76
      %s383 = smul.u32 16, %s25
      %p384 = scmp.lt.s32.totalorder %s383, 31
      %s385 = scalar_select %p384, %s383, 31
      %s386 = smul.addr %s385, 8
      %s387 = scalar_lea.vmem %s2, %s386
      %p388 = pneg %p105
      %p389 = pneg %p102
      %s390 = smul.u32 16, %s25
      %p391 = scmp.lt.s32.totalorder %s390, 31
      %s392 = scalar_select %p391, %s390, 31
      %s393 = smul.addr %s392, 8
      %s394 = scalar_lea.vmem %s3, %s393
      %p395 = pneg %p131
      %p396 = pneg %p128
      %s397 = smul.u32 16, %s24
      %p398 = scmp.lt.s32.totalorder %s397, 31
      %s399 = scalar_select %p398, %s397, 31
      %s400 = smul.addr %s399, 8
      %s401 = scalar_lea.vmem %s4, %s400
      %p402 = pneg %p157
      %p403 = pneg %p154
      %s404 = smul.u32 16, %s24
      %p405 = scmp.lt.s32.totalorder %s404, 31
      %s406 = scalar_select %p405, %s404, 31
      %s407 = smul.addr %s406, 8
      %s408 = scalar_lea.vmem %s5, %s407
      %p409 = pneg %p183
      %p410 = pneg %p180
      %p411 = scmp.lt.s32.totalorder %s25, 1
      %s412 = scalar_select %p411, %s25, 1
      %s413 = scalar_lea.vmem %s6, %s412
      %p414 = pneg %p209
      %p415 = pneg %p206
      %p416 = pneg %p230
      %p417 = pneg %p227
      %p418 = pneg %p251
      %p419 = pneg %p248
      %p420 = pneg %p277
      %p421 = pneg %p274
      %s422 = smul.u32 16, %s24
      %p423 = scmp.lt.s32.totalorder %s422, 31
      %s424 = scalar_select %p423, %s422, 31
      %s425 = smul.addr %s424, 8
      %s426 = scalar_lea.vmem %s9, %s425
      %s427 = smul.u32 16, %s24
      %p428 = scmp.lt.s32.totalorder %s427, 31
      %s429 = scalar_select %p428, %s427, 31
      %s430 = smul.addr %s429, 8
      %s431 = scalar_lea.vmem %s0, %s430
      %s432 = smul.u32 16, %s24
      %s433 = smul.u32 16, %s24
      %p434 = scmp.lt.s32.totalorder %s433, 31
      %s435 = scalar_select %p434, %s433, 31
      %s436 = smul.addr %s435, 8
      %s437 = scalar_lea.vmem %s1, %s436
      %s438 = smul.u32 16, %s24
      %s439 = smul.u32 16, %s25
      %p440 = scmp.lt.s32.totalorder %s439, 31
      %s441 = scalar_select %p440, %s439, 31
      %s442 = smul.addr %s441, 8
      %s443 = scalar_lea.vmem %s2, %s442
      %s444 = smul.u32 16, %s25
      %s445 = smul.u32 16, %s25
      %p446 = scmp.lt.s32.totalorder %s445, 31
      %s447 = scalar_select %p446, %s445, 31
      %s448 = smul.addr %s447, 8
      %s449 = scalar_lea.vmem %s3, %s448
      %s450 = smul.u32 16, %s25
      %s451 = smul.u32 16, %s24
      %p452 = scmp.lt.s32.totalorder %s451, 31
      %s453 = scalar_select %p452, %s451, 31
      %s454 = smul.addr %s453, 8
      %s455 = scalar_lea.vmem %s4, %s454
      %s456 = smul.u32 16, %s24
      %s457 = smul.u32 16, %s24
      %p458 = scmp.lt.s32.totalorder %s457, 31
      %s459 = scalar_select %p458, %s457, 31
      %s460 = smul.addr %s459, 8
      %s461 = scalar_lea.vmem %s5, %s460
      %s462 = smul.u32 16, %s24
      %p463 = scmp.lt.s32.totalorder %s25, 1
      %s464 = scalar_select %p463, %s25, 1
      %s465 = scalar_lea.vmem %s6, %s464
      %s466 = smul.u32 16, %s24
      %p467 = scmp.lt.s32.totalorder %s466, 31
      %s468 = scalar_select %p467, %s466, 31
      %s469 = smul.addr %s468, 8
      %s470 = scalar_lea.vmem %s9, %s469
      %s471 = smul.u32 16, %s24
      %v472 = vld [vmem:[%s8] sm:$0x3f]
      %p473 = scmp.eq.s32.totalorder %s25, 0
      // Predicated region
      $region57: #{tpu_custom_call.1} parent=55 // pred_check
        %p474 = pneg %p473
      $region58: #{tpu_custom_call.1} parent=55 // pred_check_branch
        %476 = sbr.rel (%p474) target = $region60
      $region59: #{tpu_custom_call.1} parent=55 // pred_region
        %v477 = vld [vmem:[%s431] sm:$0xff]
        %v478 = vld [vmem:[%s431 + $0x8] sm:$0xff]
        %v479 = vld [vmem:[%s431 + $0x10] sm:$0xff]
        %v480 = vld [vmem:[%s431 + $0x18] sm:$0xff]
        %v481 = vld [vmem:[%s431 + $0x20] sm:$0xff]
        %v482 = vld [vmem:[%s431 + $0x28] sm:$0xff]
        %v483 = vld [vmem:[%s431 + $0x30] sm:$0xff]
        %v484 = vld [vmem:[%s431 + $0x38] sm:$0xff]
        %v485 = vld [vmem:[%s431 + $0x40] sm:$0xff]
        %v486 = vld [vmem:[%s431 + $0x48] sm:$0xff]
        %v487 = vld [vmem:[%s431 + $0x50] sm:$0xff]
        %v488 = vld [vmem:[%s431 + $0x58] sm:$0xff]
        %v489 = vld [vmem:[%s431 + $0x60] sm:$0xff]
        %v490 = vld [vmem:[%s431 + $0x68] sm:$0xff]
        %v491 = vld [vmem:[%s431 + $0x70] sm:$0xff]
        %v492 = vld [vmem:[%s431 + $0x78] sm:$0xff]
        %v493 = vld [vmem:[%s437] sm:$0xff]
        %v494 = vld [vmem:[%s437 + $0x8] sm:$0xff]
        %v495 = vld [vmem:[%s437 + $0x10] sm:$0xff]
        %v496 = vld [vmem:[%s437 + $0x18] sm:$0xff]
        %v497 = vld [vmem:[%s437 + $0x20] sm:$0xff]
        %v498 = vld [vmem:[%s437 + $0x28] sm:$0xff]
        %v499 = vld [vmem:[%s437 + $0x30] sm:$0xff]
        %v500 = vld [vmem:[%s437 + $0x38] sm:$0xff]
        %v501 = vld [vmem:[%s437 + $0x40] sm:$0xff]
        %v502 = vld [vmem:[%s437 + $0x48] sm:$0xff]
        %v503 = vld [vmem:[%s437 + $0x50] sm:$0xff]
        %v504 = vld [vmem:[%s437 + $0x58] sm:$0xff]
        %v505 = vld [vmem:[%s437 + $0x60] sm:$0xff]
        %v506 = vld [vmem:[%s437 + $0x68] sm:$0xff]
        %v507 = vld [vmem:[%s437 + $0x70] sm:$0xff]
        %v508 = vld [vmem:[%s437 + $0x78] sm:$0xff]
        %v509 = vadd.f32 %v477, %v493
        %v510 = vadd.f32 %v478, %v494
        %v511 = vadd.f32 %v479, %v495
        %v512 = vadd.f32 %v480, %v496
        %v513 = vadd.f32 %v481, %v497
        %v514 = vadd.f32 %v482, %v498
        %v515 = vadd.f32 %v483, %v499
        %v516 = vadd.f32 %v484, %v500
        %v517 = vadd.f32 %v485, %v501
        %v518 = vadd.f32 %v486, %v502
        %v519 = vadd.f32 %v487, %v503
        %v520 = vadd.f32 %v488, %v504
        %v521 = vadd.f32 %v489, %v505
        %v522 = vadd.f32 %v490, %v506
        %v523 = vadd.f32 %v491, %v507
        %v524 = vadd.f32 %v492, %v508
        %v525 = vld [vmem:[%s7] sm:$0xff]
        %v526 = vld [vmem:[%s7 + $0x8] sm:$0xff]
        %v527 = vld [vmem:[%s7 + $0x10] sm:$0xff]
        %v528 = vld [vmem:[%s7 + $0x18] sm:$0xff]
        %v529 = vperm.slane %v472, 0
        %vm530 = vcmask 261120
        %v532 = vsel %vm530, %v509, 0
        %v535 = vsel %vm530, %v510, 0
        %v538 = vsel %vm530, %v511, 0
        %v541 = vsel %vm530, %v512, 0
        %v544 = vsel %vm530, %v513, 0
        %v547 = vsel %vm530, %v514, 0
        %v550 = vsel %vm530, %v515, 0
        %v553 = vsel %vm530, %v516, 0
        %v556 = vsel %vm530, %v517, 0
        %v559 = vsel %vm530, %v518, 0
        %v562 = vsel %vm530, %v519, 0
        %v565 = vsel %vm530, %v520, 0
        %v568 = vsel %vm530, %v521, 0
        %v571 = vsel %vm530, %v522, 0
        %v574 = vsel %vm530, %v523, 0
        %v577 = vsel %vm530, %v524, 0
        %579 = vmatpush.msra.mxu0 0.0
        %580 = vmatpush.msra.mxu0 0.0
        %581 = vmatpush.msra.mxu0 0.0
        %582 = vmatpush.msra.mxu0 0.0
        %583 = vmatpush.msra.mxu0 0.0
        %584 = vmatpush.msra.mxu0 0.0
        %585 = vmatpush.msra.mxu0 0.0
        %586 = vmatpush.msra.mxu0 0.0
        %587 = vmatpush.msra.mxu0 0.0
        %588 = vmatpush.msra.mxu0 0.0
        %589 = vmatpush.msra.mxu0 0.0
        %590 = vmatpush.msra.mxu0 0.0
        %591 = vmatpush.msra.mxu0 %v528
        %592 = vmatpush.msra.mxu0 %v527
        %593 = vmatpush.msra.mxu0 %v526
        %594 = vmatpush.msra.mxu0 %v525
        %595 = vmatmul.f32.gmra.mxu0 %v532
        %v596 = vpop.f32.mrf.mxu0
        %v597 = vadd.f32 %v529, %v596
        %598 = vmatmul.f32.gmra.mxu0 %v535
        %v599 = vpop.f32.mrf.mxu0
        %v600 = vadd.f32 %v529, %v599
        %601 = vmatmul.f32.gmra.mxu0 %v538
        %v602 = vpop.f32.mrf.mxu0
        %v603 = vadd.f32 %v529, %v602
        %604 = vmatmul.f32.gmra.mxu0 %v541
        %v605 = vpop.f32.mrf.mxu0
        %v606 = vadd.f32 %v529, %v605
        %607 = vmatmul.f32.gmra.mxu0 %v544
        %v608 = vpop.f32.mrf.mxu0
        %v609 = vadd.f32 %v529, %v608
        %610 = vmatmul.f32.gmra.mxu0 %v547
        %v611 = vpop.f32.mrf.mxu0
        %v612 = vadd.f32 %v529, %v611
        %613 = vmatmul.f32.gmra.mxu0 %v550
        %v614 = vpop.f32.mrf.mxu0
        %v615 = vadd.f32 %v529, %v614
        %616 = vmatmul.f32.gmra.mxu0 %v553
        %v617 = vpop.f32.mrf.mxu0
        %v618 = vadd.f32 %v529, %v617
        %619 = vmatmul.f32.gmra.mxu0 %v556
        %v620 = vpop.f32.mrf.mxu0
        %v621 = vadd.f32 %v529, %v620
        %622 = vmatmul.f32.gmra.mxu0 %v559
        %v623 = vpop.f32.mrf.mxu0
        %v624 = vadd.f32 %v529, %v623
        %625 = vmatmul.f32.gmra.mxu0 %v562
        %v626 = vpop.f32.mrf.mxu0
        %v627 = vadd.f32 %v529, %v626
        %628 = vmatmul.f32.gmra.mxu0 %v565
        %v629 = vpop.f32.mrf.mxu0
        %v630 = vadd.f32 %v529, %v629
        %631 = vmatmul.f32.gmra.mxu0 %v568
        %v632 = vpop.f32.mrf.mxu0
        %v633 = vadd.f32 %v529, %v632
        %634 = vmatmul.f32.gmra.mxu0 %v571
        %v635 = vpop.f32.mrf.mxu0
        %v636 = vadd.f32 %v529, %v635
        %637 = vmatmul.f32.gmra.mxu0 %v574
        %v638 = vpop.f32.mrf.mxu0
        %v639 = vadd.f32 %v529, %v638
        %640 = vmatmul.f32.gmra.mxu0 %v577
        %v641 = vpop.f32.mrf.mxu0
        %v642 = vadd.f32 %v529, %v641
        %643 = vdwg.mxu0
        %644 = vst.msk [vmem:[#allocation2] sm:$0xff] %vm530, %v597
        %645 = vst.msk [vmem:[#allocation2 + $0x8] sm:$0xff] %vm530, %v600
        %646 = vst.msk [vmem:[#allocation2 + $0x10] sm:$0xff] %vm530, %v603
        %647 = vst.msk [vmem:[#allocation2 + $0x18] sm:$0xff] %vm530, %v606
        %648 = vst.msk [vmem:[#allocation2 + $0x20] sm:$0xff] %vm530, %v609
        %649 = vst.msk [vmem:[#allocation2 + $0x28] sm:$0xff] %vm530, %v612
        %650 = vst.msk [vmem:[#allocation2 + $0x30] sm:$0xff] %vm530, %v615
        %651 = vst.msk [vmem:[#allocation2 + $0x38] sm:$0xff] %vm530, %v618
        %652 = vst.msk [vmem:[#allocation2 + $0x40] sm:$0xff] %vm530, %v621
        %653 = vst.msk [vmem:[#allocation2 + $0x48] sm:$0xff] %vm530, %v624
        %654 = vst.msk [vmem:[#allocation2 + $0x50] sm:$0xff] %vm530, %v627
        %655 = vst.msk [vmem:[#allocation2 + $0x58] sm:$0xff] %vm530, %v630
        %656 = vst.msk [vmem:[#allocation2 + $0x60] sm:$0xff] %vm530, %v633
        %657 = vst.msk [vmem:[#allocation2 + $0x68] sm:$0xff] %vm530, %v636
        %658 = vst.msk [vmem:[#allocation2 + $0x70] sm:$0xff] %vm530, %v639
        %659 = vst.msk [vmem:[#allocation2 + $0x78] sm:$0xff] %vm530, %v642
        %vm660 = vcmask 31744
        %661 = vst.msk [vmem:[#allocation4] sm:$0xff] %vm660, -inf
        %662 = vst.msk [vmem:[#allocation4 + $0x8] sm:$0xff] %vm660, -inf
        %663 = vst.msk [vmem:[#allocation4 + $0x10] sm:$0xff] %vm660, -inf
        %664 = vst.msk [vmem:[#allocation4 + $0x18] sm:$0xff] %vm660, -inf
        %665 = vst.msk [vmem:[#allocation4 + $0x20] sm:$0xff] %vm660, -inf
        %666 = vst.msk [vmem:[#allocation4 + $0x28] sm:$0xff] %vm660, -inf
        %667 = vst.msk [vmem:[#allocation4 + $0x30] sm:$0xff] %vm660, -inf
        %668 = vst.msk [vmem:[#allocation4 + $0x38] sm:$0xff] %vm660, -inf
        %669 = vst.msk [vmem:[#allocation4 + $0x40] sm:$0xff] %vm660, -inf
        %670 = vst.msk [vmem:[#allocation4 + $0x48] sm:$0xff] %vm660, -inf
        %671 = vst.msk [vmem:[#allocation4 + $0x50] sm:$0xff] %vm660, -inf
        %672 = vst.msk [vmem:[#allocation4 + $0x58] sm:$0xff] %vm660, -inf
        %673 = vst.msk [vmem:[#allocation4 + $0x60] sm:$0xff] %vm660, -inf
        %674 = vst.msk [vmem:[#allocation4 + $0x68] sm:$0xff] %vm660, -inf
        %675 = vst.msk [vmem:[#allocation4 + $0x70] sm:$0xff] %vm660, -inf
        %676 = vst.msk [vmem:[#allocation4 + $0x78] sm:$0xff] %vm660, -inf
        %677 = vst.msk [vmem:[#allocation5] sm:$0xff] %vm660, 0.0
        %678 = vst.msk [vmem:[#allocation5 + $0x8] sm:$0xff] %vm660, 0.0
        %679 = vst.msk [vmem:[#allocation5 + $0x10] sm:$0xff] %vm660, 0.0
        %680 = vst.msk [vmem:[#allocation5 + $0x18] sm:$0xff] %vm660, 0.0
        %681 = vst.msk [vmem:[#allocation5 + $0x20] sm:$0xff] %vm660, 0.0
        %682 = vst.msk [vmem:[#allocation5 + $0x28] sm:$0xff] %vm660, 0.0
        %683 = vst.msk [vmem:[#allocation5 + $0x30] sm:$0xff] %vm660, 0.0
        %684 = vst.msk [vmem:[#allocation5 + $0x38] sm:$0xff] %vm660, 0.0
        %685 = vst.msk [vmem:[#allocation5 + $0x40] sm:$0xff] %vm660, 0.0
        %686 = vst.msk [vmem:[#allocation5 + $0x48] sm:$0xff] %vm660, 0.0
        %687 = vst.msk [vmem:[#allocation5 + $0x50] sm:$0xff] %vm660, 0.0
        %688 = vst.msk [vmem:[#allocation5 + $0x58] sm:$0xff] %vm660, 0.0
        %689 = vst.msk [vmem:[#allocation5 + $0x60] sm:$0xff] %vm660, 0.0
        %690 = vst.msk [vmem:[#allocation5 + $0x68] sm:$0xff] %vm660, 0.0
        %691 = vst.msk [vmem:[#allocation5 + $0x70] sm:$0xff] %vm660, 0.0
        %692 = vst.msk [vmem:[#allocation5 + $0x78] sm:$0xff] %vm660, 0.0
        %693 = vst.msk [vmem:[#allocation3] sm:$0xff] %vm530, 0.0
        %694 = vst.msk [vmem:[#allocation3 + $0x8] sm:$0xff] %vm530, 0.0
        %695 = vst.msk [vmem:[#allocation3 + $0x10] sm:$0xff] %vm530, 0.0
        %696 = vst.msk [vmem:[#allocation3 + $0x18] sm:$0xff] %vm530, 0.0
        %697 = vst.msk [vmem:[#allocation3 + $0x20] sm:$0xff] %vm530, 0.0
        %698 = vst.msk [vmem:[#allocation3 + $0x28] sm:$0xff] %vm530, 0.0
        %699 = vst.msk [vmem:[#allocation3 + $0x30] sm:$0xff] %vm530, 0.0
        %700 = vst.msk [vmem:[#allocation3 + $0x38] sm:$0xff] %vm530, 0.0
        %701 = vst.msk [vmem:[#allocation3 + $0x40] sm:$0xff] %vm530, 0.0
        %702 = vst.msk [vmem:[#allocation3 + $0x48] sm:$0xff] %vm530, 0.0
        %703 = vst.msk [vmem:[#allocation3 + $0x50] sm:$0xff] %vm530, 0.0
        %704 = vst.msk [vmem:[#allocation3 + $0x58] sm:$0xff] %vm530, 0.0
        %705 = vst.msk [vmem:[#allocation3 + $0x60] sm:$0xff] %vm530, 0.0
        %706 = vst.msk [vmem:[#allocation3 + $0x68] sm:$0xff] %vm530, 0.0
        %707 = vst.msk [vmem:[#allocation3 + $0x70] sm:$0xff] %vm530, 0.0
        %708 = vst.msk [vmem:[#allocation3 + $0x78] sm:$0xff] %vm530, 0.0
      $region60: #{tpu_custom_call.1} parent=55 // pred_fallthru
        _
      %v709 = vld [vmem:[%s443] sm:$0xff]
      %v710 = vld [vmem:[%s443 + $0x8] sm:$0xff]
      %v711 = vld [vmem:[%s443 + $0x10] sm:$0xff]
      %v712 = vld [vmem:[%s443 + $0x18] sm:$0xff]
      %v713 = vld [vmem:[%s443 + $0x20] sm:$0xff]
      %v714 = vld [vmem:[%s443 + $0x28] sm:$0xff]
      %v715 = vld [vmem:[%s443 + $0x30] sm:$0xff]
      %v716 = vld [vmem:[%s443 + $0x38] sm:$0xff]
      %v717 = vld [vmem:[%s443 + $0x40] sm:$0xff]
      %v718 = vld [vmem:[%s443 + $0x48] sm:$0xff]
      %v719 = vld [vmem:[%s443 + $0x50] sm:$0xff]
      %v720 = vld [vmem:[%s443 + $0x58] sm:$0xff]
      %v721 = vld [vmem:[%s443 + $0x60] sm:$0xff]
      %v722 = vld [vmem:[%s443 + $0x68] sm:$0xff]
      %v723 = vld [vmem:[%s443 + $0x70] sm:$0xff]
      %v724 = vld [vmem:[%s443 + $0x78] sm:$0xff]
      %v725 = vld [vmem:[%s449] sm:$0xff]
      %v726 = vld [vmem:[%s449 + $0x8] sm:$0xff]
      %v727 = vld [vmem:[%s449 + $0x10] sm:$0xff]
      %v728 = vld [vmem:[%s449 + $0x18] sm:$0xff]
      %v729 = vld [vmem:[%s449 + $0x20] sm:$0xff]
      %v730 = vld [vmem:[%s449 + $0x28] sm:$0xff]
      %v731 = vld [vmem:[%s449 + $0x30] sm:$0xff]
      %v732 = vld [vmem:[%s449 + $0x38] sm:$0xff]
      %v733 = vld [vmem:[%s449 + $0x40] sm:$0xff]
      %v734 = vld [vmem:[%s449 + $0x48] sm:$0xff]
      %v735 = vld [vmem:[%s449 + $0x50] sm:$0xff]
      %v736 = vld [vmem:[%s449 + $0x58] sm:$0xff]
      %v737 = vld [vmem:[%s449 + $0x60] sm:$0xff]
      %v738 = vld [vmem:[%s449 + $0x68] sm:$0xff]
      %v739 = vld [vmem:[%s449 + $0x70] sm:$0xff]
      %v740 = vld [vmem:[%s449 + $0x78] sm:$0xff]
      %v741 = vadd.f32 %v709, %v725
      %v742 = vadd.f32 %v710, %v726
      %v743 = vadd.f32 %v711, %v727
      %v744 = vadd.f32 %v712, %v728
      %v745 = vadd.f32 %v713, %v729
      %v746 = vadd.f32 %v714, %v730
      %v747 = vadd.f32 %v715, %v731
      %v748 = vadd.f32 %v716, %v732
      %v749 = vadd.f32 %v717, %v733
      %v750 = vadd.f32 %v718, %v734
      %v751 = vadd.f32 %v719, %v735
      %v752 = vadd.f32 %v720, %v736
      %v753 = vadd.f32 %v721, %v737
      %v754 = vadd.f32 %v722, %v738
      %v755 = vadd.f32 %v723, %v739
      %v756 = vadd.f32 %v724, %v740
      %v757 = vld [vmem:[%s7] sm:$0xff]
      %v758 = vld [vmem:[%s7 + $0x8] sm:$0xff]
      %v759 = vld [vmem:[%s7 + $0x10] sm:$0xff]
      %v760 = vld [vmem:[%s7 + $0x18] sm:$0xff]
      %v761 = vperm.slane %v472, 1
      %766 = vrot.lane.b32.xlu0 %v757, 96
      %v767 = vpop.permute.xlu0 %766
      %768 = vrot.lane.b32.xlu0 %v758, 96
      %v769 = vpop.permute.xlu0 %768
      %770 = vrot.lane.b32.xlu0 %v759, 96
      %v771 = vpop.permute.xlu0 %770
      %772 = vrot.lane.b32.xlu0 %v760, 96
      %v773 = vpop.permute.xlu0 %772
      %vm778 = vcmask 261120
      %v780 = vsel %vm778, %v741, 0
      %v783 = vsel %vm778, %v742, 0
      %v786 = vsel %vm778, %v743, 0
      %v789 = vsel %vm778, %v744, 0
      %v792 = vsel %vm778, %v745, 0
      %v795 = vsel %vm778, %v746, 0
      %v798 = vsel %vm778, %v747, 0
      %v801 = vsel %vm778, %v748, 0
      %v804 = vsel %vm778, %v749, 0
      %v807 = vsel %vm778, %v750, 0
      %v810 = vsel %vm778, %v751, 0
      %v813 = vsel %vm778, %v752, 0
      %v816 = vsel %vm778, %v753, 0
      %v819 = vsel %vm778, %v754, 0
      %v822 = vsel %vm778, %v755, 0
      %v825 = vsel %vm778, %v756, 0
      %827 = vmatpush.msra.mxu0 0.0
      %828 = vmatpush.msra.mxu0 0.0
      %829 = vmatpush.msra.mxu0 0.0
      %830 = vmatpush.msra.mxu0 0.0
      %831 = vmatpush.msra.mxu0 0.0
      %832 = vmatpush.msra.mxu0 0.0
      %833 = vmatpush.msra.mxu0 0.0
      %834 = vmatpush.msra.mxu0 0.0
      %835 = vmatpush.msra.mxu0 0.0
      %836 = vmatpush.msra.mxu0 0.0
      %837 = vmatpush.msra.mxu0 0.0
      %838 = vmatpush.msra.mxu0 0.0
      %839 = vmatpush.msra.mxu0 %v773
      %840 = vmatpush.msra.mxu0 %v771
      %841 = vmatpush.msra.mxu0 %v769
      %842 = vmatpush.msra.mxu0 %v767
      %843 = vmatmul.f32.gmra.mxu0 %v780
      %v844 = vpop.f32.mrf.mxu0
      %v845 = vadd.f32 %v761, %v844
      %846 = vmatmul.f32.gmra.mxu0 %v783
      %v847 = vpop.f32.mrf.mxu0
      %v848 = vadd.f32 %v761, %v847
      %849 = vmatmul.f32.gmra.mxu0 %v786
      %v850 = vpop.f32.mrf.mxu0
      %v851 = vadd.f32 %v761, %v850
      %852 = vmatmul.f32.gmra.mxu0 %v789
      %v853 = vpop.f32.mrf.mxu0
      %v854 = vadd.f32 %v761, %v853
      %855 = vmatmul.f32.gmra.mxu0 %v792
      %v856 = vpop.f32.mrf.mxu0
      %v857 = vadd.f32 %v761, %v856
      %858 = vmatmul.f32.gmra.mxu0 %v795
      %v859 = vpop.f32.mrf.mxu0
      %v860 = vadd.f32 %v761, %v859
      %861 = vmatmul.f32.gmra.mxu0 %v798
      %v862 = vpop.f32.mrf.mxu0
      %v863 = vadd.f32 %v761, %v862
      %864 = vmatmul.f32.gmra.mxu0 %v801
      %v865 = vpop.f32.mrf.mxu0
      %v866 = vadd.f32 %v761, %v865
      %867 = vmatmul.f32.gmra.mxu0 %v804
      %v868 = vpop.f32.mrf.mxu0
      %v869 = vadd.f32 %v761, %v868
      %870 = vmatmul.f32.gmra.mxu0 %v807
      %v871 = vpop.f32.mrf.mxu0
      %v872 = vadd.f32 %v761, %v871
      %873 = vmatmul.f32.gmra.mxu0 %v810
      %v874 = vpop.f32.mrf.mxu0
      %v875 = vadd.f32 %v761, %v874
      %876 = vmatmul.f32.gmra.mxu0 %v813
      %v877 = vpop.f32.mrf.mxu0
      %v878 = vadd.f32 %v761, %v877
      %879 = vmatmul.f32.gmra.mxu0 %v816
      %v880 = vpop.f32.mrf.mxu0
      %v881 = vadd.f32 %v761, %v880
      %882 = vmatmul.f32.gmra.mxu0 %v819
      %v883 = vpop.f32.mrf.mxu0
      %v884 = vadd.f32 %v761, %v883
      %885 = vmatmul.f32.gmra.mxu0 %v822
      %v886 = vpop.f32.mrf.mxu0
      %v887 = vadd.f32 %v761, %v886
      %888 = vmatmul.f32.gmra.mxu0 %v825
      %v889 = vpop.f32.mrf.mxu0
      %v890 = vadd.f32 %v761, %v889
      %891 = vdwg.mxu0
      %v892 = vpack.c.bf16 %v845, %v845
      %v893 = vpack.c.bf16 %v848, %v848
      %v894 = vpack.c.bf16 %v851, %v851
      %v895 = vpack.c.bf16 %v854, %v854
      %v896 = vpack.c.bf16 %v857, %v857
      %v897 = vpack.c.bf16 %v860, %v860
      %v898 = vpack.c.bf16 %v863, %v863
      %v899 = vpack.c.bf16 %v866, %v866
      %v900 = vpack.c.bf16 %v869, %v869
      %v901 = vpack.c.bf16 %v872, %v872
      %v902 = vpack.c.bf16 %v875, %v875
      %v903 = vpack.c.bf16 %v878, %v878
      %v904 = vpack.c.bf16 %v881, %v881
      %v905 = vpack.c.bf16 %v884, %v884
      %v906 = vpack.c.bf16 %v887, %v887
      %v907 = vpack.c.bf16 %v890, %v890
      %v908 = vperm.slane %v472, 2
      %909 = vrot.lane.b32.xlu0 %v757, 64
      %v910 = vpop.permute.xlu0 %909
      %911 = vrot.lane.b32.xlu0 %v758, 64
      %v912 = vpop.permute.xlu0 %911
      %913 = vrot.lane.b32.xlu0 %v759, 64
      %v914 = vpop.permute.xlu0 %913
      %915 = vrot.lane.b32.xlu0 %v760, 64
      %v916 = vpop.permute.xlu0 %915
      %v922 = vsel %vm778, %v709, 0
      %v925 = vsel %vm778, %v710, 0
      %v928 = vsel %vm778, %v711, 0
      %v931 = vsel %vm778, %v712, 0
      %v934 = vsel %vm778, %v713, 0
      %v937 = vsel %vm778, %v714, 0
      %v940 = vsel %vm778, %v715, 0
      %v943 = vsel %vm778, %v716, 0
      %v946 = vsel %vm778, %v717, 0
      %v949 = vsel %vm778, %v718, 0
      %v952 = vsel %vm778, %v719, 0
      %v955 = vsel %vm778, %v720, 0
      %v958 = vsel %vm778, %v721, 0
      %v961 = vsel %vm778, %v722, 0
      %v964 = vsel %vm778, %v723, 0
      %v967 = vsel %vm778, %v724, 0
      %969 = vmatpush.msra.mxu0 0.0
      %970 = vmatpush.msra.mxu0 0.0
      %971 = vmatpush.msra.mxu0 0.0
      %972 = vmatpush.msra.mxu0 0.0
      %973 = vmatpush.msra.mxu0 0.0
      %974 = vmatpush.msra.mxu0 0.0
      %975 = vmatpush.msra.mxu0 0.0
      %976 = vmatpush.msra.mxu0 0.0
      %977 = vmatpush.msra.mxu0 0.0
      %978 = vmatpush.msra.mxu0 0.0
      %979 = vmatpush.msra.mxu0 0.0
      %980 = vmatpush.msra.mxu0 0.0
      %981 = vmatpush.msra.mxu0 %v916
      %982 = vmatpush.msra.mxu0 %v914
      %983 = vmatpush.msra.mxu0 %v912
      %984 = vmatpush.msra.mxu0 %v910
      %985 = vmatmul.f32.gmra.mxu0 %v922
      %v986 = vpop.f32.mrf.mxu0
      %v987 = vadd.f32 %v908, %v986
      %988 = vmatmul.f32.gmra.mxu0 %v925
      %v989 = vpop.f32.mrf.mxu0
      %v990 = vadd.f32 %v908, %v989
      %991 = vmatmul.f32.gmra.mxu0 %v928
      %v992 = vpop.f32.mrf.mxu0
      %v993 = vadd.f32 %v908, %v992
      %994 = vmatmul.f32.gmra.mxu0 %v931
      %v995 = vpop.f32.mrf.mxu0
      %v996 = vadd.f32 %v908, %v995
      %997 = vmatmul.f32.gmra.mxu0 %v934
      %v998 = vpop.f32.mrf.mxu0
      %v999 = vadd.f32 %v908, %v998
      %1000 = vmatmul.f32.gmra.mxu0 %v937
      %v1001 = vpop.f32.mrf.mxu0
      %v1002 = vadd.f32 %v908, %v1001
      %1003 = vmatmul.f32.gmra.mxu0 %v940
      %v1004 = vpop.f32.mrf.mxu0
      %v1005 = vadd.f32 %v908, %v1004
      %1006 = vmatmul.f32.gmra.mxu0 %v943
      %v1007 = vpop.f32.mrf.mxu0
      %v1008 = vadd.f32 %v908, %v1007
      %1009 = vmatmul.f32.gmra.mxu0 %v946
      %v1010 = vpop.f32.mrf.mxu0
      %v1011 = vadd.f32 %v908, %v1010
      %1012 = vmatmul.f32.gmra.mxu0 %v949
      %v1013 = vpop.f32.mrf.mxu0
      %v1014 = vadd.f32 %v908, %v1013
      %1015 = vmatmul.f32.gmra.mxu0 %v952
      %v1016 = vpop.f32.mrf.mxu0
      %v1017 = vadd.f32 %v908, %v1016
      %1018 = vmatmul.f32.gmra.mxu0 %v955
      %v1019 = vpop.f32.mrf.mxu0
      %v1020 = vadd.f32 %v908, %v1019
      %1021 = vmatmul.f32.gmra.mxu0 %v958
      %v1022 = vpop.f32.mrf.mxu0
      %v1023 = vadd.f32 %v908, %v1022
      %1024 = vmatmul.f32.gmra.mxu0 %v961
      %v1025 = vpop.f32.mrf.mxu0
      %v1026 = vadd.f32 %v908, %v1025
      %1027 = vmatmul.f32.gmra.mxu0 %v964
      %v1028 = vpop.f32.mrf.mxu0
      %v1029 = vadd.f32 %v908, %v1028
      %1030 = vmatmul.f32.gmra.mxu0 %v967
      %v1031 = vpop.f32.mrf.mxu0
      %v1032 = vadd.f32 %v908, %v1031
      %1033 = vdwg.mxu0
      %v1034 = vpack.c.bf16 %v987, %v987
      %v1035 = vpack.c.bf16 %v990, %v990
      %v1036 = vpack.c.bf16 %v993, %v993
      %v1037 = vpack.c.bf16 %v996, %v996
      %v1038 = vpack.c.bf16 %v999, %v999
      %v1039 = vpack.c.bf16 %v1002, %v1002
      %v1040 = vpack.c.bf16 %v1005, %v1005
      %v1041 = vpack.c.bf16 %v1008, %v1008
      %v1042 = vpack.c.bf16 %v1011, %v1011
      %v1043 = vpack.c.bf16 %v1014, %v1014
      %v1044 = vpack.c.bf16 %v1017, %v1017
      %v1045 = vpack.c.bf16 %v1020, %v1020
      %v1046 = vpack.c.bf16 %v1023, %v1023
      %v1047 = vpack.c.bf16 %v1026, %v1026
      %v1048 = vpack.c.bf16 %v1029, %v1029
      %v1049 = vpack.c.bf16 %v1032, %v1032
      %v1050 = vld [vmem:[%s461] sm:$0xff]
      %v1051 = vld [vmem:[%s461 + $0x8] sm:$0xff]
      %v1052 = vld [vmem:[%s461 + $0x10] sm:$0xff]
      %v1053 = vld [vmem:[%s461 + $0x18] sm:$0xff]
      %v1054 = vld [vmem:[%s461 + $0x20] sm:$0xff]
      %v1055 = vld [vmem:[%s461 + $0x28] sm:$0xff]
      %v1056 = vld [vmem:[%s461 + $0x30] sm:$0xff]
      %v1057 = vld [vmem:[%s461 + $0x38] sm:$0xff]
      %v1058 = vld [vmem:[%s461 + $0x40] sm:$0xff]
      %v1059 = vld [vmem:[%s461 + $0x48] sm:$0xff]
      %v1060 = vld [vmem:[%s461 + $0x50] sm:$0xff]
      %v1061 = vld [vmem:[%s461 + $0x58] sm:$0xff]
      %v1062 = vld [vmem:[%s461 + $0x60] sm:$0xff]
      %v1063 = vld [vmem:[%s461 + $0x68] sm:$0xff]
      %v1064 = vld [vmem:[%s461 + $0x70] sm:$0xff]
      %v1065 = vld [vmem:[%s461 + $0x78] sm:$0xff]
      %v1066 = vld [vmem:[%s465] sm:$0x1]
      %1067 = vset.pattern.permute.xlu0 0
      %1068 = vperm.xlu0 %1067, %v1050
      %v1069 = vpop.permute.xlu0 %1068
      %1070 = vset.pattern.permute.xlu0 0
      %1071 = vperm.xlu0 %1070, %v1051
      %v1072 = vpop.permute.xlu0 %1071
      %1073 = vset.pattern.permute.xlu0 0
      %1074 = vperm.xlu0 %1073, %v1052
      %v1075 = vpop.permute.xlu0 %1074
      %1076 = vset.pattern.permute.xlu0 0
      %1077 = vperm.xlu0 %1076, %v1053
      %v1078 = vpop.permute.xlu0 %1077
      %1079 = vset.pattern.permute.xlu0 0
      %1080 = vperm.xlu0 %1079, %v1054
      %v1081 = vpop.permute.xlu0 %1080
      %1082 = vset.pattern.permute.xlu0 0
      %1083 = vperm.xlu0 %1082, %v1055
      %v1084 = vpop.permute.xlu0 %1083
      %1085 = vset.pattern.permute.xlu0 0
      %1086 = vperm.xlu0 %1085, %v1056
      %v1087 = vpop.permute.xlu0 %1086
      %1088 = vset.pattern.permute.xlu0 0
      %1089 = vperm.xlu0 %1088, %v1057
      %v1090 = vpop.permute.xlu0 %1089
      %1091 = vset.pattern.permute.xlu0 0
      %1092 = vperm.xlu0 %1091, %v1058
      %v1093 = vpop.permute.xlu0 %1092
      %1094 = vset.pattern.permute.xlu0 0
      %1095 = vperm.xlu0 %1094, %v1059
      %v1096 = vpop.permute.xlu0 %1095
      %1097 = vset.pattern.permute.xlu0 0
      %1098 = vperm.xlu0 %1097, %v1060
      %v1099 = vpop.permute.xlu0 %1098
      %1100 = vset.pattern.permute.xlu0 0
      %1101 = vperm.xlu0 %1100, %v1061
      %v1102 = vpop.permute.xlu0 %1101
      %1103 = vset.pattern.permute.xlu0 0
      %1104 = vperm.xlu0 %1103, %v1062
      %v1105 = vpop.permute.xlu0 %1104
      %1106 = vset.pattern.permute.xlu0 0
      %1107 = vperm.xlu0 %1106, %v1063
      %v1108 = vpop.permute.xlu0 %1107
      %1109 = vset.pattern.permute.xlu0 0
      %1110 = vperm.xlu0 %1109, %v1064
      %v1111 = vpop.permute.xlu0 %1110
      %1112 = vset.pattern.permute.xlu0 0
      %1113 = vperm.xlu0 %1112, %v1065
      %v1114 = vpop.permute.xlu0 %1113
      %v1115 = vperm.slane %v1066, 0
      %vm1116 = vcmp.eq.s32.totalorder %v1069, %v1115
      %vm1117 = vcmp.eq.s32.totalorder %v1072, %v1115
      %vm1118 = vcmp.eq.s32.totalorder %v1075, %v1115
      %vm1119 = vcmp.eq.s32.totalorder %v1078, %v1115
      %vm1120 = vcmp.eq.s32.totalorder %v1081, %v1115
      %vm1121 = vcmp.eq.s32.totalorder %v1084, %v1115
      %vm1122 = vcmp.eq.s32.totalorder %v1087, %v1115
      %vm1123 = vcmp.eq.s32.totalorder %v1090, %v1115
      %vm1124 = vcmp.eq.s32.totalorder %v1093, %v1115
      %vm1125 = vcmp.eq.s32.totalorder %v1096, %v1115
      %vm1126 = vcmp.eq.s32.totalorder %v1099, %v1115
      %vm1127 = vcmp.eq.s32.totalorder %v1102, %v1115
      %vm1128 = vcmp.eq.s32.totalorder %v1105, %v1115
      %vm1129 = vcmp.eq.s32.totalorder %v1108, %v1115
      %vm1130 = vcmp.eq.s32.totalorder %v1111, %v1115
      %vm1131 = vcmp.eq.s32.totalorder %v1114, %v1115
      %v1132 = vsel %vm1116, 0.0, -1e+30
      %v1133 = vsel %vm1117, 0.0, -1e+30
      %v1134 = vsel %vm1118, 0.0, -1e+30
      %v1135 = vsel %vm1119, 0.0, -1e+30
      %v1136 = vsel %vm1120, 0.0, -1e+30
      %v1137 = vsel %vm1121, 0.0, -1e+30
      %v1138 = vsel %vm1122, 0.0, -1e+30
      %v1139 = vsel %vm1123, 0.0, -1e+30
      %v1140 = vsel %vm1124, 0.0, -1e+30
      %v1141 = vsel %vm1125, 0.0, -1e+30
      %v1142 = vsel %vm1126, 0.0, -1e+30
      %v1143 = vsel %vm1127, 0.0, -1e+30
      %v1144 = vsel %vm1128, 0.0, -1e+30
      %v1145 = vsel %vm1129, 0.0, -1e+30
      %v1146 = vsel %vm1130, 0.0, -1e+30
      %v1147 = vsel %vm1131, 0.0, -1e+30
      %v1148 = vld [vmem:[#allocation2] sm:$0xff]
      %v1149 = vld [vmem:[#allocation2 + $0x8] sm:$0xff]
      %v1150 = vld [vmem:[#allocation2 + $0x10] sm:$0xff]
      %v1151 = vld [vmem:[#allocation2 + $0x18] sm:$0xff]
      %v1152 = vld [vmem:[#allocation2 + $0x20] sm:$0xff]
      %v1153 = vld [vmem:[#allocation2 + $0x28] sm:$0xff]
      %v1154 = vld [vmem:[#allocation2 + $0x30] sm:$0xff]
      %v1155 = vld [vmem:[#allocation2 + $0x38] sm:$0xff]
      %v1156 = vld [vmem:[#allocation2 + $0x40] sm:$0xff]
      %v1157 = vld [vmem:[#allocation2 + $0x48] sm:$0xff]
      %v1158 = vld [vmem:[#allocation2 + $0x50] sm:$0xff]
      %v1159 = vld [vmem:[#allocation2 + $0x58] sm:$0xff]
      %v1160 = vld [vmem:[#allocation2 + $0x60] sm:$0xff]
      %v1161 = vld [vmem:[#allocation2 + $0x68] sm:$0xff]
      %v1162 = vld [vmem:[#allocation2 + $0x70] sm:$0xff]
      %v1163 = vld [vmem:[#allocation2 + $0x78] sm:$0xff]
      %v1164 = vpack.c.bf16 %v1148, %v1148
      %v1165 = vpack.c.bf16 %v1149, %v1149
      %v1166 = vpack.c.bf16 %v1150, %v1150
      %v1167 = vpack.c.bf16 %v1151, %v1151
      %v1168 = vpack.c.bf16 %v1152, %v1152
      %v1169 = vpack.c.bf16 %v1153, %v1153
      %v1170 = vpack.c.bf16 %v1154, %v1154
      %v1171 = vpack.c.bf16 %v1155, %v1155
      %v1172 = vpack.c.bf16 %v1156, %v1156
      %v1173 = vpack.c.bf16 %v1157, %v1157
      %v1174 = vpack.c.bf16 %v1158, %v1158
      %v1175 = vpack.c.bf16 %v1159, %v1159
      %v1176 = vpack.c.bf16 %v1160, %v1160
      %v1177 = vpack.c.bf16 %v1161, %v1161
      %v1178 = vpack.c.bf16 %v1162, %v1162
      %v1179 = vpack.c.bf16 %v1163, %v1163
      %v1196 = vunpack.c.l.b16 %v1164
      %v1197 = vunpack.c.l.b16 %v1165
      %v1198 = vunpack.c.l.b16 %v1166
      %v1199 = vunpack.c.l.b16 %v1167
      %v1200 = vunpack.c.l.b16 %v1168
      %v1201 = vunpack.c.l.b16 %v1169
      %v1202 = vunpack.c.l.b16 %v1170
      %v1203 = vunpack.c.l.b16 %v1171
      %v1204 = vunpack.c.l.b16 %v1172
      %v1205 = vunpack.c.l.b16 %v1173
      %v1206 = vunpack.c.l.b16 %v1174
      %v1207 = vunpack.c.l.b16 %v1175
      %v1208 = vunpack.c.l.b16 %v1176
      %v1209 = vunpack.c.l.b16 %v1177
      %v1210 = vunpack.c.l.b16 %v1178
      %v1211 = vunpack.c.l.b16 %v1179
      %v1212 = vpack.c.b16 %v1197, %v1196
      %v1213 = vpack.c.b16 %v1199, %v1198
      %v1214 = vpack.c.b16 %v1201, %v1200
      %v1215 = vpack.c.b16 %v1203, %v1202
      %v1216 = vpack.c.b16 %v1205, %v1204
      %v1217 = vpack.c.b16 %v1207, %v1206
      %v1218 = vpack.c.b16 %v1209, %v1208
      %v1219 = vpack.c.b16 %v1211, %v1210
      %v1236 = vunpack.c.l.b16 %v892
      %v1237 = vunpack.c.l.b16 %v893
      %v1238 = vunpack.c.l.b16 %v894
      %v1239 = vunpack.c.l.b16 %v895
      %v1240 = vunpack.c.l.b16 %v896
      %v1241 = vunpack.c.l.b16 %v897
      %v1242 = vunpack.c.l.b16 %v898
      %v1243 = vunpack.c.l.b16 %v899
      %v1244 = vunpack.c.l.b16 %v900
      %v1245 = vunpack.c.l.b16 %v901
      %v1246 = vunpack.c.l.b16 %v902
      %v1247 = vunpack.c.l.b16 %v903
      %v1248 = vunpack.c.l.b16 %v904
      %v1249 = vunpack.c.l.b16 %v905
      %v1250 = vunpack.c.l.b16 %v906
      %v1251 = vunpack.c.l.b16 %v907
      %v1252 = vpack.c.b16 %v1237, %v1236
      %v1253 = vpack.c.b16 %v1239, %v1238
      %v1254 = vpack.c.b16 %v1241, %v1240
      %v1255 = vpack.c.b16 %v1243, %v1242
      %v1256 = vpack.c.b16 %v1245, %v1244
      %v1257 = vpack.c.b16 %v1247, %v1246
      %v1258 = vpack.c.b16 %v1249, %v1248
      %v1259 = vpack.c.b16 %v1251, %v1250
      %vm1260 = vcmask 64512
      %v1262 = vsel %vm1260, %v1212, 0
      %v1265 = vsel %vm1260, %v1213, 0
      %v1268 = vsel %vm1260, %v1214, 0
      %v1271 = vsel %vm1260, %v1215, 0
      %v1274 = vsel %vm1260, %v1216, 0
      %v1277 = vsel %vm1260, %v1217, 0
      %v1280 = vsel %vm1260, %v1218, 0
      %v1283 = vsel %vm1260, %v1219, 0
      %v1286 = vsel %vm1260, %v1252, 0
      %v1289 = vsel %vm1260, %v1253, 0
      %v1292 = vsel %vm1260, %v1254, 0
      %v1295 = vsel %vm1260, %v1255, 0
      %v1298 = vsel %vm1260, %v1256, 0
      %v1301 = vsel %vm1260, %v1257, 0
      %v1304 = vsel %vm1260, %v1258, 0
      %v1307 = vsel %vm1260, %v1259, 0
      %1309 = vmatpush.bf16.xpose.msra.mxu0 %v1307
      %1310 = vmatpush.bf16.xpose.msra.mxu0 %v1304
      %1311 = vmatpush.bf16.xpose.msra.mxu0 %v1301
      %1312 = vmatpush.bf16.xpose.msra.mxu0 %v1298
      %1313 = vmatpush.bf16.xpose.msra.mxu0 %v1295
      %1314 = vmatpush.bf16.xpose.msra.mxu0 %v1292
      %1315 = vmatpush.bf16.xpose.msra.mxu0 %v1289
      %1316 = vmatpush.bf16.xpose.msra.mxu0 %v1286
      %1317 = vmatmul.bf16.gmra.mxu0 %v1262
      %v1318 = vpop.f32.mrf.mxu0
      %v1319 = vadd.f32 %v1132, %v1318
      %v1320 = vpop.f32.mrf.mxu0
      %v1321 = vadd.f32 %v1133, %v1320
      %1322 = vmatmul.bf16.gmra.mxu0 %v1265
      %v1323 = vpop.f32.mrf.mxu0
      %v1324 = vadd.f32 %v1134, %v1323
      %v1325 = vpop.f32.mrf.mxu0
      %v1326 = vadd.f32 %v1135, %v1325
      %1327 = vmatmul.bf16.gmra.mxu0 %v1268
      %v1328 = vpop.f32.mrf.mxu0
      %v1329 = vadd.f32 %v1136, %v1328
      %v1330 = vpop.f32.mrf.mxu0
      %v1331 = vadd.f32 %v1137, %v1330
      %1332 = vmatmul.bf16.gmra.mxu0 %v1271
      %v1333 = vpop.f32.mrf.mxu0
      %v1334 = vadd.f32 %v1138, %v1333
      %v1335 = vpop.f32.mrf.mxu0
      %v1336 = vadd.f32 %v1139, %v1335
      %1337 = vmatmul.bf16.gmra.mxu0 %v1274
      %v1338 = vpop.f32.mrf.mxu0
      %v1339 = vadd.f32 %v1140, %v1338
      %v1340 = vpop.f32.mrf.mxu0
      %v1341 = vadd.f32 %v1141, %v1340
      %1342 = vmatmul.bf16.gmra.mxu0 %v1277
      %v1343 = vpop.f32.mrf.mxu0
      %v1344 = vadd.f32 %v1142, %v1343
      %v1345 = vpop.f32.mrf.mxu0
      %v1346 = vadd.f32 %v1143, %v1345
      %1347 = vmatmul.bf16.gmra.mxu0 %v1280
      %v1348 = vpop.f32.mrf.mxu0
      %v1349 = vadd.f32 %v1144, %v1348
      %v1350 = vpop.f32.mrf.mxu0
      %v1351 = vadd.f32 %v1145, %v1350
      %1352 = vmatmul.bf16.gmra.mxu0 %v1283
      %v1353 = vpop.f32.mrf.mxu0
      %v1354 = vadd.f32 %v1146, %v1353
      %v1355 = vpop.f32.mrf.mxu0
      %v1356 = vadd.f32 %v1147, %v1355
      %1357 = vdwg.mxu0
      %v1358 = vld [vmem:[#allocation4] sm:$0xff]
      %v1359 = vld [vmem:[#allocation4 + $0x8] sm:$0xff]
      %v1360 = vld [vmem:[#allocation4 + $0x10] sm:$0xff]
      %v1361 = vld [vmem:[#allocation4 + $0x18] sm:$0xff]
      %v1362 = vld [vmem:[#allocation4 + $0x20] sm:$0xff]
      %v1363 = vld [vmem:[#allocation4 + $0x28] sm:$0xff]
      %v1364 = vld [vmem:[#allocation4 + $0x30] sm:$0xff]
      %v1365 = vld [vmem:[#allocation4 + $0x38] sm:$0xff]
      %v1366 = vld [vmem:[#allocation4 + $0x40] sm:$0xff]
      %v1367 = vld [vmem:[#allocation4 + $0x48] sm:$0xff]
      %v1368 = vld [vmem:[#allocation4 + $0x50] sm:$0xff]
      %v1369 = vld [vmem:[#allocation4 + $0x58] sm:$0xff]
      %v1370 = vld [vmem:[#allocation4 + $0x60] sm:$0xff]
      %v1371 = vld [vmem:[#allocation4 + $0x68] sm:$0xff]
      %v1372 = vld [vmem:[#allocation4 + $0x70] sm:$0xff]
      %v1373 = vld [vmem:[#allocation4 + $0x78] sm:$0xff]
      %1374 = vmax.xlane.f32.xlu0 %v1319
      %v1375 = vpop.xlane.xlu0 %1374
      %1376 = vmax.xlane.f32.xlu0 %v1321
      %v1377 = vpop.xlane.xlu0 %1376
      %1378 = vmax.xlane.f32.xlu0 %v1324
      %v1379 = vpop.xlane.xlu0 %1378
      %1380 = vmax.xlane.f32.xlu0 %v1326
      %v1381 = vpop.xlane.xlu0 %1380
      %1382 = vmax.xlane.f32.xlu0 %v1329
      %v1383 = vpop.xlane.xlu0 %1382
      %1384 = vmax.xlane.f32.xlu0 %v1331
      %v1385 = vpop.xlane.xlu0 %1384
      %1386 = vmax.xlane.f32.xlu0 %v1334
      %v1387 = vpop.xlane.xlu0 %1386
      %1388 = vmax.xlane.f32.xlu0 %v1336
      %v1389 = vpop.xlane.xlu0 %1388
      %1390 = vmax.xlane.f32.xlu0 %v1339
      %v1391 = vpop.xlane.xlu0 %1390
      %1392 = vmax.xlane.f32.xlu0 %v1341
      %v1393 = vpop.xlane.xlu0 %1392
      %1394 = vmax.xlane.f32.xlu0 %v1344
      %v1395 = vpop.xlane.xlu0 %1394
      %1396 = vmax.xlane.f32.xlu0 %v1346
      %v1397 = vpop.xlane.xlu0 %1396
      %1398 = vmax.xlane.f32.xlu0 %v1349
      %v1399 = vpop.xlane.xlu0 %1398
      %1400 = vmax.xlane.f32.xlu0 %v1351
      %v1401 = vpop.xlane.xlu0 %1400
      %1402 = vmax.xlane.f32.xlu0 %v1354
      %v1403 = vpop.xlane.xlu0 %1402
      %1404 = vmax.xlane.f32.xlu0 %v1356
      %v1405 = vpop.xlane.xlu0 %1404
      %v1406 = vmax.f32 %v1358, %v1375
      %v1407 = vmax.f32 %v1359, %v1377
      %v1408 = vmax.f32 %v1360, %v1379
      %v1409 = vmax.f32 %v1361, %v1381
      %v1410 = vmax.f32 %v1362, %v1383
      %v1411 = vmax.f32 %v1363, %v1385
      %v1412 = vmax.f32 %v1364, %v1387
      %v1413 = vmax.f32 %v1365, %v1389
      %v1414 = vmax.f32 %v1366, %v1391
      %v1415 = vmax.f32 %v1367, %v1393
      %v1416 = vmax.f32 %v1368, %v1395
      %v1417 = vmax.f32 %v1369, %v1397
      %v1418 = vmax.f32 %v1370, %v1399
      %v1419 = vmax.f32 %v1371, %v1401
      %v1420 = vmax.f32 %v1372, %v1403
      %v1421 = vmax.f32 %v1373, %v1405
      %v1422 = vsub.f32 %v1358, %v1406
      %v1423 = vsub.f32 %v1359, %v1407
      %v1424 = vsub.f32 %v1360, %v1408
      %v1425 = vsub.f32 %v1361, %v1409
      %v1426 = vsub.f32 %v1362, %v1410
      %v1427 = vsub.f32 %v1363, %v1411
      %v1428 = vsub.f32 %v1364, %v1412
      %v1429 = vsub.f32 %v1365, %v1413
      %v1430 = vsub.f32 %v1366, %v1414
      %v1431 = vsub.f32 %v1367, %v1415
      %v1432 = vsub.f32 %v1368, %v1416
      %v1433 = vsub.f32 %v1369, %v1417
      %v1434 = vsub.f32 %v1370, %v1418
      %v1435 = vsub.f32 %v1371, %v1419
      %v1436 = vsub.f32 %v1372, %v1420
      %v1437 = vsub.f32 %v1373, %v1421
      %v1438 = vmul.f32 %v1422, 1.442695
      %v1439 = vpow.pop %v1438
      %v1440 = vmul.f32 %v1423, 1.442695
      %v1441 = vpow.pop %v1440
      %v1442 = vmul.f32 %v1424, 1.442695
      %v1443 = vpow.pop %v1442
      %v1444 = vmul.f32 %v1425, 1.442695
      %v1445 = vpow.pop %v1444
      %v1446 = vmul.f32 %v1426, 1.442695
      %v1447 = vpow.pop %v1446
      %v1448 = vmul.f32 %v1427, 1.442695
      %v1449 = vpow.pop %v1448
      %v1450 = vmul.f32 %v1428, 1.442695
      %v1451 = vpow.pop %v1450
      %v1452 = vmul.f32 %v1429, 1.442695
      %v1453 = vpow.pop %v1452
      %v1454 = vmul.f32 %v1430, 1.442695
      %v1455 = vpow.pop %v1454
      %v1456 = vmul.f32 %v1431, 1.442695
      %v1457 = vpow.pop %v1456
      %v1458 = vmul.f32 %v1432, 1.442695
      %v1459 = vpow.pop %v1458
      %v1460 = vmul.f32 %v1433, 1.442695
      %v1461 = vpow.pop %v1460
      %v1462 = vmul.f32 %v1434, 1.442695
      %v1463 = vpow.pop %v1462
      %v1464 = vmul.f32 %v1435, 1.442695
      %v1465 = vpow.pop %v1464
      %v1466 = vmul.f32 %v1436, 1.442695
      %v1467 = vpow.pop %v1466
      %v1468 = vmul.f32 %v1437, 1.442695
      %v1469 = vpow.pop %v1468
      %1471 = vset.pattern.permute.xlu0 0
      %1472 = vperm.xlu0 %1471, %v1406
      %v1473 = vpop.permute.xlu0 %1472
      %1476 = vset.pattern.permute.xlu0 0
      %1477 = vperm.xlu0 %1476, %v1407
      %v1478 = vpop.permute.xlu0 %1477
      %1481 = vset.pattern.permute.xlu0 0
      %1482 = vperm.xlu0 %1481, %v1408
      %v1483 = vpop.permute.xlu0 %1482
      %1486 = vset.pattern.permute.xlu0 0
      %1487 = vperm.xlu0 %1486, %v1409
      %v1488 = vpop.permute.xlu0 %1487
      %1491 = vset.pattern.permute.xlu0 0
      %1492 = vperm.xlu0 %1491, %v1410
      %v1493 = vpop.permute.xlu0 %1492
      %1496 = vset.pattern.permute.xlu0 0
      %1497 = vperm.xlu0 %1496, %v1411
      %v1498 = vpop.permute.xlu0 %1497
      %1501 = vset.pattern.permute.xlu0 0
      %1502 = vperm.xlu0 %1501, %v1412
      %v1503 = vpop.permute.xlu0 %1502
      %1506 = vset.pattern.permute.xlu0 0
      %1507 = vperm.xlu0 %1506, %v1413
      %v1508 = vpop.permute.xlu0 %1507
      %1511 = vset.pattern.permute.xlu0 0
      %1512 = vperm.xlu0 %1511, %v1414
      %v1513 = vpop.permute.xlu0 %1512
      %1516 = vset.pattern.permute.xlu0 0
      %1517 = vperm.xlu0 %1516, %v1415
      %v1518 = vpop.permute.xlu0 %1517
      %1521 = vset.pattern.permute.xlu0 0
      %1522 = vperm.xlu0 %1521, %v1416
      %v1523 = vpop.permute.xlu0 %1522
      %1526 = vset.pattern.permute.xlu0 0
      %1527 = vperm.xlu0 %1526, %v1417
      %v1528 = vpop.permute.xlu0 %1527
      %1531 = vset.pattern.permute.xlu0 0
      %1532 = vperm.xlu0 %1531, %v1418
      %v1533 = vpop.permute.xlu0 %1532
      %1536 = vset.pattern.permute.xlu0 0
      %1537 = vperm.xlu0 %1536, %v1419
      %v1538 = vpop.permute.xlu0 %1537
      %1541 = vset.pattern.permute.xlu0 0
      %1542 = vperm.xlu0 %1541, %v1420
      %v1543 = vpop.permute.xlu0 %1542
      %1546 = vset.pattern.permute.xlu0 0
      %1547 = vperm.xlu0 %1546, %v1421
      %v1548 = vpop.permute.xlu0 %1547
      %v1550 = vsub.f32 %v1319, %v1473
      %v1551 = vsub.f32 %v1321, %v1478
      %v1552 = vsub.f32 %v1324, %v1483
      %v1553 = vsub.f32 %v1326, %v1488
      %v1554 = vsub.f32 %v1329, %v1493
      %v1555 = vsub.f32 %v1331, %v1498
      %v1556 = vsub.f32 %v1334, %v1503
      %v1557 = vsub.f32 %v1336, %v1508
      %v1558 = vsub.f32 %v1339, %v1513
      %v1559 = vsub.f32 %v1341, %v1518
      %v1560 = vsub.f32 %v1344, %v1523
      %v1561 = vsub.f32 %v1346, %v1528
      %v1562 = vsub.f32 %v1349, %v1533
      %v1563 = vsub.f32 %v1351, %v1538
      %v1564 = vsub.f32 %v1354, %v1543
      %v1565 = vsub.f32 %v1356, %v1548
      %v1566 = vmul.f32 %v1550, 1.442695
      %v1567 = vpow.pop %v1566
      %v1568 = vmul.f32 %v1551, 1.442695
      %v1569 = vpow.pop %v1568
      %v1570 = vmul.f32 %v1552, 1.442695
      %v1571 = vpow.pop %v1570
      %v1572 = vmul.f32 %v1553, 1.442695
      %v1573 = vpow.pop %v1572
      %v1574 = vmul.f32 %v1554, 1.442695
      %v1575 = vpow.pop %v1574
      %v1576 = vmul.f32 %v1555, 1.442695
      %v1577 = vpow.pop %v1576
      %v1578 = vmul.f32 %v1556, 1.442695
      %v1579 = vpow.pop %v1578
      %v1580 = vmul.f32 %v1557, 1.442695
      %v1581 = vpow.pop %v1580
      %v1582 = vmul.f32 %v1558, 1.442695
      %v1583 = vpow.pop %v1582
      %v1584 = vmul.f32 %v1559, 1.442695
      %v1585 = vpow.pop %v1584
      %v1586 = vmul.f32 %v1560, 1.442695
      %v1587 = vpow.pop %v1586
      %v1588 = vmul.f32 %v1561, 1.442695
      %v1589 = vpow.pop %v1588
      %v1590 = vmul.f32 %v1562, 1.442695
      %v1591 = vpow.pop %v1590
      %v1592 = vmul.f32 %v1563, 1.442695
      %v1593 = vpow.pop %v1592
      %v1594 = vmul.f32 %v1564, 1.442695
      %v1595 = vpow.pop %v1594
      %v1596 = vmul.f32 %v1565, 1.442695
      %v1597 = vpow.pop %v1596
      %v1598 = vld [vmem:[#allocation5] sm:$0xff]
      %v1599 = vld [vmem:[#allocation5 + $0x8] sm:$0xff]
      %v1600 = vld [vmem:[#allocation5 + $0x10] sm:$0xff]
      %v1601 = vld [vmem:[#allocation5 + $0x18] sm:$0xff]
      %v1602 = vld [vmem:[#allocation5 + $0x20] sm:$0xff]
      %v1603 = vld [vmem:[#allocation5 + $0x28] sm:$0xff]
      %v1604 = vld [vmem:[#allocation5 + $0x30] sm:$0xff]
      %v1605 = vld [vmem:[#allocation5 + $0x38] sm:$0xff]
      %v1606 = vld [vmem:[#allocation5 + $0x40] sm:$0xff]
      %v1607 = vld [vmem:[#allocation5 + $0x48] sm:$0xff]
      %v1608 = vld [vmem:[#allocation5 + $0x50] sm:$0xff]
      %v1609 = vld [vmem:[#allocation5 + $0x58] sm:$0xff]
      %v1610 = vld [vmem:[#allocation5 + $0x60] sm:$0xff]
      %v1611 = vld [vmem:[#allocation5 + $0x68] sm:$0xff]
      %v1612 = vld [vmem:[#allocation5 + $0x70] sm:$0xff]
      %v1613 = vld [vmem:[#allocation5 + $0x78] sm:$0xff]
      %v1614 = vmul.f32 %v1439, %v1598
      %v1615 = vmul.f32 %v1441, %v1599
      %v1616 = vmul.f32 %v1443, %v1600
      %v1617 = vmul.f32 %v1445, %v1601
      %v1618 = vmul.f32 %v1447, %v1602
      %v1619 = vmul.f32 %v1449, %v1603
      %v1620 = vmul.f32 %v1451, %v1604
      %v1621 = vmul.f32 %v1453, %v1605
      %v1622 = vmul.f32 %v1455, %v1606
      %v1623 = vmul.f32 %v1457, %v1607
      %v1624 = vmul.f32 %v1459, %v1608
      %v1625 = vmul.f32 %v1461, %v1609
      %v1626 = vmul.f32 %v1463, %v1610
      %v1627 = vmul.f32 %v1465, %v1611
      %v1628 = vmul.f32 %v1467, %v1612
      %v1629 = vmul.f32 %v1469, %v1613
      %1630 = vadd.xlane.f32.xlu0 %v1567
      %v1631 = vpop.xlane.xlu0 %1630
      %1632 = vadd.xlane.f32.xlu0 %v1569
      %v1633 = vpop.xlane.xlu0 %1632
      %1634 = vadd.xlane.f32.xlu0 %v1571
      %v1635 = vpop.xlane.xlu0 %1634
      %1636 = vadd.xlane.f32.xlu0 %v1573
      %v1637 = vpop.xlane.xlu0 %1636
      %1638 = vadd.xlane.f32.xlu0 %v1575
      %v1639 = vpop.xlane.xlu0 %1638
      %1640 = vadd.xlane.f32.xlu0 %v1577
      %v1641 = vpop.xlane.xlu0 %1640
      %1642 = vadd.xlane.f32.xlu0 %v1579
      %v1643 = vpop.xlane.xlu0 %1642
      %1644 = vadd.xlane.f32.xlu0 %v1581
      %v1645 = vpop.xlane.xlu0 %1644
      %1646 = vadd.xlane.f32.xlu0 %v1583
      %v1647 = vpop.xlane.xlu0 %1646
      %1648 = vadd.xlane.f32.xlu0 %v1585
      %v1649 = vpop.xlane.xlu0 %1648
      %1650 = vadd.xlane.f32.xlu0 %v1587
      %v1651 = vpop.xlane.xlu0 %1650
      %1652 = vadd.xlane.f32.xlu0 %v1589
      %v1653 = vpop.xlane.xlu0 %1652
      %1654 = vadd.xlane.f32.xlu0 %v1591
      %v1655 = vpop.xlane.xlu0 %1654
      %1656 = vadd.xlane.f32.xlu0 %v1593
      %v1657 = vpop.xlane.xlu0 %1656
      %1658 = vadd.xlane.f32.xlu0 %v1595
      %v1659 = vpop.xlane.xlu0 %1658
      %1660 = vadd.xlane.f32.xlu0 %v1597
      %v1661 = vpop.xlane.xlu0 %1660
      %v1662 = vadd.f32 %v1614, %v1631
      %v1663 = vadd.f32 %v1615, %v1633
      %v1664 = vadd.f32 %v1616, %v1635
      %v1665 = vadd.f32 %v1617, %v1637
      %v1666 = vadd.f32 %v1618, %v1639
      %v1667 = vadd.f32 %v1619, %v1641
      %v1668 = vadd.f32 %v1620, %v1643
      %v1669 = vadd.f32 %v1621, %v1645
      %v1670 = vadd.f32 %v1622, %v1647
      %v1671 = vadd.f32 %v1623, %v1649
      %v1672 = vadd.f32 %v1624, %v1651
      %v1673 = vadd.f32 %v1625, %v1653
      %v1674 = vadd.f32 %v1626, %v1655
      %v1675 = vadd.f32 %v1627, %v1657
      %v1676 = vadd.f32 %v1628, %v1659
      %v1677 = vadd.f32 %v1629, %v1661
      %vm1678 = vcmask 7168
      %1679 = vst.msk [vmem:[#allocation5] sm:$0xff] %vm1678, %v1662
      %1680 = vst.msk [vmem:[#allocation5 + $0x8] sm:$0xff] %vm1678, %v1663
      %1681 = vst.msk [vmem:[#allocation5 + $0x10] sm:$0xff] %vm1678, %v1664
      %1682 = vst.msk [vmem:[#allocation5 + $0x18] sm:$0xff] %vm1678, %v1665
      %1683 = vst.msk [vmem:[#allocation5 + $0x20] sm:$0xff] %vm1678, %v1666
      %1684 = vst.msk [vmem:[#allocation5 + $0x28] sm:$0xff] %vm1678, %v1667
      %1685 = vst.msk [vmem:[#allocation5 + $0x30] sm:$0xff] %vm1678, %v1668
      %1686 = vst.msk [vmem:[#allocation5 + $0x38] sm:$0xff] %vm1678, %v1669
      %1687 = vst.msk [vmem:[#allocation5 + $0x40] sm:$0xff] %vm1678, %v1670
      %1688 = vst.msk [vmem:[#allocation5 + $0x48] sm:$0xff] %vm1678, %v1671
      %1689 = vst.msk [vmem:[#allocation5 + $0x50] sm:$0xff] %vm1678, %v1672
      %1690 = vst.msk [vmem:[#allocation5 + $0x58] sm:$0xff] %vm1678, %v1673
      %1691 = vst.msk [vmem:[#allocation5 + $0x60] sm:$0xff] %vm1678, %v1674
      %1692 = vst.msk [vmem:[#allocation5 + $0x68] sm:$0xff] %vm1678, %v1675
      %1693 = vst.msk [vmem:[#allocation5 + $0x70] sm:$0xff] %vm1678, %v1676
      %1694 = vst.msk [vmem:[#allocation5 + $0x78] sm:$0xff] %vm1678, %v1677
      %v1695 = vld [vmem:[#allocation3] sm:$0xff]
      %v1696 = vld [vmem:[#allocation3 + $0x8] sm:$0xff]
      %v1697 = vld [vmem:[#allocation3 + $0x10] sm:$0xff]
      %v1698 = vld [vmem:[#allocation3 + $0x18] sm:$0xff]
      %v1699 = vld [vmem:[#allocation3 + $0x20] sm:$0xff]
      %v1700 = vld [vmem:[#allocation3 + $0x28] sm:$0xff]
      %v1701 = vld [vmem:[#allocation3 + $0x30] sm:$0xff]
      %v1702 = vld [vmem:[#allocation3 + $0x38] sm:$0xff]
      %v1703 = vld [vmem:[#allocation3 + $0x40] sm:$0xff]
      %v1704 = vld [vmem:[#allocation3 + $0x48] sm:$0xff]
      %v1705 = vld [vmem:[#allocation3 + $0x50] sm:$0xff]
      %v1706 = vld [vmem:[#allocation3 + $0x58] sm:$0xff]
      %v1707 = vld [vmem:[#allocation3 + $0x60] sm:$0xff]
      %v1708 = vld [vmem:[#allocation3 + $0x68] sm:$0xff]
      %v1709 = vld [vmem:[#allocation3 + $0x70] sm:$0xff]
      %v1710 = vld [vmem:[#allocation3 + $0x78] sm:$0xff]
      %1712 = vset.pattern.permute.xlu0 0
      %1713 = vperm.xlu0 %1712, %v1439
      %v1714 = vpop.permute.xlu0 %1713
      %1717 = vset.pattern.permute.xlu0 0
      %1718 = vperm.xlu0 %1717, %v1441
      %v1719 = vpop.permute.xlu0 %1718
      %1722 = vset.pattern.permute.xlu0 0
      %1723 = vperm.xlu0 %1722, %v1443
      %v1724 = vpop.permute.xlu0 %1723
      %1727 = vset.pattern.permute.xlu0 0
      %1728 = vperm.xlu0 %1727, %v1445
      %v1729 = vpop.permute.xlu0 %1728
      %1732 = vset.pattern.permute.xlu0 0
      %1733 = vperm.xlu0 %1732, %v1447
      %v1734 = vpop.permute.xlu0 %1733
      %1737 = vset.pattern.permute.xlu0 0
      %1738 = vperm.xlu0 %1737, %v1449
      %v1739 = vpop.permute.xlu0 %1738
      %1742 = vset.pattern.permute.xlu0 0
      %1743 = vperm.xlu0 %1742, %v1451
      %v1744 = vpop.permute.xlu0 %1743
      %1747 = vset.pattern.permute.xlu0 0
      %1748 = vperm.xlu0 %1747, %v1453
      %v1749 = vpop.permute.xlu0 %1748
      %1752 = vset.pattern.permute.xlu0 0
      %1753 = vperm.xlu0 %1752, %v1455
      %v1754 = vpop.permute.xlu0 %1753
      %1757 = vset.pattern.permute.xlu0 0
      %1758 = vperm.xlu0 %1757, %v1457
      %v1759 = vpop.permute.xlu0 %1758
      %1762 = vset.pattern.permute.xlu0 0
      %1763 = vperm.xlu0 %1762, %v1459
      %v1764 = vpop.permute.xlu0 %1763
      %1767 = vset.pattern.permute.xlu0 0
      %1768 = vperm.xlu0 %1767, %v1461
      %v1769 = vpop.permute.xlu0 %1768
      %1772 = vset.pattern.permute.xlu0 0
      %1773 = vperm.xlu0 %1772, %v1463
      %v1774 = vpop.permute.xlu0 %1773
      %1777 = vset.pattern.permute.xlu0 0
      %1778 = vperm.xlu0 %1777, %v1465
      %v1779 = vpop.permute.xlu0 %1778
      %1782 = vset.pattern.permute.xlu0 0
      %1783 = vperm.xlu0 %1782, %v1467
      %v1784 = vpop.permute.xlu0 %1783
      %1787 = vset.pattern.permute.xlu0 0
      %1788 = vperm.xlu0 %1787, %v1469
      %v1789 = vpop.permute.xlu0 %1788
      %v1791 = vmul.f32 %v1714, %v1695
      %v1792 = vmul.f32 %v1719, %v1696
      %v1793 = vmul.f32 %v1724, %v1697
      %v1794 = vmul.f32 %v1729, %v1698
      %v1795 = vmul.f32 %v1734, %v1699
      %v1796 = vmul.f32 %v1739, %v1700
      %v1797 = vmul.f32 %v1744, %v1701
      %v1798 = vmul.f32 %v1749, %v1702
      %v1799 = vmul.f32 %v1754, %v1703
      %v1800 = vmul.f32 %v1759, %v1704
      %v1801 = vmul.f32 %v1764, %v1705
      %v1802 = vmul.f32 %v1769, %v1706
      %v1803 = vmul.f32 %v1774, %v1707
      %v1804 = vmul.f32 %v1779, %v1708
      %v1805 = vmul.f32 %v1784, %v1709
      %v1806 = vmul.f32 %v1789, %v1710
      %v1807 = vpack.c.bf16 %v1569, %v1567
      %v1808 = vpack.c.bf16 %v1573, %v1571
      %v1809 = vpack.c.bf16 %v1577, %v1575
      %v1810 = vpack.c.bf16 %v1581, %v1579
      %v1811 = vpack.c.bf16 %v1585, %v1583
      %v1812 = vpack.c.bf16 %v1589, %v1587
      %v1813 = vpack.c.bf16 %v1593, %v1591
      %v1814 = vpack.c.bf16 %v1597, %v1595
      %v1831 = vunpack.c.l.b16 %v1034
      %v1832 = vunpack.c.l.b16 %v1035
      %v1833 = vunpack.c.l.b16 %v1036
      %v1834 = vunpack.c.l.b16 %v1037
      %v1835 = vunpack.c.l.b16 %v1038
      %v1836 = vunpack.c.l.b16 %v1039
      %v1837 = vunpack.c.l.b16 %v1040
      %v1838 = vunpack.c.l.b16 %v1041
      %v1839 = vunpack.c.l.b16 %v1042
      %v1840 = vunpack.c.l.b16 %v1043
      %v1841 = vunpack.c.l.b16 %v1044
      %v1842 = vunpack.c.l.b16 %v1045
      %v1843 = vunpack.c.l.b16 %v1046
      %v1844 = vunpack.c.l.b16 %v1047
      %v1845 = vunpack.c.l.b16 %v1048
      %v1846 = vunpack.c.l.b16 %v1049
      %v1847 = vpack.c.b16 %v1832, %v1831
      %v1848 = vpack.c.b16 %v1834, %v1833
      %v1849 = vpack.c.b16 %v1836, %v1835
      %v1850 = vpack.c.b16 %v1838, %v1837
      %v1851 = vpack.c.b16 %v1840, %v1839
      %v1852 = vpack.c.b16 %v1842, %v1841
      %v1853 = vpack.c.b16 %v1844, %v1843
      %v1854 = vpack.c.b16 %v1846, %v1845
      %1863 = vmatpush.bf16.msra.mxu0 %v1854
      %1864 = vmatpush.bf16.msra.mxu0 %v1853
      %1865 = vmatpush.bf16.msra.mxu0 %v1852
      %1866 = vmatpush.bf16.msra.mxu0 %v1851
      %1867 = vmatpush.bf16.msra.mxu0 %v1850
      %1868 = vmatpush.bf16.msra.mxu0 %v1849
      %1869 = vmatpush.bf16.msra.mxu0 %v1848
      %1870 = vmatpush.bf16.msra.mxu0 %v1847
      %1871 = vmatmul.bf16.gmra.mxu0 %v1807
      %v1872 = vpop.f32.mrf.mxu0
      %v1873 = vadd.f32 0.0, %v1872
      %v1874 = vpop.f32.mrf.mxu0
      %v1875 = vadd.f32 0.0, %v1874
      %1876 = vmatmul.bf16.gmra.mxu0 %v1808
      %v1877 = vpop.f32.mrf.mxu0
      %v1878 = vadd.f32 0.0, %v1877
      %v1879 = vpop.f32.mrf.mxu0
      %v1880 = vadd.f32 0.0, %v1879
      %1881 = vmatmul.bf16.gmra.mxu0 %v1809
      %v1882 = vpop.f32.mrf.mxu0
      %v1883 = vadd.f32 0.0, %v1882
      %v1884 = vpop.f32.mrf.mxu0
      %v1885 = vadd.f32 0.0, %v1884
      %1886 = vmatmul.bf16.gmra.mxu0 %v1810
      %v1887 = vpop.f32.mrf.mxu0
      %v1888 = vadd.f32 0.0, %v1887
      %v1889 = vpop.f32.mrf.mxu0
      %v1890 = vadd.f32 0.0, %v1889
      %1891 = vmatmul.bf16.gmra.mxu0 %v1811
      %v1892 = vpop.f32.mrf.mxu0
      %v1893 = vadd.f32 0.0, %v1892
      %v1894 = vpop.f32.mrf.mxu0
      %v1895 = vadd.f32 0.0, %v1894
      %1896 = vmatmul.bf16.gmra.mxu0 %v1812
      %v1897 = vpop.f32.mrf.mxu0
      %v1898 = vadd.f32 0.0, %v1897
      %v1899 = vpop.f32.mrf.mxu0
      %v1900 = vadd.f32 0.0, %v1899
      %1901 = vmatmul.bf16.gmra.mxu0 %v1813
      %v1902 = vpop.f32.mrf.mxu0
      %v1903 = vadd.f32 0.0, %v1902
      %v1904 = vpop.f32.mrf.mxu0
      %v1905 = vadd.f32 0.0, %v1904
      %1906 = vmatmul.bf16.gmra.mxu0 %v1814
      %v1907 = vpop.f32.mrf.mxu0
      %v1908 = vadd.f32 0.0, %v1907
      %v1909 = vpop.f32.mrf.mxu0
      %v1910 = vadd.f32 0.0, %v1909
      %1911 = vdwg.mxu0
      %v1912 = vadd.f32 %v1791, %v1873
      %v1913 = vadd.f32 %v1792, %v1875
      %v1914 = vadd.f32 %v1793, %v1878
      %v1915 = vadd.f32 %v1794, %v1880
      %v1916 = vadd.f32 %v1795, %v1883
      %v1917 = vadd.f32 %v1796, %v1885
      %v1918 = vadd.f32 %v1797, %v1888
      %v1919 = vadd.f32 %v1798, %v1890
      %v1920 = vadd.f32 %v1799, %v1893
      %v1921 = vadd.f32 %v1800, %v1895
      %v1922 = vadd.f32 %v1801, %v1898
      %v1923 = vadd.f32 %v1802, %v1900
      %v1924 = vadd.f32 %v1803, %v1903
      %v1925 = vadd.f32 %v1804, %v1905
      %v1926 = vadd.f32 %v1805, %v1908
      %v1927 = vadd.f32 %v1806, %v1910
      %1928 = vst.msk [vmem:[#allocation3] sm:$0xff] %vm1260, %v1912
      %1929 = vst.msk [vmem:[#allocation3 + $0x8] sm:$0xff] %vm1260, %v1913
      %1930 = vst.msk [vmem:[#allocation3 + $0x10] sm:$0xff] %vm1260, %v1914
      %1931 = vst.msk [vmem:[#allocation3 + $0x18] sm:$0xff] %vm1260, %v1915
      %1932 = vst.msk [vmem:[#allocation3 + $0x20] sm:$0xff] %vm1260, %v1916
      %1933 = vst.msk [vmem:[#allocation3 + $0x28] sm:$0xff] %vm1260, %v1917
      %1934 = vst.msk [vmem:[#allocation3 + $0x30] sm:$0xff] %vm1260, %v1918
      %1935 = vst.msk [vmem:[#allocation3 + $0x38] sm:$0xff] %vm1260, %v1919
      %1936 = vst.msk [vmem:[#allocation3 + $0x40] sm:$0xff] %vm1260, %v1920
      %1937 = vst.msk [vmem:[#allocation3 + $0x48] sm:$0xff] %vm1260, %v1921
      %1938 = vst.msk [vmem:[#allocation3 + $0x50] sm:$0xff] %vm1260, %v1922
      %1939 = vst.msk [vmem:[#allocation3 + $0x58] sm:$0xff] %vm1260, %v1923
      %1940 = vst.msk [vmem:[#allocation3 + $0x60] sm:$0xff] %vm1260, %v1924
      %1941 = vst.msk [vmem:[#allocation3 + $0x68] sm:$0xff] %vm1260, %v1925
      %1942 = vst.msk [vmem:[#allocation3 + $0x70] sm:$0xff] %vm1260, %v1926
      %1943 = vst.msk [vmem:[#allocation3 + $0x78] sm:$0xff] %vm1260, %v1927
      %1944 = vst.msk [vmem:[#allocation4] sm:$0xff] %vm1678, %v1406
      %1945 = vst.msk [vmem:[#allocation4 + $0x8] sm:$0xff] %vm1678, %v1407
      %1946 = vst.msk [vmem:[#allocation4 + $0x10] sm:$0xff] %vm1678, %v1408
      %1947 = vst.msk [vmem:[#allocation4 + $0x18] sm:$0xff] %vm1678, %v1409
      %1948 = vst.msk [vmem:[#allocation4 + $0x20] sm:$0xff] %vm1678, %v1410
      %1949 = vst.msk [vmem:[#allocation4 + $0x28] sm:$0xff] %vm1678, %v1411
      %1950 = vst.msk [vmem:[#allocation4 + $0x30] sm:$0xff] %vm1678, %v1412
      %1951 = vst.msk [vmem:[#allocation4 + $0x38] sm:$0xff] %vm1678, %v1413
      %1952 = vst.msk [vmem:[#allocation4 + $0x40] sm:$0xff] %vm1678, %v1414
      %1953 = vst.msk [vmem:[#allocation4 + $0x48] sm:$0xff] %vm1678, %v1415
      %1954 = vst.msk [vmem:[#allocation4 + $0x50] sm:$0xff] %vm1678, %v1416
      %1955 = vst.msk [vmem:[#allocation4 + $0x58] sm:$0xff] %vm1678, %v1417
      %1956 = vst.msk [vmem:[#allocation4 + $0x60] sm:$0xff] %vm1678, %v1418
      %1957 = vst.msk [vmem:[#allocation4 + $0x68] sm:$0xff] %vm1678, %v1419
      %1958 = vst.msk [vmem:[#allocation4 + $0x70] sm:$0xff] %vm1678, %v1420
      %1959 = vst.msk [vmem:[#allocation4 + $0x78] sm:$0xff] %vm1678, %v1421
      %1960 = vrot.lane.b32.xlu0 %v1212, 120
      %v1961 = vpop.permute.xlu0 %1960
      %1962 = vrot.lane.b32.xlu0 %v1213, 120
      %v1963 = vpop.permute.xlu0 %1962
      %1964 = vrot.lane.b32.xlu0 %v1214, 120
      %v1965 = vpop.permute.xlu0 %1964
      %1966 = vrot.lane.b32.xlu0 %v1215, 120
      %v1967 = vpop.permute.xlu0 %1966
      %1968 = vrot.lane.b32.xlu0 %v1216, 120
      %v1969 = vpop.permute.xlu0 %1968
      %1970 = vrot.lane.b32.xlu0 %v1217, 120
      %v1971 = vpop.permute.xlu0 %1970
      %1972 = vrot.lane.b32.xlu0 %v1218, 120
      %v1973 = vpop.permute.xlu0 %1972
      %1974 = vrot.lane.b32.xlu0 %v1219, 120
      %v1975 = vpop.permute.xlu0 %1974
      %1976 = vrot.lane.b32.xlu0 %v1252, 120
      %v1977 = vpop.permute.xlu0 %1976
      %1978 = vrot.lane.b32.xlu0 %v1253, 120
      %v1979 = vpop.permute.xlu0 %1978
      %1980 = vrot.lane.b32.xlu0 %v1254, 120
      %v1981 = vpop.permute.xlu0 %1980
      %1982 = vrot.lane.b32.xlu0 %v1255, 120
      %v1983 = vpop.permute.xlu0 %1982
      %1984 = vrot.lane.b32.xlu0 %v1256, 120
      %v1985 = vpop.permute.xlu0 %1984
      %1986 = vrot.lane.b32.xlu0 %v1257, 120
      %v1987 = vpop.permute.xlu0 %1986
      %1988 = vrot.lane.b32.xlu0 %v1258, 120
      %v1989 = vpop.permute.xlu0 %1988
      %1990 = vrot.lane.b32.xlu0 %v1259, 120
      %v1991 = vpop.permute.xlu0 %1990
      %v1993 = vsel %vm1260, %v1961, 0
      %v1996 = vsel %vm1260, %v1963, 0
      %v1999 = vsel %vm1260, %v1965, 0
      %v2002 = vsel %vm1260, %v1967, 0
      %v2005 = vsel %vm1260, %v1969, 0
      %v2008 = vsel %vm1260, %v1971, 0
      %v2011 = vsel %vm1260, %v1973, 0
      %v2014 = vsel %vm1260, %v1975, 0
      %v2017 = vsel %vm1260, %v1977, 0
      %v2020 = vsel %vm1260, %v1979, 0
      %v2023 = vsel %vm1260, %v1981, 0
      %v2026 = vsel %vm1260, %v1983, 0
      %v2029 = vsel %vm1260, %v1985, 0
      %v2032 = vsel %vm1260, %v1987, 0
      %v2035 = vsel %vm1260, %v1989, 0
      %v2038 = vsel %vm1260, %v1991, 0
      %2040 = vmatpush.bf16.xpose.msra.mxu0 %v2038
      %2041 = vmatpush.bf16.xpose.msra.mxu0 %v2035
      %2042 = vmatpush.bf16.xpose.msra.mxu0 %v2032
      %2043 = vmatpush.bf16.xpose.msra.mxu0 %v2029
      %2044 = vmatpush.bf16.xpose.msra.mxu0 %v2026
      %2045 = vmatpush.bf16.xpose.msra.mxu0 %v2023
      %2046 = vmatpush.bf16.xpose.msra.mxu0 %v2020
      %2047 = vmatpush.bf16.xpose.msra.mxu0 %v2017
      %2048 = vmatmul.bf16.gmra.mxu0 %v1993
      %v2049 = vpop.f32.mrf.mxu0
      %v2050 = vadd.f32 %v1132, %v2049
      %v2051 = vpop.f32.mrf.mxu0
      %v2052 = vadd.f32 %v1133, %v2051
      %2053 = vmatmul.bf16.gmra.mxu0 %v1996
      %v2054 = vpop.f32.mrf.mxu0
      %v2055 = vadd.f32 %v1134, %v2054
      %v2056 = vpop.f32.mrf.mxu0
      %v2057 = vadd.f32 %v1135, %v2056
      %2058 = vmatmul.bf16.gmra.mxu0 %v1999
      %v2059 = vpop.f32.mrf.mxu0
      %v2060 = vadd.f32 %v1136, %v2059
      %v2061 = vpop.f32.mrf.mxu0
      %v2062 = vadd.f32 %v1137, %v2061
      %2063 = vmatmul.bf16.gmra.mxu0 %v2002
      %v2064 = vpop.f32.mrf.mxu0
      %v2065 = vadd.f32 %v1138, %v2064
      %v2066 = vpop.f32.mrf.mxu0
      %v2067 = vadd.f32 %v1139, %v2066
      %2068 = vmatmul.bf16.gmra.mxu0 %v2005
      %v2069 = vpop.f32.mrf.mxu0
      %v2070 = vadd.f32 %v1140, %v2069
      %v2071 = vpop.f32.mrf.mxu0
      %v2072 = vadd.f32 %v1141, %v2071
      %2073 = vmatmul.bf16.gmra.mxu0 %v2008
      %v2074 = vpop.f32.mrf.mxu0
      %v2075 = vadd.f32 %v1142, %v2074
      %v2076 = vpop.f32.mrf.mxu0
      %v2077 = vadd.f32 %v1143, %v2076
      %2078 = vmatmul.bf16.gmra.mxu0 %v2011
      %v2079 = vpop.f32.mrf.mxu0
      %v2080 = vadd.f32 %v1144, %v2079
      %v2081 = vpop.f32.mrf.mxu0
      %v2082 = vadd.f32 %v1145, %v2081
      %2083 = vmatmul.bf16.gmra.mxu0 %v2014
      %v2084 = vpop.f32.mrf.mxu0
      %v2085 = vadd.f32 %v1146, %v2084
      %v2086 = vpop.f32.mrf.mxu0
      %v2087 = vadd.f32 %v1147, %v2086
      %2088 = vdwg.mxu0
      %v2089 = vld [vmem:[#allocation4] sm:$0xff]
      %v2090 = vld [vmem:[#allocation4 + $0x8] sm:$0xff]
      %v2091 = vld [vmem:[#allocation4 + $0x10] sm:$0xff]
      %v2092 = vld [vmem:[#allocation4 + $0x18] sm:$0xff]
      %v2093 = vld [vmem:[#allocation4 + $0x20] sm:$0xff]
      %v2094 = vld [vmem:[#allocation4 + $0x28] sm:$0xff]
      %v2095 = vld [vmem:[#allocation4 + $0x30] sm:$0xff]
      %v2096 = vld [vmem:[#allocation4 + $0x38] sm:$0xff]
      %v2097 = vld [vmem:[#allocation4 + $0x40] sm:$0xff]
      %v2098 = vld [vmem:[#allocation4 + $0x48] sm:$0xff]
      %v2099 = vld [vmem:[#allocation4 + $0x50] sm:$0xff]
      %v2100 = vld [vmem:[#allocation4 + $0x58] sm:$0xff]
      %v2101 = vld [vmem:[#allocation4 + $0x60] sm:$0xff]
      %v2102 = vld [vmem:[#allocation4 + $0x68] sm:$0xff]
      %v2103 = vld [vmem:[#allocation4 + $0x70] sm:$0xff]
      %v2104 = vld [vmem:[#allocation4 + $0x78] sm:$0xff]
      %2105 = vmax.xlane.f32.xlu0 %v2050
      %v2106 = vpop.xlane.xlu0 %2105
      %2107 = vmax.xlane.f32.xlu0 %v2052
      %v2108 = vpop.xlane.xlu0 %2107
      %2109 = vmax.xlane.f32.xlu0 %v2055
      %v2110 = vpop.xlane.xlu0 %2109
      %2111 = vmax.xlane.f32.xlu0 %v2057
      %v2112 = vpop.xlane.xlu0 %2111
      %2113 = vmax.xlane.f32.xlu0 %v2060
      %v2114 = vpop.xlane.xlu0 %2113
      %2115 = vmax.xlane.f32.xlu0 %v2062
      %v2116 = vpop.xlane.xlu0 %2115
      %2117 = vmax.xlane.f32.xlu0 %v2065
      %v2118 = vpop.xlane.xlu0 %2117
      %2119 = vmax.xlane.f32.xlu0 %v2067
      %v2120 = vpop.xlane.xlu0 %2119
      %2121 = vmax.xlane.f32.xlu0 %v2070
      %v2122 = vpop.xlane.xlu0 %2121
      %2123 = vmax.xlane.f32.xlu0 %v2072
      %v2124 = vpop.xlane.xlu0 %2123
      %2125 = vmax.xlane.f32.xlu0 %v2075
      %v2126 = vpop.xlane.xlu0 %2125
      %2127 = vmax.xlane.f32.xlu0 %v2077
      %v2128 = vpop.xlane.xlu0 %2127
      %2129 = vmax.xlane.f32.xlu0 %v2080
      %v2130 = vpop.xlane.xlu0 %2129
      %2131 = vmax.xlane.f32.xlu0 %v2082
      %v2132 = vpop.xlane.xlu0 %2131
      %2133 = vmax.xlane.f32.xlu0 %v2085
      %v2134 = vpop.xlane.xlu0 %2133
      %2135 = vmax.xlane.f32.xlu0 %v2087
      %v2136 = vpop.xlane.xlu0 %2135
      %v2137 = vmax.f32 %v2089, %v2106
      %v2138 = vmax.f32 %v2090, %v2108
      %v2139 = vmax.f32 %v2091, %v2110
      %v2140 = vmax.f32 %v2092, %v2112
      %v2141 = vmax.f32 %v2093, %v2114
      %v2142 = vmax.f32 %v2094, %v2116
      %v2143 = vmax.f32 %v2095, %v2118
      %v2144 = vmax.f32 %v2096, %v2120
      %v2145 = vmax.f32 %v2097, %v2122
      %v2146 = vmax.f32 %v2098, %v2124
      %v2147 = vmax.f32 %v2099, %v2126
      %v2148 = vmax.f32 %v2100, %v2128
      %v2149 = vmax.f32 %v2101, %v2130
      %v2150 = vmax.f32 %v2102, %v2132
      %v2151 = vmax.f32 %v2103, %v2134
      %v2152 = vmax.f32 %v2104, %v2136
      %v2153 = vsub.f32 %v2089, %v2137
      %v2154 = vsub.f32 %v2090, %v2138
      %v2155 = vsub.f32 %v2091, %v2139
      %v2156 = vsub.f32 %v2092, %v2140
      %v2157 = vsub.f32 %v2093, %v2141
      %v2158 = vsub.f32 %v2094, %v2142
      %v2159 = vsub.f32 %v2095, %v2143
      %v2160 = vsub.f32 %v2096, %v2144
      %v2161 = vsub.f32 %v2097, %v2145
      %v2162 = vsub.f32 %v2098, %v2146
      %v2163 = vsub.f32 %v2099, %v2147
      %v2164 = vsub.f32 %v2100, %v2148
      %v2165 = vsub.f32 %v2101, %v2149
      %v2166 = vsub.f32 %v2102, %v2150
      %v2167 = vsub.f32 %v2103, %v2151
      %v2168 = vsub.f32 %v2104, %v2152
      %v2169 = vmul.f32 %v2153, 1.442695
      %v2170 = vpow.pop %v2169
      %v2171 = vmul.f32 %v2154, 1.442695
      %v2172 = vpow.pop %v2171
      %v2173 = vmul.f32 %v2155, 1.442695
      %v2174 = vpow.pop %v2173
      %v2175 = vmul.f32 %v2156, 1.442695
      %v2176 = vpow.pop %v2175
      %v2177 = vmul.f32 %v2157, 1.442695
      %v2178 = vpow.pop %v2177
      %v2179 = vmul.f32 %v2158, 1.442695
      %v2180 = vpow.pop %v2179
      %v2181 = vmul.f32 %v2159, 1.442695
      %v2182 = vpow.pop %v2181
      %v2183 = vmul.f32 %v2160, 1.442695
      %v2184 = vpow.pop %v2183
      %v2185 = vmul.f32 %v2161, 1.442695
      %v2186 = vpow.pop %v2185
      %v2187 = vmul.f32 %v2162, 1.442695
      %v2188 = vpow.pop %v2187
      %v2189 = vmul.f32 %v2163, 1.442695
      %v2190 = vpow.pop %v2189
      %v2191 = vmul.f32 %v2164, 1.442695
      %v2192 = vpow.pop %v2191
      %v2193 = vmul.f32 %v2165, 1.442695
      %v2194 = vpow.pop %v2193
      %v2195 = vmul.f32 %v2166, 1.442695
      %v2196 = vpow.pop %v2195
      %v2197 = vmul.f32 %v2167, 1.442695
      %v2198 = vpow.pop %v2197
      %v2199 = vmul.f32 %v2168, 1.442695
      %v2200 = vpow.pop %v2199
      %2202 = vset.pattern.permute.xlu0 1
      %2203 = vperm.xlu0 %2202, %v2137
      %v2204 = vpop.permute.xlu0 %2203
      %2207 = vset.pattern.permute.xlu0 1
      %2208 = vperm.xlu0 %2207, %v2138
      %v2209 = vpop.permute.xlu0 %2208
      %2212 = vset.pattern.permute.xlu0 1
      %2213 = vperm.xlu0 %2212, %v2139
      %v2214 = vpop.permute.xlu0 %2213
      %2217 = vset.pattern.permute.xlu0 1
      %2218 = vperm.xlu0 %2217, %v2140
      %v2219 = vpop.permute.xlu0 %2218
      %2222 = vset.pattern.permute.xlu0 1
      %2223 = vperm.xlu0 %2222, %v2141
      %v2224 = vpop.permute.xlu0 %2223
      %2227 = vset.pattern.permute.xlu0 1
      %2228 = vperm.xlu0 %2227, %v2142
      %v2229 = vpop.permute.xlu0 %2228
      %2232 = vset.pattern.permute.xlu0 1
      %2233 = vperm.xlu0 %2232, %v2143
      %v2234 = vpop.permute.xlu0 %2233
      %2237 = vset.pattern.permute.xlu0 1
      %2238 = vperm.xlu0 %2237, %v2144
      %v2239 = vpop.permute.xlu0 %2238
      %2242 = vset.pattern.permute.xlu0 1
      %2243 = vperm.xlu0 %2242, %v2145
      %v2244 = vpop.permute.xlu0 %2243
      %2247 = vset.pattern.permute.xlu0 1
      %2248 = vperm.xlu0 %2247, %v2146
      %v2249 = vpop.permute.xlu0 %2248
      %2252 = vset.pattern.permute.xlu0 1
      %2253 = vperm.xlu0 %2252, %v2147
      %v2254 = vpop.permute.xlu0 %2253
      %2257 = vset.pattern.permute.xlu0 1
      %2258 = vperm.xlu0 %2257, %v2148
      %v2259 = vpop.permute.xlu0 %2258
      %2262 = vset.pattern.permute.xlu0 1
      %2263 = vperm.xlu0 %2262, %v2149
      %v2264 = vpop.permute.xlu0 %2263
      %2267 = vset.pattern.permute.xlu0 1
      %2268 = vperm.xlu0 %2267, %v2150
      %v2269 = vpop.permute.xlu0 %2268
      %2272 = vset.pattern.permute.xlu0 1
      %2273 = vperm.xlu0 %2272, %v2151
      %v2274 = vpop.permute.xlu0 %2273
      %2277 = vset.pattern.permute.xlu0 1
      %2278 = vperm.xlu0 %2277, %v2152
      %v2279 = vpop.permute.xlu0 %2278
      %v2281 = vsub.f32 %v2050, %v2204
      %v2282 = vsub.f32 %v2052, %v2209
      %v2283 = vsub.f32 %v2055, %v2214
      %v2284 = vsub.f32 %v2057, %v2219
      %v2285 = vsub.f32 %v2060, %v2224
      %v2286 = vsub.f32 %v2062, %v2229
      %v2287 = vsub.f32 %v2065, %v2234
      %v2288 = vsub.f32 %v2067, %v2239
      %v2289 = vsub.f32 %v2070, %v2244
      %v2290 = vsub.f32 %v2072, %v2249
      %v2291 = vsub.f32 %v2075, %v2254
      %v2292 = vsub.f32 %v2077, %v2259
      %v2293 = vsub.f32 %v2080, %v2264
      %v2294 = vsub.f32 %v2082, %v2269
      %v2295 = vsub.f32 %v2085, %v2274
      %v2296 = vsub.f32 %v2087, %v2279
      %v2297 = vmul.f32 %v2281, 1.442695
      %v2298 = vpow.pop %v2297
      %v2299 = vmul.f32 %v2282, 1.442695
      %v2300 = vpow.pop %v2299
      %v2301 = vmul.f32 %v2283, 1.442695
      %v2302 = vpow.pop %v2301
      %v2303 = vmul.f32 %v2284, 1.442695
      %v2304 = vpow.pop %v2303
      %v2305 = vmul.f32 %v2285, 1.442695
      %v2306 = vpow.pop %v2305
      %v2307 = vmul.f32 %v2286, 1.442695
      %v2308 = vpow.pop %v2307
      %v2309 = vmul.f32 %v2287, 1.442695
      %v2310 = vpow.pop %v2309
      %v2311 = vmul.f32 %v2288, 1.442695
      %v2312 = vpow.pop %v2311
      %v2313 = vmul.f32 %v2289, 1.442695
      %v2314 = vpow.pop %v2313
      %v2315 = vmul.f32 %v2290, 1.442695
      %v2316 = vpow.pop %v2315
      %v2317 = vmul.f32 %v2291, 1.442695
      %v2318 = vpow.pop %v2317
      %v2319 = vmul.f32 %v2292, 1.442695
      %v2320 = vpow.pop %v2319
      %v2321 = vmul.f32 %v2293, 1.442695
      %v2322 = vpow.pop %v2321
      %v2323 = vmul.f32 %v2294, 1.442695
      %v2324 = vpow.pop %v2323
      %v2325 = vmul.f32 %v2295, 1.442695
      %v2326 = vpow.pop %v2325
      %v2327 = vmul.f32 %v2296, 1.442695
      %v2328 = vpow.pop %v2327
      %v2329 = vld [vmem:[#allocation5] sm:$0xff]
      %v2330 = vld [vmem:[#allocation5 + $0x8] sm:$0xff]
      %v2331 = vld [vmem:[#allocation5 + $0x10] sm:$0xff]
      %v2332 = vld [vmem:[#allocation5 + $0x18] sm:$0xff]
      %v2333 = vld [vmem:[#allocation5 + $0x20] sm:$0xff]
      %v2334 = vld [vmem:[#allocation5 + $0x28] sm:$0xff]
      %v2335 = vld [vmem:[#allocation5 + $0x30] sm:$0xff]
      %v2336 = vld [vmem:[#allocation5 + $0x38] sm:$0xff]
      %v2337 = vld [vmem:[#allocation5 + $0x40] sm:$0xff]
      %v2338 = vld [vmem:[#allocation5 + $0x48] sm:$0xff]
      %v2339 = vld [vmem:[#allocation5 + $0x50] sm:$0xff]
      %v2340 = vld [vmem:[#allocation5 + $0x58] sm:$0xff]
      %v2341 = vld [vmem:[#allocation5 + $0x60] sm:$0xff]
      %v2342 = vld [vmem:[#allocation5 + $0x68] sm:$0xff]
      %v2343 = vld [vmem:[#allocation5 + $0x70] sm:$0xff]
      %v2344 = vld [vmem:[#allocation5 + $0x78] sm:$0xff]
      %v2345 = vmul.f32 %v2170, %v2329
      %v2346 = vmul.f32 %v2172, %v2330
      %v2347 = vmul.f32 %v2174, %v2331
      %v2348 = vmul.f32 %v2176, %v2332
      %v2349 = vmul.f32 %v2178, %v2333
      %v2350 = vmul.f32 %v2180, %v2334
      %v2351 = vmul.f32 %v2182, %v2335
      %v2352 = vmul.f32 %v2184, %v2336
      %v2353 = vmul.f32 %v2186, %v2337
      %v2354 = vmul.f32 %v2188, %v2338
      %v2355 = vmul.f32 %v2190, %v2339
      %v2356 = vmul.f32 %v2192, %v2340
      %v2357 = vmul.f32 %v2194, %v2341
      %v2358 = vmul.f32 %v2196, %v2342
      %v2359 = vmul.f32 %v2198, %v2343
      %v2360 = vmul.f32 %v2200, %v2344
      %2361 = vadd.xlane.f32.xlu0 %v2298
      %v2362 = vpop.xlane.xlu0 %2361
      %2363 = vadd.xlane.f32.xlu0 %v2300
      %v2364 = vpop.xlane.xlu0 %2363
      %2365 = vadd.xlane.f32.xlu0 %v2302
      %v2366 = vpop.xlane.xlu0 %2365
      %2367 = vadd.xlane.f32.xlu0 %v2304
      %v2368 = vpop.xlane.xlu0 %2367
      %2369 = vadd.xlane.f32.xlu0 %v2306
      %v2370 = vpop.xlane.xlu0 %2369
      %2371 = vadd.xlane.f32.xlu0 %v2308
      %v2372 = vpop.xlane.xlu0 %2371
      %2373 = vadd.xlane.f32.xlu0 %v2310
      %v2374 = vpop.xlane.xlu0 %2373
      %2375 = vadd.xlane.f32.xlu0 %v2312
      %v2376 = vpop.xlane.xlu0 %2375
      %2377 = vadd.xlane.f32.xlu0 %v2314
      %v2378 = vpop.xlane.xlu0 %2377
      %2379 = vadd.xlane.f32.xlu0 %v2316
      %v2380 = vpop.xlane.xlu0 %2379
      %2381 = vadd.xlane.f32.xlu0 %v2318
      %v2382 = vpop.xlane.xlu0 %2381
      %2383 = vadd.xlane.f32.xlu0 %v2320
      %v2384 = vpop.xlane.xlu0 %2383
      %2385 = vadd.xlane.f32.xlu0 %v2322
      %v2386 = vpop.xlane.xlu0 %2385
      %2387 = vadd.xlane.f32.xlu0 %v2324
      %v2388 = vpop.xlane.xlu0 %2387
      %2389 = vadd.xlane.f32.xlu0 %v2326
      %v2390 = vpop.xlane.xlu0 %2389
      %2391 = vadd.xlane.f32.xlu0 %v2328
      %v2392 = vpop.xlane.xlu0 %2391
      %v2393 = vadd.f32 %v2345, %v2362
      %v2394 = vadd.f32 %v2346, %v2364
      %v2395 = vadd.f32 %v2347, %v2366
      %v2396 = vadd.f32 %v2348, %v2368
      %v2397 = vadd.f32 %v2349, %v2370
      %v2398 = vadd.f32 %v2350, %v2372
      %v2399 = vadd.f32 %v2351, %v2374
      %v2400 = vadd.f32 %v2352, %v2376
      %v2401 = vadd.f32 %v2353, %v2378
      %v2402 = vadd.f32 %v2354, %v2380
      %v2403 = vadd.f32 %v2355, %v2382
      %v2404 = vadd.f32 %v2356, %v2384
      %v2405 = vadd.f32 %v2357, %v2386
      %v2406 = vadd.f32 %v2358, %v2388
      %v2407 = vadd.f32 %v2359, %v2390
      %v2408 = vadd.f32 %v2360, %v2392
      %vm2409 = vcmask 15368
      %2410 = vst.msk [vmem:[#allocation5] sm:$0xff] %vm2409, %v2393
      %2411 = vst.msk [vmem:[#allocation5 + $0x8] sm:$0xff] %vm2409, %v2394
      %2412 = vst.msk [vmem:[#allocation5 + $0x10] sm:$0xff] %vm2409, %v2395
      %2413 = vst.msk [vmem:[#allocation5 + $0x18] sm:$0xff] %vm2409, %v2396
      %2414 = vst.msk [vmem:[#allocation5 + $0x20] sm:$0xff] %vm2409, %v2397
      %2415 = vst.msk [vmem:[#allocation5 + $0x28] sm:$0xff] %vm2409, %v2398
      %2416 = vst.msk [vmem:[#allocation5 + $0x30] sm:$0xff] %vm2409, %v2399
      %2417 = vst.msk [vmem:[#allocation5 + $0x38] sm:$0xff] %vm2409, %v2400
      %2418 = vst.msk [vmem:[#allocation5 + $0x40] sm:$0xff] %vm2409, %v2401
      %2419 = vst.msk [vmem:[#allocation5 + $0x48] sm:$0xff] %vm2409, %v2402
      %2420 = vst.msk [vmem:[#allocation5 + $0x50] sm:$0xff] %vm2409, %v2403
      %2421 = vst.msk [vmem:[#allocation5 + $0x58] sm:$0xff] %vm2409, %v2404
      %2422 = vst.msk [vmem:[#allocation5 + $0x60] sm:$0xff] %vm2409, %v2405
      %2423 = vst.msk [vmem:[#allocation5 + $0x68] sm:$0xff] %vm2409, %v2406
      %2424 = vst.msk [vmem:[#allocation5 + $0x70] sm:$0xff] %vm2409, %v2407
      %2425 = vst.msk [vmem:[#allocation5 + $0x78] sm:$0xff] %vm2409, %v2408
      %v2426 = vld [vmem:[#allocation3] sm:$0xff]
      %v2427 = vld [vmem:[#allocation3 + $0x8] sm:$0xff]
      %v2428 = vld [vmem:[#allocation3 + $0x10] sm:$0xff]
      %v2429 = vld [vmem:[#allocation3 + $0x18] sm:$0xff]
      %v2430 = vld [vmem:[#allocation3 + $0x20] sm:$0xff]
      %v2431 = vld [vmem:[#allocation3 + $0x28] sm:$0xff]
      %v2432 = vld [vmem:[#allocation3 + $0x30] sm:$0xff]
      %v2433 = vld [vmem:[#allocation3 + $0x38] sm:$0xff]
      %v2434 = vld [vmem:[#allocation3 + $0x40] sm:$0xff]
      %v2435 = vld [vmem:[#allocation3 + $0x48] sm:$0xff]
      %v2436 = vld [vmem:[#allocation3 + $0x50] sm:$0xff]
      %v2437 = vld [vmem:[#allocation3 + $0x58] sm:$0xff]
      %v2438 = vld [vmem:[#allocation3 + $0x60] sm:$0xff]
      %v2439 = vld [vmem:[#allocation3 + $0x68] sm:$0xff]
      %v2440 = vld [vmem:[#allocation3 + $0x70] sm:$0xff]
      %v2441 = vld [vmem:[#allocation3 + $0x78] sm:$0xff]
      %2443 = vset.pattern.permute.xlu0 1
      %2444 = vperm.xlu0 %2443, %v2170
      %v2445 = vpop.permute.xlu0 %2444
      %2448 = vset.pattern.permute.xlu0 1
      %2449 = vperm.xlu0 %2448, %v2172
      %v2450 = vpop.permute.xlu0 %2449
      %2453 = vset.pattern.permute.xlu0 1
      %2454 = vperm.xlu0 %2453, %v2174
      %v2455 = vpop.permute.xlu0 %2454
      %2458 = vset.pattern.permute.xlu0 1
      %2459 = vperm.xlu0 %2458, %v2176
      %v2460 = vpop.permute.xlu0 %2459
      %2463 = vset.pattern.permute.xlu0 1
      %2464 = vperm.xlu0 %2463, %v2178
      %v2465 = vpop.permute.xlu0 %2464
      %2468 = vset.pattern.permute.xlu0 1
      %2469 = vperm.xlu0 %2468, %v2180
      %v2470 = vpop.permute.xlu0 %2469
      %2473 = vset.pattern.permute.xlu0 1
      %2474 = vperm.xlu0 %2473, %v2182
      %v2475 = vpop.permute.xlu0 %2474
      %2478 = vset.pattern.permute.xlu0 1
      %2479 = vperm.xlu0 %2478, %v2184
      %v2480 = vpop.permute.xlu0 %2479
      %2483 = vset.pattern.permute.xlu0 1
      %2484 = vperm.xlu0 %2483, %v2186
      %v2485 = vpop.permute.xlu0 %2484
      %2488 = vset.pattern.permute.xlu0 1
      %2489 = vperm.xlu0 %2488, %v2188
      %v2490 = vpop.permute.xlu0 %2489
      %2493 = vset.pattern.permute.xlu0 1
      %2494 = vperm.xlu0 %2493, %v2190
      %v2495 = vpop.permute.xlu0 %2494
      %2498 = vset.pattern.permute.xlu0 1
      %2499 = vperm.xlu0 %2498, %v2192
      %v2500 = vpop.permute.xlu0 %2499
      %2503 = vset.pattern.permute.xlu0 1
      %2504 = vperm.xlu0 %2503, %v2194
      %v2505 = vpop.permute.xlu0 %2504
      %2508 = vset.pattern.permute.xlu0 1
      %2509 = vperm.xlu0 %2508, %v2196
      %v2510 = vpop.permute.xlu0 %2509
      %2513 = vset.pattern.permute.xlu0 1
      %2514 = vperm.xlu0 %2513, %v2198
      %v2515 = vpop.permute.xlu0 %2514
      %2518 = vset.pattern.permute.xlu0 1
      %2519 = vperm.xlu0 %2518, %v2200
      %v2520 = vpop.permute.xlu0 %2519
      %v2522 = vmul.f32 %v2445, %v2426
      %v2523 = vmul.f32 %v2450, %v2427
      %v2524 = vmul.f32 %v2455, %v2428
      %v2525 = vmul.f32 %v2460, %v2429
      %v2526 = vmul.f32 %v2465, %v2430
      %v2527 = vmul.f32 %v2470, %v2431
      %v2528 = vmul.f32 %v2475, %v2432
      %v2529 = vmul.f32 %v2480, %v2433
      %v2530 = vmul.f32 %v2485, %v2434
      %v2531 = vmul.f32 %v2490, %v2435
      %v2532 = vmul.f32 %v2495, %v2436
      %v2533 = vmul.f32 %v2500, %v2437
      %v2534 = vmul.f32 %v2505, %v2438
      %v2535 = vmul.f32 %v2510, %v2439
      %v2536 = vmul.f32 %v2515, %v2440
      %v2537 = vmul.f32 %v2520, %v2441
      %v2538 = vpack.c.bf16 %v2300, %v2298
      %v2539 = vpack.c.bf16 %v2304, %v2302
      %v2540 = vpack.c.bf16 %v2308, %v2306
      %v2541 = vpack.c.bf16 %v2312, %v2310
      %v2542 = vpack.c.bf16 %v2316, %v2314
      %v2543 = vpack.c.bf16 %v2320, %v2318
      %v2544 = vpack.c.bf16 %v2324, %v2322
      %v2545 = vpack.c.bf16 %v2328, %v2326
      %2546 = vrot.lane.b32.xlu0 %v1847, 120
      %v2547 = vpop.permute.xlu0 %2546
      %2548 = vrot.lane.b32.xlu0 %v1848, 120
      %v2549 = vpop.permute.xlu0 %2548
      %2550 = vrot.lane.b32.xlu0 %v1849, 120
      %v2551 = vpop.permute.xlu0 %2550
      %2552 = vrot.lane.b32.xlu0 %v1850, 120
      %v2553 = vpop.permute.xlu0 %2552
      %2554 = vrot.lane.b32.xlu0 %v1851, 120
      %v2555 = vpop.permute.xlu0 %2554
      %2556 = vrot.lane.b32.xlu0 %v1852, 120
      %v2557 = vpop.permute.xlu0 %2556
      %2558 = vrot.lane.b32.xlu0 %v1853, 120
      %v2559 = vpop.permute.xlu0 %2558
      %2560 = vrot.lane.b32.xlu0 %v1854, 120
      %v2561 = vpop.permute.xlu0 %2560
      %2570 = vmatpush.bf16.msra.mxu0 %v2561
      %2571 = vmatpush.bf16.msra.mxu0 %v2559
      %2572 = vmatpush.bf16.msra.mxu0 %v2557
      %2573 = vmatpush.bf16.msra.mxu0 %v2555
      %2574 = vmatpush.bf16.msra.mxu0 %v2553
      %2575 = vmatpush.bf16.msra.mxu0 %v2551
      %2576 = vmatpush.bf16.msra.mxu0 %v2549
      %2577 = vmatpush.bf16.msra.mxu0 %v2547
      %2578 = vmatmul.bf16.gmra.mxu0 %v2538
      %v2579 = vpop.f32.mrf.mxu0
      %v2580 = vadd.f32 0.0, %v2579
      %v2581 = vpop.f32.mrf.mxu0
      %v2582 = vadd.f32 0.0, %v2581
      %2583 = vmatmul.bf16.gmra.mxu0 %v2539
      %v2584 = vpop.f32.mrf.mxu0
      %v2585 = vadd.f32 0.0, %v2584
      %v2586 = vpop.f32.mrf.mxu0
      %v2587 = vadd.f32 0.0, %v2586
      %2588 = vmatmul.bf16.gmra.mxu0 %v2540
      %v2589 = vpop.f32.mrf.mxu0
      %v2590 = vadd.f32 0.0, %v2589
      %v2591 = vpop.f32.mrf.mxu0
      %v2592 = vadd.f32 0.0, %v2591
      %2593 = vmatmul.bf16.gmra.mxu0 %v2541
      %v2594 = vpop.f32.mrf.mxu0
      %v2595 = vadd.f32 0.0, %v2594
      %v2596 = vpop.f32.mrf.mxu0
      %v2597 = vadd.f32 0.0, %v2596
      %2598 = vmatmul.bf16.gmra.mxu0 %v2542
      %v2599 = vpop.f32.mrf.mxu0
      %v2600 = vadd.f32 0.0, %v2599
      %v2601 = vpop.f32.mrf.mxu0
      %v2602 = vadd.f32 0.0, %v2601
      %2603 = vmatmul.bf16.gmra.mxu0 %v2543
      %v2604 = vpop.f32.mrf.mxu0
      %v2605 = vadd.f32 0.0, %v2604
      %v2606 = vpop.f32.mrf.mxu0
      %v2607 = vadd.f32 0.0, %v2606
      %2608 = vmatmul.bf16.gmra.mxu0 %v2544
      %v2609 = vpop.f32.mrf.mxu0
      %v2610 = vadd.f32 0.0, %v2609
      %v2611 = vpop.f32.mrf.mxu0
      %v2612 = vadd.f32 0.0, %v2611
      %2613 = vmatmul.bf16.gmra.mxu0 %v2545
      %v2614 = vpop.f32.mrf.mxu0
      %v2615 = vadd.f32 0.0, %v2614
      %v2616 = vpop.f32.mrf.mxu0
      %v2617 = vadd.f32 0.0, %v2616
      %2618 = vdwg.mxu0
      %2635 = vrot.lane.b32.xlu0 %v2580, 8
      %v2636 = vpop.permute.xlu0 %2635
      %2637 = vrot.lane.b32.xlu0 %v2582, 8
      %v2638 = vpop.permute.xlu0 %2637
      %2639 = vrot.lane.b32.xlu0 %v2585, 8
      %v2640 = vpop.permute.xlu0 %2639
      %2641 = vrot.lane.b32.xlu0 %v2587, 8
      %v2642 = vpop.permute.xlu0 %2641
      %2643 = vrot.lane.b32.xlu0 %v2590, 8
      %v2644 = vpop.permute.xlu0 %2643
      %2645 = vrot.lane.b32.xlu0 %v2592, 8
      %v2646 = vpop.permute.xlu0 %2645
      %2647 = vrot.lane.b32.xlu0 %v2595, 8
      %v2648 = vpop.permute.xlu0 %2647
      %2649 = vrot.lane.b32.xlu0 %v2597, 8
      %v2650 = vpop.permute.xlu0 %2649
      %2651 = vrot.lane.b32.xlu0 %v2600, 8
      %v2652 = vpop.permute.xlu0 %2651
      %2653 = vrot.lane.b32.xlu0 %v2602, 8
      %v2654 = vpop.permute.xlu0 %2653
      %2655 = vrot.lane.b32.xlu0 %v2605, 8
      %v2656 = vpop.permute.xlu0 %2655
      %2657 = vrot.lane.b32.xlu0 %v2607, 8
      %v2658 = vpop.permute.xlu0 %2657
      %2659 = vrot.lane.b32.xlu0 %v2610, 8
      %v2660 = vpop.permute.xlu0 %2659
      %2661 = vrot.lane.b32.xlu0 %v2612, 8
      %v2662 = vpop.permute.xlu0 %2661
      %2663 = vrot.lane.b32.xlu0 %v2615, 8
      %v2664 = vpop.permute.xlu0 %2663
      %2665 = vrot.lane.b32.xlu0 %v2617, 8
      %v2666 = vpop.permute.xlu0 %2665
      %v2683 = vadd.f32 %v2522, %v2636
      %v2684 = vadd.f32 %v2523, %v2638
      %v2685 = vadd.f32 %v2524, %v2640
      %v2686 = vadd.f32 %v2525, %v2642
      %v2687 = vadd.f32 %v2526, %v2644
      %v2688 = vadd.f32 %v2527, %v2646
      %v2689 = vadd.f32 %v2528, %v2648
      %v2690 = vadd.f32 %v2529, %v2650
      %v2691 = vadd.f32 %v2530, %v2652
      %v2692 = vadd.f32 %v2531, %v2654
      %v2693 = vadd.f32 %v2532, %v2656
      %v2694 = vadd.f32 %v2533, %v2658
      %v2695 = vadd.f32 %v2534, %v2660
      %v2696 = vadd.f32 %v2535, %v2662
      %v2697 = vadd.f32 %v2536, %v2664
      %v2698 = vadd.f32 %v2537, %v2666
      %vm2699 = vcmask 130112
      %2700 = vst.msk [vmem:[#allocation3] sm:$0xff] %vm2699, %v2683
      %2701 = vst.msk [vmem:[#allocation3 + $0x8] sm:$0xff] %vm2699, %v2684
      %2702 = vst.msk [vmem:[#allocation3 + $0x10] sm:$0xff] %vm2699, %v2685
      %2703 = vst.msk [vmem:[#allocation3 + $0x18] sm:$0xff] %vm2699, %v2686
      %2704 = vst.msk [vmem:[#allocation3 + $0x20] sm:$0xff] %vm2699, %v2687
      %2705 = vst.msk [vmem:[#allocation3 + $0x28] sm:$0xff] %vm2699, %v2688
      %2706 = vst.msk [vmem:[#allocation3 + $0x30] sm:$0xff] %vm2699, %v2689
      %2707 = vst.msk [vmem:[#allocation3 + $0x38] sm:$0xff] %vm2699, %v2690
      %2708 = vst.msk [vmem:[#allocation3 + $0x40] sm:$0xff] %vm2699, %v2691
      %2709 = vst.msk [vmem:[#allocation3 + $0x48] sm:$0xff] %vm2699, %v2692
      %2710 = vst.msk [vmem:[#allocation3 + $0x50] sm:$0xff] %vm2699, %v2693
      %2711 = vst.msk [vmem:[#allocation3 + $0x58] sm:$0xff] %vm2699, %v2694
      %2712 = vst.msk [vmem:[#allocation3 + $0x60] sm:$0xff] %vm2699, %v2695
      %2713 = vst.msk [vmem:[#allocation3 + $0x68] sm:$0xff] %vm2699, %v2696
      %2714 = vst.msk [vmem:[#allocation3 + $0x70] sm:$0xff] %vm2699, %v2697
      %2715 = vst.msk [vmem:[#allocation3 + $0x78] sm:$0xff] %vm2699, %v2698
      %2716 = vst.msk [vmem:[#allocation4] sm:$0xff] %vm2409, %v2137
      %2717 = vst.msk [vmem:[#allocation4 + $0x8] sm:$0xff] %vm2409, %v2138
      %2718 = vst.msk [vmem:[#allocation4 + $0x10] sm:$0xff] %vm2409, %v2139
      %2719 = vst.msk [vmem:[#allocation4 + $0x18] sm:$0xff] %vm2409, %v2140
      %2720 = vst.msk [vmem:[#allocation4 + $0x20] sm:$0xff] %vm2409, %v2141
      %2721 = vst.msk [vmem:[#allocation4 + $0x28] sm:$0xff] %vm2409, %v2142
      %2722 = vst.msk [vmem:[#allocation4 + $0x30] sm:$0xff] %vm2409, %v2143
      %2723 = vst.msk [vmem:[#allocation4 + $0x38] sm:$0xff] %vm2409, %v2144
      %2724 = vst.msk [vmem:[#allocation4 + $0x40] sm:$0xff] %vm2409, %v2145
      %2725 = vst.msk [vmem:[#allocation4 + $0x48] sm:$0xff] %vm2409, %v2146
      %2726 = vst.msk [vmem:[#allocation4 + $0x50] sm:$0xff] %vm2409, %v2147
      %2727 = vst.msk [vmem:[#allocation4 + $0x58] sm:$0xff] %vm2409, %v2148
      %2728 = vst.msk [vmem:[#allocation4 + $0x60] sm:$0xff] %vm2409, %v2149
      %2729 = vst.msk [vmem:[#allocation4 + $0x68] sm:$0xff] %vm2409, %v2150
      %2730 = vst.msk [vmem:[#allocation4 + $0x70] sm:$0xff] %vm2409, %v2151
      %2731 = vst.msk [vmem:[#allocation4 + $0x78] sm:$0xff] %vm2409, %v2152
      %2732 = vrot.lane.b32.xlu0 %v1212, 112
      %v2733 = vpop.permute.xlu0 %2732
      %2734 = vrot.lane.b32.xlu0 %v1213, 112
      %v2735 = vpop.permute.xlu0 %2734
      %2736 = vrot.lane.b32.xlu0 %v1214, 112
      %v2737 = vpop.permute.xlu0 %2736
      %2738 = vrot.lane.b32.xlu0 %v1215, 112
      %v2739 = vpop.permute.xlu0 %2738
      %2740 = vrot.lane.b32.xlu0 %v1216, 112
      %v2741 = vpop.permute.xlu0 %2740
      %2742 = vrot.lane.b32.xlu0 %v1217, 112
      %v2743 = vpop.permute.xlu0 %2742
      %2744 = vrot.lane.b32.xlu0 %v1218, 112
      %v2745 = vpop.permute.xlu0 %2744
      %2746 = vrot.lane.b32.xlu0 %v1219, 112
      %v2747 = vpop.permute.xlu0 %2746
      %2748 = vrot.lane.b32.xlu0 %v1252, 112
      %v2749 = vpop.permute.xlu0 %2748
      %2750 = vrot.lane.b32.xlu0 %v1253, 112
      %v2751 = vpop.permute.xlu0 %2750
      %2752 = vrot.lane.b32.xlu0 %v1254, 112
      %v2753 = vpop.permute.xlu0 %2752
      %2754 = vrot.lane.b32.xlu0 %v1255, 112
      %v2755 = vpop.permute.xlu0 %2754
      %2756 = vrot.lane.b32.xlu0 %v1256, 112
      %v2757 = vpop.permute.xlu0 %2756
      %2758 = vrot.lane.b32.xlu0 %v1257, 112
      %v2759 = vpop.permute.xlu0 %2758
      %2760 = vrot.lane.b32.xlu0 %v1258, 112
      %v2761 = vpop.permute.xlu0 %2760
      %2762 = vrot.lane.b32.xlu0 %v1259, 112
      %v2763 = vpop.permute.xlu0 %2762
      %v2765 = vsel %vm1260, %v2733, 0
      %v2768 = vsel %vm1260, %v2735, 0
      %v2771 = vsel %vm1260, %v2737, 0
      %v2774 = vsel %vm1260, %v2739, 0
      %v2777 = vsel %vm1260, %v2741, 0
      %v2780 = vsel %vm1260, %v2743, 0
      %v2783 = vsel %vm1260, %v2745, 0
      %v2786 = vsel %vm1260, %v2747, 0
      %v2789 = vsel %vm1260, %v2749, 0
      %v2792 = vsel %vm1260, %v2751, 0
      %v2795 = vsel %vm1260, %v2753, 0
      %v2798 = vsel %vm1260, %v2755, 0
      %v2801 = vsel %vm1260, %v2757, 0
      %v2804 = vsel %vm1260, %v2759, 0
      %v2807 = vsel %vm1260, %v2761, 0
      %v2810 = vsel %vm1260, %v2763, 0
      %2812 = vmatpush.bf16.xpose.msra.mxu0 %v2810
      %2813 = vmatpush.bf16.xpose.msra.mxu0 %v2807
      %2814 = vmatpush.bf16.xpose.msra.mxu0 %v2804
      %2815 = vmatpush.bf16.xpose.msra.mxu0 %v2801
      %2816 = vmatpush.bf16.xpose.msra.mxu0 %v2798
      %2817 = vmatpush.bf16.xpose.msra.mxu0 %v2795
      %2818 = vmatpush.bf16.xpose.msra.mxu0 %v2792
      %2819 = vmatpush.bf16.xpose.msra.mxu0 %v2789
      %2820 = vmatmul.bf16.gmra.mxu0 %v2765
      %v2821 = vpop.f32.mrf.mxu0
      %v2822 = vadd.f32 %v1132, %v2821
      %v2823 = vpop.f32.mrf.mxu0
      %v2824 = vadd.f32 %v1133, %v2823
      %2825 = vmatmul.bf16.gmra.mxu0 %v2768
      %v2826 = vpop.f32.mrf.mxu0
      %v2827 = vadd.f32 %v1134, %v2826
      %v2828 = vpop.f32.mrf.mxu0
      %v2829 = vadd.f32 %v1135, %v2828
      %2830 = vmatmul.bf16.gmra.mxu0 %v2771
      %v2831 = vpop.f32.mrf.mxu0
      %v2832 = vadd.f32 %v1136, %v2831
      %v2833 = vpop.f32.mrf.mxu0
      %v2834 = vadd.f32 %v1137, %v2833
      %2835 = vmatmul.bf16.gmra.mxu0 %v2774
      %v2836 = vpop.f32.mrf.mxu0
      %v2837 = vadd.f32 %v1138, %v2836
      %v2838 = vpop.f32.mrf.mxu0
      %v2839 = vadd.f32 %v1139, %v2838
      %2840 = vmatmul.bf16.gmra.mxu0 %v2777
      %v2841 = vpop.f32.mrf.mxu0
      %v2842 = vadd.f32 %v1140, %v2841
      %v2843 = vpop.f32.mrf.mxu0
      %v2844 = vadd.f32 %v1141, %v2843
      %2845 = vmatmul.bf16.gmra.mxu0 %v2780
      %v2846 = vpop.f32.mrf.mxu0
      %v2847 = vadd.f32 %v1142, %v2846
      %v2848 = vpop.f32.mrf.mxu0
      %v2849 = vadd.f32 %v1143, %v2848
      %2850 = vmatmul.bf16.gmra.mxu0 %v2783
      %v2851 = vpop.f32.mrf.mxu0
      %v2852 = vadd.f32 %v1144, %v2851
      %v2853 = vpop.f32.mrf.mxu0
      %v2854 = vadd.f32 %v1145, %v2853
      %2855 = vmatmul.bf16.gmra.mxu0 %v2786
      %v2856 = vpop.f32.mrf.mxu0
      %v2857 = vadd.f32 %v1146, %v2856
      %v2858 = vpop.f32.mrf.mxu0
      %v2859 = vadd.f32 %v1147, %v2858
      %2860 = vdwg.mxu0
      %v2861 = vld [vmem:[#allocation4] sm:$0xff]
      %v2862 = vld [vmem:[#allocation4 + $0x8] sm:$0xff]
      %v2863 = vld [vmem:[#allocation4 + $0x10] sm:$0xff]
      %v2864 = vld [vmem:[#allocation4 + $0x18] sm:$0xff]
      %v2865 = vld [vmem:[#allocation4 + $0x20] sm:$0xff]
      %v2866 = vld [vmem:[#allocation4 + $0x28] sm:$0xff]
      %v2867 = vld [vmem:[#allocation4 + $0x30] sm:$0xff]
      %v2868 = vld [vmem:[#allocation4 + $0x38] sm:$0xff]
      %v2869 = vld [vmem:[#allocation4 + $0x40] sm:$0xff]
      %v2870 = vld [vmem:[#allocation4 + $0x48] sm:$0xff]
      %v2871 = vld [vmem:[#allocation4 + $0x50] sm:$0xff]
      %v2872 = vld [vmem:[#allocation4 + $0x58] sm:$0xff]
      %v2873 = vld [vmem:[#allocation4 + $0x60] sm:$0xff]
      %v2874 = vld [vmem:[#allocation4 + $0x68] sm:$0xff]
      %v2875 = vld [vmem:[#allocation4 + $0x70] sm:$0xff]
      %v2876 = vld [vmem:[#allocation4 + $0x78] sm:$0xff]
      %2877 = vmax.xlane.f32.xlu0 %v2822
      %v2878 = vpop.xlane.xlu0 %2877
      %2879 = vmax.xlane.f32.xlu0 %v2824
      %v2880 = vpop.xlane.xlu0 %2879
      %2881 = vmax.xlane.f32.xlu0 %v2827
      %v2882 = vpop.xlane.xlu0 %2881
      %2883 = vmax.xlane.f32.xlu0 %v2829
      %v2884 = vpop.xlane.xlu0 %2883
      %2885 = vmax.xlane.f32.xlu0 %v2832
      %v2886 = vpop.xlane.xlu0 %2885
      %2887 = vmax.xlane.f32.xlu0 %v2834
      %v2888 = vpop.xlane.xlu0 %2887
      %2889 = vmax.xlane.f32.xlu0 %v2837
      %v2890 = vpop.xlane.xlu0 %2889
      %2891 = vmax.xlane.f32.xlu0 %v2839
      %v2892 = vpop.xlane.xlu0 %2891
      %2893 = vmax.xlane.f32.xlu0 %v2842
      %v2894 = vpop.xlane.xlu0 %2893
      %2895 = vmax.xlane.f32.xlu0 %v2844
      %v2896 = vpop.xlane.xlu0 %2895
      %2897 = vmax.xlane.f32.xlu0 %v2847
      %v2898 = vpop.xlane.xlu0 %2897
      %2899 = vmax.xlane.f32.xlu0 %v2849
      %v2900 = vpop.xlane.xlu0 %2899
      %2901 = vmax.xlane.f32.xlu0 %v2852
      %v2902 = vpop.xlane.xlu0 %2901
      %2903 = vmax.xlane.f32.xlu0 %v2854
      %v2904 = vpop.xlane.xlu0 %2903
      %2905 = vmax.xlane.f32.xlu0 %v2857
      %v2906 = vpop.xlane.xlu0 %2905
      %2907 = vmax.xlane.f32.xlu0 %v2859
      %v2908 = vpop.xlane.xlu0 %2907
      %v2909 = vmax.f32 %v2861, %v2878
      %v2910 = vmax.f32 %v2862, %v2880
      %v2911 = vmax.f32 %v2863, %v2882
      %v2912 = vmax.f32 %v2864, %v2884
      %v2913 = vmax.f32 %v2865, %v2886
      %v2914 = vmax.f32 %v2866, %v2888
      %v2915 = vmax.f32 %v2867, %v2890
      %v2916 = vmax.f32 %v2868, %v2892
      %v2917 = vmax.f32 %v2869, %v2894
      %v2918 = vmax.f32 %v2870, %v2896
      %v2919 = vmax.f32 %v2871, %v2898
      %v2920 = vmax.f32 %v2872, %v2900
      %v2921 = vmax.f32 %v2873, %v2902
      %v2922 = vmax.f32 %v2874, %v2904
      %v2923 = vmax.f32 %v2875, %v2906
      %v2924 = vmax.f32 %v2876, %v2908
      %v2925 = vsub.f32 %v2861, %v2909
      %v2926 = vsub.f32 %v2862, %v2910
      %v2927 = vsub.f32 %v2863, %v2911
      %v2928 = vsub.f32 %v2864, %v2912
      %v2929 = vsub.f32 %v2865, %v2913
      %v2930 = vsub.f32 %v2866, %v2914
      %v2931 = vsub.f32 %v2867, %v2915
      %v2932 = vsub.f32 %v2868, %v2916
      %v2933 = vsub.f32 %v2869, %v2917
      %v2934 = vsub.f32 %v2870, %v2918
      %v2935 = vsub.f32 %v2871, %v2919
      %v2936 = vsub.f32 %v2872, %v2920
      %v2937 = vsub.f32 %v2873, %v2921
      %v2938 = vsub.f32 %v2874, %v2922
      %v2939 = vsub.f32 %v2875, %v2923
      %v2940 = vsub.f32 %v2876, %v2924
      %v2941 = vmul.f32 %v2925, 1.442695
      %v2942 = vpow.pop %v2941
      %v2943 = vmul.f32 %v2926, 1.442695
      %v2944 = vpow.pop %v2943
      %v2945 = vmul.f32 %v2927, 1.442695
      %v2946 = vpow.pop %v2945
      %v2947 = vmul.f32 %v2928, 1.442695
      %v2948 = vpow.pop %v2947
      %v2949 = vmul.f32 %v2929, 1.442695
      %v2950 = vpow.pop %v2949
      %v2951 = vmul.f32 %v2930, 1.442695
      %v2952 = vpow.pop %v2951
      %v2953 = vmul.f32 %v2931, 1.442695
      %v2954 = vpow.pop %v2953
      %v2955 = vmul.f32 %v2932, 1.442695
      %v2956 = vpow.pop %v2955
      %v2957 = vmul.f32 %v2933, 1.442695
      %v2958 = vpow.pop %v2957
      %v2959 = vmul.f32 %v2934, 1.442695
      %v2960 = vpow.pop %v2959
      %v2961 = vmul.f32 %v2935, 1.442695
      %v2962 = vpow.pop %v2961
      %v2963 = vmul.f32 %v2936, 1.442695
      %v2964 = vpow.pop %v2963
      %v2965 = vmul.f32 %v2937, 1.442695
      %v2966 = vpow.pop %v2965
      %v2967 = vmul.f32 %v2938, 1.442695
      %v2968 = vpow.pop %v2967
      %v2969 = vmul.f32 %v2939, 1.442695
      %v2970 = vpow.pop %v2969
      %v2971 = vmul.f32 %v2940, 1.442695
      %v2972 = vpow.pop %v2971
      %2974 = vset.pattern.permute.xlu0 2
      %2975 = vperm.xlu0 %2974, %v2909
      %v2976 = vpop.permute.xlu0 %2975
      %2979 = vset.pattern.permute.xlu0 2
      %2980 = vperm.xlu0 %2979, %v2910
      %v2981 = vpop.permute.xlu0 %2980
      %2984 = vset.pattern.permute.xlu0 2
      %2985 = vperm.xlu0 %2984, %v2911
      %v2986 = vpop.permute.xlu0 %2985
      %2989 = vset.pattern.permute.xlu0 2
      %2990 = vperm.xlu0 %2989, %v2912
      %v2991 = vpop.permute.xlu0 %2990
      %2994 = vset.pattern.permute.xlu0 2
      %2995 = vperm.xlu0 %2994, %v2913
      %v2996 = vpop.permute.xlu0 %2995
      %2999 = vset.pattern.permute.xlu0 2
      %3000 = vperm.xlu0 %2999, %v2914
      %v3001 = vpop.permute.xlu0 %3000
      %3004 = vset.pattern.permute.xlu0 2
      %3005 = vperm.xlu0 %3004, %v2915
      %v3006 = vpop.permute.xlu0 %3005
      %3009 = vset.pattern.permute.xlu0 2
      %3010 = vperm.xlu0 %3009, %v2916
      %v3011 = vpop.permute.xlu0 %3010
      %3014 = vset.pattern.permute.xlu0 2
      %3015 = vperm.xlu0 %3014, %v2917
      %v3016 = vpop.permute.xlu0 %3015
      %3019 = vset.pattern.permute.xlu0 2
      %3020 = vperm.xlu0 %3019, %v2918
      %v3021 = vpop.permute.xlu0 %3020
      %3024 = vset.pattern.permute.xlu0 2
      %3025 = vperm.xlu0 %3024, %v2919
      %v3026 = vpop.permute.xlu0 %3025
      %3029 = vset.pattern.permute.xlu0 2
      %3030 = vperm.xlu0 %3029, %v2920
      %v3031 = vpop.permute.xlu0 %3030
      %3034 = vset.pattern.permute.xlu0 2
      %3035 = vperm.xlu0 %3034, %v2921
      %v3036 = vpop.permute.xlu0 %3035
      %3039 = vset.pattern.permute.xlu0 2
      %3040 = vperm.xlu0 %3039, %v2922
      %v3041 = vpop.permute.xlu0 %3040
      %3044 = vset.pattern.permute.xlu0 2
      %3045 = vperm.xlu0 %3044, %v2923
      %v3046 = vpop.permute.xlu0 %3045
      %3049 = vset.pattern.permute.xlu0 2
      %3050 = vperm.xlu0 %3049, %v2924
      %v3051 = vpop.permute.xlu0 %3050
      %v3053 = vsub.f32 %v2822, %v2976
      %v3054 = vsub.f32 %v2824, %v2981
      %v3055 = vsub.f32 %v2827, %v2986
      %v3056 = vsub.f32 %v2829, %v2991
      %v3057 = vsub.f32 %v2832, %v2996
      %v3058 = vsub.f32 %v2834, %v3001
      %v3059 = vsub.f32 %v2837, %v3006
      %v3060 = vsub.f32 %v2839, %v3011
      %v3061 = vsub.f32 %v2842, %v3016
      %v3062 = vsub.f32 %v2844, %v3021
      %v3063 = vsub.f32 %v2847, %v3026
      %v3064 = vsub.f32 %v2849, %v3031
      %v3065 = vsub.f32 %v2852, %v3036
      %v3066 = vsub.f32 %v2854, %v3041
      %v3067 = vsub.f32 %v2857, %v3046
      %v3068 = vsub.f32 %v2859, %v3051
      %v3069 = vmul.f32 %v3053, 1.442695
      %v3070 = vpow.pop %v3069
      %v3071 = vmul.f32 %v3054, 1.442695
      %v3072 = vpow.pop %v3071
      %v3073 = vmul.f32 %v3055, 1.442695
      %v3074 = vpow.pop %v3073
      %v3075 = vmul.f32 %v3056, 1.442695
      %v3076 = vpow.pop %v3075
      %v3077 = vmul.f32 %v3057, 1.442695
      %v3078 = vpow.pop %v3077
      %v3079 = vmul.f32 %v3058, 1.442695
      %v3080 = vpow.pop %v3079
      %v3081 = vmul.f32 %v3059, 1.442695
      %v3082 = vpow.pop %v3081
      %v3083 = vmul.f32 %v3060, 1.442695
      %v3084 = vpow.pop %v3083
      %v3085 = vmul.f32 %v3061, 1.442695
      %v3086 = vpow.pop %v3085
      %v3087 = vmul.f32 %v3062, 1.442695
      %v3088 = vpow.pop %v3087
      %v3089 = vmul.f32 %v3063, 1.442695
      %v3090 = vpow.pop %v3089
      %v3091 = vmul.f32 %v3064, 1.442695
      %v3092 = vpow.pop %v3091
      %v3093 = vmul.f32 %v3065, 1.442695
      %v3094 = vpow.pop %v3093
      %v3095 = vmul.f32 %v3066, 1.442695
      %v3096 = vpow.pop %v3095
      %v3097 = vmul.f32 %v3067, 1.442695
      %v3098 = vpow.pop %v3097
      %v3099 = vmul.f32 %v3068, 1.442695
      %v3100 = vpow.pop %v3099
      %v3101 = vld [vmem:[#allocation5] sm:$0xff]
      %v3102 = vld [vmem:[#allocation5 + $0x8] sm:$0xff]
      %v3103 = vld [vmem:[#allocation5 + $0x10] sm:$0xff]
      %v3104 = vld [vmem:[#allocation5 + $0x18] sm:$0xff]
      %v3105 = vld [vmem:[#allocation5 + $0x20] sm:$0xff]
      %v3106 = vld [vmem:[#allocation5 + $0x28] sm:$0xff]
      %v3107 = vld [vmem:[#allocation5 + $0x30] sm:$0xff]
      %v3108 = vld [vmem:[#allocation5 + $0x38] sm:$0xff]
      %v3109 = vld [vmem:[#allocation5 + $0x40] sm:$0xff]
      %v3110 = vld [vmem:[#allocation5 + $0x48] sm:$0xff]
      %v3111 = vld [vmem:[#allocation5 + $0x50] sm:$0xff]
      %v3112 = vld [vmem:[#allocation5 + $0x58] sm:$0xff]
      %v3113 = vld [vmem:[#allocation5 + $0x60] sm:$0xff]
      %v3114 = vld [vmem:[#allocation5 + $0x68] sm:$0xff]
      %v3115 = vld [vmem:[#allocation5 + $0x70] sm:$0xff]
      %v3116 = vld [vmem:[#allocation5 + $0x78] sm:$0xff]
      %v3117 = vmul.f32 %v2942, %v3101
      %v3118 = vmul.f32 %v2944, %v3102
      %v3119 = vmul.f32 %v2946, %v3103
      %v3120 = vmul.f32 %v2948, %v3104
      %v3121 = vmul.f32 %v2950, %v3105
      %v3122 = vmul.f32 %v2952, %v3106
      %v3123 = vmul.f32 %v2954, %v3107
      %v3124 = vmul.f32 %v2956, %v3108
      %v3125 = vmul.f32 %v2958, %v3109
      %v3126 = vmul.f32 %v2960, %v3110
      %v3127 = vmul.f32 %v2962, %v3111
      %v3128 = vmul.f32 %v2964, %v3112
      %v3129 = vmul.f32 %v2966, %v3113
      %v3130 = vmul.f32 %v2968, %v3114
      %v3131 = vmul.f32 %v2970, %v3115
      %v3132 = vmul.f32 %v2972, %v3116
      %3133 = vadd.xlane.f32.xlu0 %v3070
      %v3134 = vpop.xlane.xlu0 %3133
      %3135 = vadd.xlane.f32.xlu0 %v3072
      %v3136 = vpop.xlane.xlu0 %3135
      %3137 = vadd.xlane.f32.xlu0 %v3074
      %v3138 = vpop.xlane.xlu0 %3137
      %3139 = vadd.xlane.f32.xlu0 %v3076
      %v3140 = vpop.xlane.xlu0 %3139
      %3141 = vadd.xlane.f32.xlu0 %v3078
      %v3142 = vpop.xlane.xlu0 %3141
      %3143 = vadd.xlane.f32.xlu0 %v3080
      %v3144 = vpop.xlane.xlu0 %3143
      %3145 = vadd.xlane.f32.xlu0 %v3082
      %v3146 = vpop.xlane.xlu0 %3145
      %3147 = vadd.xlane.f32.xlu0 %v3084
      %v3148 = vpop.xlane.xlu0 %3147
      %3149 = vadd.xlane.f32.xlu0 %v3086
      %v3150 = vpop.xlane.xlu0 %3149
      %3151 = vadd.xlane.f32.xlu0 %v3088
      %v3152 = vpop.xlane.xlu0 %3151
      %3153 = vadd.xlane.f32.xlu0 %v3090
      %v3154 = vpop.xlane.xlu0 %3153
      %3155 = vadd.xlane.f32.xlu0 %v3092
      %v3156 = vpop.xlane.xlu0 %3155
      %3157 = vadd.xlane.f32.xlu0 %v3094
      %v3158 = vpop.xlane.xlu0 %3157
      %3159 = vadd.xlane.f32.xlu0 %v3096
      %v3160 = vpop.xlane.xlu0 %3159
      %3161 = vadd.xlane.f32.xlu0 %v3098
      %v3162 = vpop.xlane.xlu0 %3161
      %3163 = vadd.xlane.f32.xlu0 %v3100
      %v3164 = vpop.xlane.xlu0 %3163
      %v3165 = vadd.f32 %v3117, %v3134
      %v3166 = vadd.f32 %v3118, %v3136
      %v3167 = vadd.f32 %v3119, %v3138
      %v3168 = vadd.f32 %v3120, %v3140
      %v3169 = vadd.f32 %v3121, %v3142
      %v3170 = vadd.f32 %v3122, %v3144
      %v3171 = vadd.f32 %v3123, %v3146
      %v3172 = vadd.f32 %v3124, %v3148
      %v3173 = vadd.f32 %v3125, %v3150
      %v3174 = vadd.f32 %v3126, %v3152
      %v3175 = vadd.f32 %v3127, %v3154
      %v3176 = vadd.f32 %v3128, %v3156
      %v3177 = vadd.f32 %v3129, %v3158
      %v3178 = vadd.f32 %v3130, %v3160
      %v3179 = vadd.f32 %v3131, %v3162
      %v3180 = vadd.f32 %v3132, %v3164
      %vm3181 = vcmask 23568
      %3182 = vst.msk [vmem:[#allocation5] sm:$0xff] %vm3181, %v3165
      %3183 = vst.msk [vmem:[#allocation5 + $0x8] sm:$0xff] %vm3181, %v3166
      %3184 = vst.msk [vmem:[#allocation5 + $0x10] sm:$0xff] %vm3181, %v3167
      %3185 = vst.msk [vmem:[#allocation5 + $0x18] sm:$0xff] %vm3181, %v3168
      %3186 = vst.msk [vmem:[#allocation5 + $0x20] sm:$0xff] %vm3181, %v3169
      %3187 = vst.msk [vmem:[#allocation5 + $0x28] sm:$0xff] %vm3181, %v3170
      %3188 = vst.msk [vmem:[#allocation5 + $0x30] sm:$0xff] %vm3181, %v3171
      %3189 = vst.msk [vmem:[#allocation5 + $0x38] sm:$0xff] %vm3181, %v3172
      %3190 = vst.msk [vmem:[#allocation5 + $0x40] sm:$0xff] %vm3181, %v3173
      %3191 = vst.msk [vmem:[#allocation5 + $0x48] sm:$0xff] %vm3181, %v3174
      %3192 = vst.msk [vmem:[#allocation5 + $0x50] sm:$0xff] %vm3181, %v3175
      %3193 = vst.msk [vmem:[#allocation5 + $0x58] sm:$0xff] %vm3181, %v3176
      %3194 = vst.msk [vmem:[#allocation5 + $0x60] sm:$0xff] %vm3181, %v3177
      %3195 = vst.msk [vmem:[#allocation5 + $0x68] sm:$0xff] %vm3181, %v3178
      %3196 = vst.msk [vmem:[#allocation5 + $0x70] sm:$0xff] %vm3181, %v3179
      %3197 = vst.msk [vmem:[#allocation5 + $0x78] sm:$0xff] %vm3181, %v3180
      %v3198 = vld [vmem:[#allocation3] sm:$0xff]
      %v3199 = vld [vmem:[#allocation3 + $0x8] sm:$0xff]
      %v3200 = vld [vmem:[#allocation3 + $0x10] sm:$0xff]
      %v3201 = vld [vmem:[#allocation3 + $0x18] sm:$0xff]
      %v3202 = vld [vmem:[#allocation3 + $0x20] sm:$0xff]
      %v3203 = vld [vmem:[#allocation3 + $0x28] sm:$0xff]
      %v3204 = vld [vmem:[#allocation3 + $0x30] sm:$0xff]
      %v3205 = vld [vmem:[#allocation3 + $0x38] sm:$0xff]
      %v3206 = vld [vmem:[#allocation3 + $0x40] sm:$0xff]
      %v3207 = vld [vmem:[#allocation3 + $0x48] sm:$0xff]
      %v3208 = vld [vmem:[#allocation3 + $0x50] sm:$0xff]
      %v3209 = vld [vmem:[#allocation3 + $0x58] sm:$0xff]
      %v3210 = vld [vmem:[#allocation3 + $0x60] sm:$0xff]
      %v3211 = vld [vmem:[#allocation3 + $0x68] sm:$0xff]
      %v3212 = vld [vmem:[#allocation3 + $0x70] sm:$0xff]
      %v3213 = vld [vmem:[#allocation3 + $0x78] sm:$0xff]
      %3215 = vset.pattern.permute.xlu0 2
      %3216 = vperm.xlu0 %3215, %v2942
      %v3217 = vpop.permute.xlu0 %3216
      %3220 = vset.pattern.permute.xlu0 2
      %3221 = vperm.xlu0 %3220, %v2944
      %v3222 = vpop.permute.xlu0 %3221
      %3225 = vset.pattern.permute.xlu0 2
      %3226 = vperm.xlu0 %3225, %v2946
      %v3227 = vpop.permute.xlu0 %3226
      %3230 = vset.pattern.permute.xlu0 2
      %3231 = vperm.xlu0 %3230, %v2948
      %v3232 = vpop.permute.xlu0 %3231
      %3235 = vset.pattern.permute.xlu0 2
      %3236 = vperm.xlu0 %3235, %v2950
      %v3237 = vpop.permute.xlu0 %3236
      %3240 = vset.pattern.permute.xlu0 2
      %3241 = vperm.xlu0 %3240, %v2952
      %v3242 = vpop.permute.xlu0 %3241
      %3245 = vset.pattern.permute.xlu0 2
      %3246 = vperm.xlu0 %3245, %v2954
      %v3247 = vpop.permute.xlu0 %3246
      %3250 = vset.pattern.permute.xlu0 2
      %3251 = vperm.xlu0 %3250, %v2956
      %v3252 = vpop.permute.xlu0 %3251
      %3255 = vset.pattern.permute.xlu0 2
      %3256 = vperm.xlu0 %3255, %v2958
      %v3257 = vpop.permute.xlu0 %3256
      %3260 = vset.pattern.permute.xlu0 2
      %3261 = vperm.xlu0 %3260, %v2960
      %v3262 = vpop.permute.xlu0 %3261
      %3265 = vset.pattern.permute.xlu0 2
      %3266 = vperm.xlu0 %3265, %v2962
      %v3267 = vpop.permute.xlu0 %3266
      %3270 = vset.pattern.permute.xlu0 2
      %3271 = vperm.xlu0 %3270, %v2964
      %v3272 = vpop.permute.xlu0 %3271
      %3275 = vset.pattern.permute.xlu0 2
      %3276 = vperm.xlu0 %3275, %v2966
      %v3277 = vpop.permute.xlu0 %3276
      %3280 = vset.pattern.permute.xlu0 2
      %3281 = vperm.xlu0 %3280, %v2968
      %v3282 = vpop.permute.xlu0 %3281
      %3285 = vset.pattern.permute.xlu0 2
      %3286 = vperm.xlu0 %3285, %v2970
      %v3287 = vpop.permute.xlu0 %3286
      %3290 = vset.pattern.permute.xlu0 2
      %3291 = vperm.xlu0 %3290, %v2972
      %v3292 = vpop.permute.xlu0 %3291
      %v3294 = vmul.f32 %v3217, %v3198
      %v3295 = vmul.f32 %v3222, %v3199
      %v3296 = vmul.f32 %v3227, %v3200
      %v3297 = vmul.f32 %v3232, %v3201
      %v3298 = vmul.f32 %v3237, %v3202
      %v3299 = vmul.f32 %v3242, %v3203
      %v3300 = vmul.f32 %v3247, %v3204
      %v3301 = vmul.f32 %v3252, %v3205
      %v3302 = vmul.f32 %v3257, %v3206
      %v3303 = vmul.f32 %v3262, %v3207
      %v3304 = vmul.f32 %v3267, %v3208
      %v3305 = vmul.f32 %v3272, %v3209
      %v3306 = vmul.f32 %v3277, %v3210
      %v3307 = vmul.f32 %v3282, %v3211
      %v3308 = vmul.f32 %v3287, %v3212
      %v3309 = vmul.f32 %v3292, %v3213
      %v3310 = vpack.c.bf16 %v3072, %v3070
      %v3311 = vpack.c.bf16 %v3076, %v3074
      %v3312 = vpack.c.bf16 %v3080, %v3078
      %v3313 = vpack.c.bf16 %v3084, %v3082
      %v3314 = vpack.c.bf16 %v3088, %v3086
      %v3315 = vpack.c.bf16 %v3092, %v3090
      %v3316 = vpack.c.bf16 %v3096, %v3094
      %v3317 = vpack.c.bf16 %v3100, %v3098
      %3318 = vrot.lane.b32.xlu0 %v1847, 112
      %v3319 = vpop.permute.xlu0 %3318
      %3320 = vrot.lane.b32.xlu0 %v1848, 112
      %v3321 = vpop.permute.xlu0 %3320
      %3322 = vrot.lane.b32.xlu0 %v1849, 112
      %v3323 = vpop.permute.xlu0 %3322
      %3324 = vrot.lane.b32.xlu0 %v1850, 112
      %v3325 = vpop.permute.xlu0 %3324
      %3326 = vrot.lane.b32.xlu0 %v1851, 112
      %v3327 = vpop.permute.xlu0 %3326
      %3328 = vrot.lane.b32.xlu0 %v1852, 112
      %v3329 = vpop.permute.xlu0 %3328
      %3330 = vrot.lane.b32.xlu0 %v1853, 112
      %v3331 = vpop.permute.xlu0 %3330
      %3332 = vrot.lane.b32.xlu0 %v1854, 112
      %v3333 = vpop.permute.xlu0 %3332
      %3342 = vmatpush.bf16.msra.mxu0 %v3333
      %3343 = vmatpush.bf16.msra.mxu0 %v3331
      %3344 = vmatpush.bf16.msra.mxu0 %v3329
      %3345 = vmatpush.bf16.msra.mxu0 %v3327
      %3346 = vmatpush.bf16.msra.mxu0 %v3325
      %3347 = vmatpush.bf16.msra.mxu0 %v3323
      %3348 = vmatpush.bf16.msra.mxu0 %v3321
      %3349 = vmatpush.bf16.msra.mxu0 %v3319
      %3350 = vmatmul.bf16.gmra.mxu0 %v3310
      %v3351 = vpop.f32.mrf.mxu0
      %v3352 = vadd.f32 0.0, %v3351
      %v3353 = vpop.f32.mrf.mxu0
      %v3354 = vadd.f32 0.0, %v3353
      %3355 = vmatmul.bf16.gmra.mxu0 %v3311
      %v3356 = vpop.f32.mrf.mxu0
      %v3357 = vadd.f32 0.0, %v3356
      %v3358 = vpop.f32.mrf.mxu0
      %v3359 = vadd.f32 0.0, %v3358
      %3360 = vmatmul.bf16.gmra.mxu0 %v3312
      %v3361 = vpop.f32.mrf.mxu0
      %v3362 = vadd.f32 0.0, %v3361
      %v3363 = vpop.f32.mrf.mxu0
      %v3364 = vadd.f32 0.0, %v3363
      %3365 = vmatmul.bf16.gmra.mxu0 %v3313
      %v3366 = vpop.f32.mrf.mxu0
      %v3367 = vadd.f32 0.0, %v3366
      %v3368 = vpop.f32.mrf.mxu0
      %v3369 = vadd.f32 0.0, %v3368
      %3370 = vmatmul.bf16.gmra.mxu0 %v3314
      %v3371 = vpop.f32.mrf.mxu0
      %v3372 = vadd.f32 0.0, %v3371
      %v3373 = vpop.f32.mrf.mxu0
      %v3374 = vadd.f32 0.0, %v3373
      %3375 = vmatmul.bf16.gmra.mxu0 %v3315
      %v3376 = vpop.f32.mrf.mxu0
      %v3377 = vadd.f32 0.0, %v3376
      %v3378 = vpop.f32.mrf.mxu0
      %v3379 = vadd.f32 0.0, %v3378
      %3380 = vmatmul.bf16.gmra.mxu0 %v3316
      %v3381 = vpop.f32.mrf.mxu0
      %v3382 = vadd.f32 0.0, %v3381
      %v3383 = vpop.f32.mrf.mxu0
      %v3384 = vadd.f32 0.0, %v3383
      %3385 = vmatmul.bf16.gmra.mxu0 %v3317
      %v3386 = vpop.f32.mrf.mxu0
      %v3387 = vadd.f32 0.0, %v3386
      %v3388 = vpop.f32.mrf.mxu0
      %v3389 = vadd.f32 0.0, %v3388
      %3390 = vdwg.mxu0
      %3407 = vrot.lane.b32.xlu0 %v3352, 16
      %v3408 = vpop.permute.xlu0 %3407
      %3409 = vrot.lane.b32.xlu0 %v3354, 16
      %v3410 = vpop.permute.xlu0 %3409
      %3411 = vrot.lane.b32.xlu0 %v3357, 16
      %v3412 = vpop.permute.xlu0 %3411
      %3413 = vrot.lane.b32.xlu0 %v3359, 16
      %v3414 = vpop.permute.xlu0 %3413
      %3415 = vrot.lane.b32.xlu0 %v3362, 16
      %v3416 = vpop.permute.xlu0 %3415
      %3417 = vrot.lane.b32.xlu0 %v3364, 16
      %v3418 = vpop.permute.xlu0 %3417
      %3419 = vrot.lane.b32.xlu0 %v3367, 16
      %v3420 = vpop.permute.xlu0 %3419
      %3421 = vrot.lane.b32.xlu0 %v3369, 16
      %v3422 = vpop.permute.xlu0 %3421
      %3423 = vrot.lane.b32.xlu0 %v3372, 16
      %v3424 = vpop.permute.xlu0 %3423
      %3425 = vrot.lane.b32.xlu0 %v3374, 16
      %v3426 = vpop.permute.xlu0 %3425
      %3427 = vrot.lane.b32.xlu0 %v3377, 16
      %v3428 = vpop.permute.xlu0 %3427
      %3429 = vrot.lane.b32.xlu0 %v3379, 16
      %v3430 = vpop.permute.xlu0 %3429
      %3431 = vrot.lane.b32.xlu0 %v3382, 16
      %v3432 = vpop.permute.xlu0 %3431
      %3433 = vrot.lane.b32.xlu0 %v3384, 16
      %v3434 = vpop.permute.xlu0 %3433
      %3435 = vrot.lane.b32.xlu0 %v3387, 16
      %v3436 = vpop.permute.xlu0 %3435
      %3437 = vrot.lane.b32.xlu0 %v3389, 16
      %v3438 = vpop.permute.xlu0 %3437
      %v3455 = vadd.f32 %v3294, %v3408
      %v3456 = vadd.f32 %v3295, %v3410
      %v3457 = vadd.f32 %v3296, %v3412
      %v3458 = vadd.f32 %v3297, %v3414
      %v3459 = vadd.f32 %v3298, %v3416
      %v3460 = vadd.f32 %v3299, %v3418
      %v3461 = vadd.f32 %v3300, %v3420
      %v3462 = vadd.f32 %v3301, %v3422
      %v3463 = vadd.f32 %v3302, %v3424
      %v3464 = vadd.f32 %v3303, %v3426
      %v3465 = vadd.f32 %v3304, %v3428
      %v3466 = vadd.f32 %v3305, %v3430
      %v3467 = vadd.f32 %v3306, %v3432
      %v3468 = vadd.f32 %v3307, %v3434
      %v3469 = vadd.f32 %v3308, %v3436
      %v3470 = vadd.f32 %v3309, %v3438
      %vm3471 = vcmask 195712
      %3472 = vst.msk [vmem:[#allocation3] sm:$0xff] %vm3471, %v3455
      %3473 = vst.msk [vmem:[#allocation3 + $0x8] sm:$0xff] %vm3471, %v3456
      %3474 = vst.msk [vmem:[#allocation3 + $0x10] sm:$0xff] %vm3471, %v3457
      %3475 = vst.msk [vmem:[#allocation3 + $0x18] sm:$0xff] %vm3471, %v3458
      %3476 = vst.msk [vmem:[#allocation3 + $0x20] sm:$0xff] %vm3471, %v3459
      %3477 = vst.msk [vmem:[#allocation3 + $0x28] sm:$0xff] %vm3471, %v3460
      %3478 = vst.msk [vmem:[#allocation3 + $0x30] sm:$0xff] %vm3471, %v3461
      %3479 = vst.msk [vmem:[#allocation3 + $0x38] sm:$0xff] %vm3471, %v3462
      %3480 = vst.msk [vmem:[#allocation3 + $0x40] sm:$0xff] %vm3471, %v3463
      %3481 = vst.msk [vmem:[#allocation3 + $0x48] sm:$0xff] %vm3471, %v3464
      %3482 = vst.msk [vmem:[#allocation3 + $0x50] sm:$0xff] %vm3471, %v3465
      %3483 = vst.msk [vmem:[#allocation3 + $0x58] sm:$0xff] %vm3471, %v3466
      %3484 = vst.msk [vmem:[#allocation3 + $0x60] sm:$0xff] %vm3471, %v3467
      %3485 = vst.msk [vmem:[#allocation3 + $0x68] sm:$0xff] %vm3471, %v3468
      %3486 = vst.msk [vmem:[#allocation3 + $0x70] sm:$0xff] %vm3471, %v3469
      %3487 = vst.msk [vmem:[#allocation3 + $0x78] sm:$0xff] %vm3471, %v3470
      %3488 = vst.msk [vmem:[#allocation4] sm:$0xff] %vm3181, %v2909
      %3489 = vst.msk [vmem:[#allocation4 + $0x8] sm:$0xff] %vm3181, %v2910
      %3490 = vst.msk [vmem:[#allocation4 + $0x10] sm:$0xff] %vm3181, %v2911
      %3491 = vst.msk [vmem:[#allocation4 + $0x18] sm:$0xff] %vm3181, %v2912
      %3492 = vst.msk [vmem:[#allocation4 + $0x20] sm:$0xff] %vm3181, %v2913
      %3493 = vst.msk [vmem:[#allocation4 + $0x28] sm:$0xff] %vm3181, %v2914
      %3494 = vst.msk [vmem:[#allocation4 + $0x30] sm:$0xff] %vm3181, %v2915
      %3495 = vst.msk [vmem:[#allocation4 + $0x38] sm:$0xff] %vm3181, %v2916
      %3496 = vst.msk [vmem:[#allocation4 + $0x40] sm:$0xff] %vm3181, %v2917
      %3497 = vst.msk [vmem:[#allocation4 + $0x48] sm:$0xff] %vm3181, %v2918
      %3498 = vst.msk [vmem:[#allocation4 + $0x50] sm:$0xff] %vm3181, %v2919
      %3499 = vst.msk [vmem:[#allocation4 + $0x58] sm:$0xff] %vm3181, %v2920
      %3500 = vst.msk [vmem:[#allocation4 + $0x60] sm:$0xff] %vm3181, %v2921
      %3501 = vst.msk [vmem:[#allocation4 + $0x68] sm:$0xff] %vm3181, %v2922
      %3502 = vst.msk [vmem:[#allocation4 + $0x70] sm:$0xff] %vm3181, %v2923
      %3503 = vst.msk [vmem:[#allocation4 + $0x78] sm:$0xff] %vm3181, %v2924
      %3504 = vrot.lane.b32.xlu0 %v1212, 104
      %v3505 = vpop.permute.xlu0 %3504
      %3506 = vrot.lane.b32.xlu0 %v1213, 104
      %v3507 = vpop.permute.xlu0 %3506
      %3508 = vrot.lane.b32.xlu0 %v1214, 104
      %v3509 = vpop.permute.xlu0 %3508
      %3510 = vrot.lane.b32.xlu0 %v1215, 104
      %v3511 = vpop.permute.xlu0 %3510
      %3512 = vrot.lane.b32.xlu0 %v1216, 104
      %v3513 = vpop.permute.xlu0 %3512
      %3514 = vrot.lane.b32.xlu0 %v1217, 104
      %v3515 = vpop.permute.xlu0 %3514
      %3516 = vrot.lane.b32.xlu0 %v1218, 104
      %v3517 = vpop.permute.xlu0 %3516
      %3518 = vrot.lane.b32.xlu0 %v1219, 104
      %v3519 = vpop.permute.xlu0 %3518
      %3520 = vrot.lane.b32.xlu0 %v1252, 104
      %v3521 = vpop.permute.xlu0 %3520
      %3522 = vrot.lane.b32.xlu0 %v1253, 104
      %v3523 = vpop.permute.xlu0 %3522
      %3524 = vrot.lane.b32.xlu0 %v1254, 104
      %v3525 = vpop.permute.xlu0 %3524
      %3526 = vrot.lane.b32.xlu0 %v1255, 104
      %v3527 = vpop.permute.xlu0 %3526
      %3528 = vrot.lane.b32.xlu0 %v1256, 104
      %v3529 = vpop.permute.xlu0 %3528
      %3530 = vrot.lane.b32.xlu0 %v1257, 104
      %v3531 = vpop.permute.xlu0 %3530
      %3532 = vrot.lane.b32.xlu0 %v1258, 104
      %v3533 = vpop.permute.xlu0 %3532
      %3534 = vrot.lane.b32.xlu0 %v1259, 104
      %v3535 = vpop.permute.xlu0 %3534
      %v3537 = vsel %vm1260, %v3505, 0
      %v3540 = vsel %vm1260, %v3507, 0
      %v3543 = vsel %vm1260, %v3509, 0
      %v3546 = vsel %vm1260, %v3511, 0
      %v3549 = vsel %vm1260, %v3513, 0
      %v3552 = vsel %vm1260, %v3515, 0
      %v3555 = vsel %vm1260, %v3517, 0
      %v3558 = vsel %vm1260, %v3519, 0
      %v3561 = vsel %vm1260, %v3521, 0
      %v3564 = vsel %vm1260, %v3523, 0
      %v3567 = vsel %vm1260, %v3525, 0
      %v3570 = vsel %vm1260, %v3527, 0
      %v3573 = vsel %vm1260, %v3529, 0
      %v3576 = vsel %vm1260, %v3531, 0
      %v3579 = vsel %vm1260, %v3533, 0
      %v3582 = vsel %vm1260, %v3535, 0
      %3584 = vmatpush.bf16.xpose.msra.mxu0 %v3582
      %3585 = vmatpush.bf16.xpose.msra.mxu0 %v3579
      %3586 = vmatpush.bf16.xpose.msra.mxu0 %v3576
      %3587 = vmatpush.bf16.xpose.msra.mxu0 %v3573
      %3588 = vmatpush.bf16.xpose.msra.mxu0 %v3570
      %3589 = vmatpush.bf16.xpose.msra.mxu0 %v3567
      %3590 = vmatpush.bf16.xpose.msra.mxu0 %v3564
      %3591 = vmatpush.bf16.xpose.msra.mxu0 %v3561
      %3592 = vmatmul.bf16.gmra.mxu0 %v3537
      %v3593 = vpop.f32.mrf.mxu0
      %v3594 = vadd.f32 %v1132, %v3593
      %v3595 = vpop.f32.mrf.mxu0
      %v3596 = vadd.f32 %v1133, %v3595
      %3597 = vmatmul.bf16.gmra.mxu0 %v3540
      %v3598 = vpop.f32.mrf.mxu0
      %v3599 = vadd.f32 %v1134, %v3598
      %v3600 = vpop.f32.mrf.mxu0
      %v3601 = vadd.f32 %v1135, %v3600
      %3602 = vmatmul.bf16.gmra.mxu0 %v3543
      %v3603 = vpop.f32.mrf.mxu0
      %v3604 = vadd.f32 %v1136, %v3603
      %v3605 = vpop.f32.mrf.mxu0
      %v3606 = vadd.f32 %v1137, %v3605
      %3607 = vmatmul.bf16.gmra.mxu0 %v3546
      %v3608 = vpop.f32.mrf.mxu0
      %v3609 = vadd.f32 %v1138, %v3608
      %v3610 = vpop.f32.mrf.mxu0
      %v3611 = vadd.f32 %v1139, %v3610
      %3612 = vmatmul.bf16.gmra.mxu0 %v3549
      %v3613 = vpop.f32.mrf.mxu0
      %v3614 = vadd.f32 %v1140, %v3613
      %v3615 = vpop.f32.mrf.mxu0
      %v3616 = vadd.f32 %v1141, %v3615
      %3617 = vmatmul.bf16.gmra.mxu0 %v3552
      %v3618 = vpop.f32.mrf.mxu0
      %v3619 = vadd.f32 %v1142, %v3618
      %v3620 = vpop.f32.mrf.mxu0
      %v3621 = vadd.f32 %v1143, %v3620
      %3622 = vmatmul.bf16.gmra.mxu0 %v3555
      %v3623 = vpop.f32.mrf.mxu0
      %v3624 = vadd.f32 %v1144, %v3623
      %v3625 = vpop.f32.mrf.mxu0
      %v3626 = vadd.f32 %v1145, %v3625
      %3627 = vmatmul.bf16.gmra.mxu0 %v3558
      %v3628 = vpop.f32.mrf.mxu0
      %v3629 = vadd.f32 %v1146, %v3628
      %v3630 = vpop.f32.mrf.mxu0
      %v3631 = vadd.f32 %v1147, %v3630
      %3632 = vdwg.mxu0
      %v3633 = vld [vmem:[#allocation4] sm:$0xff]
      %v3634 = vld [vmem:[#allocation4 + $0x8] sm:$0xff]
      %v3635 = vld [vmem:[#allocation4 + $0x10] sm:$0xff]
      %v3636 = vld [vmem:[#allocation4 + $0x18] sm:$0xff]
      %v3637 = vld [vmem:[#allocation4 + $0x20] sm:$0xff]
      %v3638 = vld [vmem:[#allocation4 + $0x28] sm:$0xff]
      %v3639 = vld [vmem:[#allocation4 + $0x30] sm:$0xff]
      %v3640 = vld [vmem:[#allocation4 + $0x38] sm:$0xff]
      %v3641 = vld [vmem:[#allocation4 + $0x40] sm:$0xff]
      %v3642 = vld [vmem:[#allocation4 + $0x48] sm:$0xff]
      %v3643 = vld [vmem:[#allocation4 + $0x50] sm:$0xff]
      %v3644 = vld [vmem:[#allocation4 + $0x58] sm:$0xff]
      %v3645 = vld [vmem:[#allocation4 + $0x60] sm:$0xff]
      %v3646 = vld [vmem:[#allocation4 + $0x68] sm:$0xff]
      %v3647 = vld [vmem:[#allocation4 + $0x70] sm:$0xff]
      %v3648 = vld [vmem:[#allocation4 + $0x78] sm:$0xff]
      %3649 = vmax.xlane.f32.xlu0 %v3594
      %v3650 = vpop.xlane.xlu0 %3649
      %3651 = vmax.xlane.f32.xlu0 %v3596
      %v3652 = vpop.xlane.xlu0 %3651
      %3653 = vmax.xlane.f32.xlu0 %v3599
      %v3654 = vpop.xlane.xlu0 %3653
      %3655 = vmax.xlane.f32.xlu0 %v3601
      %v3656 = vpop.xlane.xlu0 %3655
      %3657 = vmax.xlane.f32.xlu0 %v3604
      %v3658 = vpop.xlane.xlu0 %3657
      %3659 = vmax.xlane.f32.xlu0 %v3606
      %v3660 = vpop.xlane.xlu0 %3659
      %3661 = vmax.xlane.f32.xlu0 %v3609
      %v3662 = vpop.xlane.xlu0 %3661
      %3663 = vmax.xlane.f32.xlu0 %v3611
      %v3664 = vpop.xlane.xlu0 %3663
      %3665 = vmax.xlane.f32.xlu0 %v3614
      %v3666 = vpop.xlane.xlu0 %3665
      %3667 = vmax.xlane.f32.xlu0 %v3616
      %v3668 = vpop.xlane.xlu0 %3667
      %3669 = vmax.xlane.f32.xlu0 %v3619
      %v3670 = vpop.xlane.xlu0 %3669
      %3671 = vmax.xlane.f32.xlu0 %v3621
      %v3672 = vpop.xlane.xlu0 %3671
      %3673 = vmax.xlane.f32.xlu0 %v3624
      %v3674 = vpop.xlane.xlu0 %3673
      %3675 = vmax.xlane.f32.xlu0 %v3626
      %v3676 = vpop.xlane.xlu0 %3675
      %3677 = vmax.xlane.f32.xlu0 %v3629
      %v3678 = vpop.xlane.xlu0 %3677
      %3679 = vmax.xlane.f32.xlu0 %v3631
      %v3680 = vpop.xlane.xlu0 %3679
      %v3681 = vmax.f32 %v3633, %v3650
      %v3682 = vmax.f32 %v3634, %v3652
      %v3683 = vmax.f32 %v3635, %v3654
      %v3684 = vmax.f32 %v3636, %v3656
      %v3685 = vmax.f32 %v3637, %v3658
      %v3686 = vmax.f32 %v3638, %v3660
      %v3687 = vmax.f32 %v3639, %v3662
      %v3688 = vmax.f32 %v3640, %v3664
      %v3689 = vmax.f32 %v3641, %v3666
      %v3690 = vmax.f32 %v3642, %v3668
      %v3691 = vmax.f32 %v3643, %v3670
      %v3692 = vmax.f32 %v3644, %v3672
      %v3693 = vmax.f32 %v3645, %v3674
      %v3694 = vmax.f32 %v3646, %v3676
      %v3695 = vmax.f32 %v3647, %v3678
      %v3696 = vmax.f32 %v3648, %v3680
      %v3697 = vsub.f32 %v3633, %v3681
      %v3698 = vsub.f32 %v3634, %v3682
      %v3699 = vsub.f32 %v3635, %v3683
      %v3700 = vsub.f32 %v3636, %v3684
      %v3701 = vsub.f32 %v3637, %v3685
      %v3702 = vsub.f32 %v3638, %v3686
      %v3703 = vsub.f32 %v3639, %v3687
      %v3704 = vsub.f32 %v3640, %v3688
      %v3705 = vsub.f32 %v3641, %v3689
      %v3706 = vsub.f32 %v3642, %v3690
      %v3707 = vsub.f32 %v3643, %v3691
      %v3708 = vsub.f32 %v3644, %v3692
      %v3709 = vsub.f32 %v3645, %v3693
      %v3710 = vsub.f32 %v3646, %v3694
      %v3711 = vsub.f32 %v3647, %v3695
      %v3712 = vsub.f32 %v3648, %v3696
      %v3713 = vmul.f32 %v3697, 1.442695
      %v3714 = vpow.pop %v3713
      %v3715 = vmul.f32 %v3698, 1.442695
      %v3716 = vpow.pop %v3715
      %v3717 = vmul.f32 %v3699, 1.442695
      %v3718 = vpow.pop %v3717
      %v3719 = vmul.f32 %v3700, 1.442695
      %v3720 = vpow.pop %v3719
      %v3721 = vmul.f32 %v3701, 1.442695
      %v3722 = vpow.pop %v3721
      %v3723 = vmul.f32 %v3702, 1.442695
      %v3724 = vpow.pop %v3723
      %v3725 = vmul.f32 %v3703, 1.442695
      %v3726 = vpow.pop %v3725
      %v3727 = vmul.f32 %v3704, 1.442695
      %v3728 = vpow.pop %v3727
      %v3729 = vmul.f32 %v3705, 1.442695
      %v3730 = vpow.pop %v3729
      %v3731 = vmul.f32 %v3706, 1.442695
      %v3732 = vpow.pop %v3731
      %v3733 = vmul.f32 %v3707, 1.442695
      %v3734 = vpow.pop %v3733
      %v3735 = vmul.f32 %v3708, 1.442695
      %v3736 = vpow.pop %v3735
      %v3737 = vmul.f32 %v3709, 1.442695
      %v3738 = vpow.pop %v3737
      %v3739 = vmul.f32 %v3710, 1.442695
      %v3740 = vpow.pop %v3739
      %v3741 = vmul.f32 %v3711, 1.442695
      %v3742 = vpow.pop %v3741
      %v3743 = vmul.f32 %v3712, 1.442695
      %v3744 = vpow.pop %v3743
      %3746 = vset.pattern.permute.xlu0 3
      %3747 = vperm.xlu0 %3746, %v3681
      %v3748 = vpop.permute.xlu0 %3747
      %3751 = vset.pattern.permute.xlu0 3
      %3752 = vperm.xlu0 %3751, %v3682
      %v3753 = vpop.permute.xlu0 %3752
      %3756 = vset.pattern.permute.xlu0 3
      %3757 = vperm.xlu0 %3756, %v3683
      %v3758 = vpop.permute.xlu0 %3757
      %3761 = vset.pattern.permute.xlu0 3
      %3762 = vperm.xlu0 %3761, %v3684
      %v3763 = vpop.permute.xlu0 %3762
      %3766 = vset.pattern.permute.xlu0 3
      %3767 = vperm.xlu0 %3766, %v3685
      %v3768 = vpop.permute.xlu0 %3767
      %3771 = vset.pattern.permute.xlu0 3
      %3772 = vperm.xlu0 %3771, %v3686
      %v3773 = vpop.permute.xlu0 %3772
      %3776 = vset.pattern.permute.xlu0 3
      %3777 = vperm.xlu0 %3776, %v3687
      %v3778 = vpop.permute.xlu0 %3777
      %3781 = vset.pattern.permute.xlu0 3
      %3782 = vperm.xlu0 %3781, %v3688
      %v3783 = vpop.permute.xlu0 %3782
      %3786 = vset.pattern.permute.xlu0 3
      %3787 = vperm.xlu0 %3786, %v3689
      %v3788 = vpop.permute.xlu0 %3787
      %3791 = vset.pattern.permute.xlu0 3
      %3792 = vperm.xlu0 %3791, %v3690
      %v3793 = vpop.permute.xlu0 %3792
      %3796 = vset.pattern.permute.xlu0 3
      %3797 = vperm.xlu0 %3796, %v3691
      %v3798 = vpop.permute.xlu0 %3797
      %3801 = vset.pattern.permute.xlu0 3
      %3802 = vperm.xlu0 %3801, %v3692
      %v3803 = vpop.permute.xlu0 %3802
      %3806 = vset.pattern.permute.xlu0 3
      %3807 = vperm.xlu0 %3806, %v3693
      %v3808 = vpop.permute.xlu0 %3807
      %3811 = vset.pattern.permute.xlu0 3
      %3812 = vperm.xlu0 %3811, %v3694
      %v3813 = vpop.permute.xlu0 %3812
      %3816 = vset.pattern.permute.xlu0 3
      %3817 = vperm.xlu0 %3816, %v3695
      %v3818 = vpop.permute.xlu0 %3817
      %3821 = vset.pattern.permute.xlu0 3
      %3822 = vperm.xlu0 %3821, %v3696
      %v3823 = vpop.permute.xlu0 %3822
      %v3825 = vsub.f32 %v3594, %v3748
      %v3826 = vsub.f32 %v3596, %v3753
      %v3827 = vsub.f32 %v3599, %v3758
      %v3828 = vsub.f32 %v3601, %v3763
      %v3829 = vsub.f32 %v3604, %v3768
      %v3830 = vsub.f32 %v3606, %v3773
      %v3831 = vsub.f32 %v3609, %v3778
      %v3832 = vsub.f32 %v3611, %v3783
      %v3833 = vsub.f32 %v3614, %v3788
      %v3834 = vsub.f32 %v3616, %v3793
      %v3835 = vsub.f32 %v3619, %v3798
      %v3836 = vsub.f32 %v3621, %v3803
      %v3837 = vsub.f32 %v3624, %v3808
      %v3838 = vsub.f32 %v3626, %v3813
      %v3839 = vsub.f32 %v3629, %v3818
      %v3840 = vsub.f32 %v3631, %v3823
      %v3841 = vmul.f32 %v3825, 1.442695
      %v3842 = vpow.pop %v3841
      %v3843 = vmul.f32 %v3826, 1.442695
      %v3844 = vpow.pop %v3843
      %v3845 = vmul.f32 %v3827, 1.442695
      %v3846 = vpow.pop %v3845
      %v3847 = vmul.f32 %v3828, 1.442695
      %v3848 = vpow.pop %v3847
      %v3849 = vmul.f32 %v3829, 1.442695
      %v3850 = vpow.pop %v3849
      %v3851 = vmul.f32 %v3830, 1.442695
      %v3852 = vpow.pop %v3851
      %v3853 = vmul.f32 %v3831, 1.442695
      %v3854 = vpow.pop %v3853
      %v3855 = vmul.f32 %v3832, 1.442695
      %v3856 = vpow.pop %v3855
      %v3857 = vmul.f32 %v3833, 1.442695
      %v3858 = vpow.pop %v3857
      %v3859 = vmul.f32 %v3834, 1.442695
      %v3860 = vpow.pop %v3859
      %v3861 = vmul.f32 %v3835, 1.442695
      %v3862 = vpow.pop %v3861
      %v3863 = vmul.f32 %v3836, 1.442695
      %v3864 = vpow.pop %v3863
      %v3865 = vmul.f32 %v3837, 1.442695
      %v3866 = vpow.pop %v3865
      %v3867 = vmul.f32 %v3838, 1.442695
      %v3868 = vpow.pop %v3867
      %v3869 = vmul.f32 %v3839, 1.442695
      %v3870 = vpow.pop %v3869
      %v3871 = vmul.f32 %v3840, 1.442695
      %v3872 = vpow.pop %v3871
      %v3873 = vld [vmem:[#allocation5] sm:$0xff]
      %v3874 = vld [vmem:[#allocation5 + $0x8] sm:$0xff]
      %v3875 = vld [vmem:[#allocation5 + $0x10] sm:$0xff]
      %v3876 = vld [vmem:[#allocation5 + $0x18] sm:$0xff]
      %v3877 = vld [vmem:[#allocation5 + $0x20] sm:$0xff]
      %v3878 = vld [vmem:[#allocation5 + $0x28] sm:$0xff]
      %v3879 = vld [vmem:[#allocation5 + $0x30] sm:$0xff]
      %v3880 = vld [vmem:[#allocation5 + $0x38] sm:$0xff]
      %v3881 = vld [vmem:[#allocation5 + $0x40] sm:$0xff]
      %v3882 = vld [vmem:[#allocation5 + $0x48] sm:$0xff]
      %v3883 = vld [vmem:[#allocation5 + $0x50] sm:$0xff]
      %v3884 = vld [vmem:[#allocation5 + $0x58] sm:$0xff]
      %v3885 = vld [vmem:[#allocation5 + $0x60] sm:$0xff]
      %v3886 = vld [vmem:[#allocation5 + $0x68] sm:$0xff]
      %v3887 = vld [vmem:[#allocation5 + $0x70] sm:$0xff]
      %v3888 = vld [vmem:[#allocation5 + $0x78] sm:$0xff]
      %v3889 = vmul.f32 %v3714, %v3873
      %v3890 = vmul.f32 %v3716, %v3874
      %v3891 = vmul.f32 %v3718, %v3875
      %v3892 = vmul.f32 %v3720, %v3876
      %v3893 = vmul.f32 %v3722, %v3877
      %v3894 = vmul.f32 %v3724, %v3878
      %v3895 = vmul.f32 %v3726, %v3879
      %v3896 = vmul.f32 %v3728, %v3880
      %v3897 = vmul.f32 %v3730, %v3881
      %v3898 = vmul.f32 %v3732, %v3882
      %v3899 = vmul.f32 %v3734, %v3883
      %v3900 = vmul.f32 %v3736, %v3884
      %v3901 = vmul.f32 %v3738, %v3885
      %v3902 = vmul.f32 %v3740, %v3886
      %v3903 = vmul.f32 %v3742, %v3887
      %v3904 = vmul.f32 %v3744, %v3888
      %3905 = vadd.xlane.f32.xlu0 %v3842
      %v3906 = vpop.xlane.xlu0 %3905
      %3907 = vadd.xlane.f32.xlu0 %v3844
      %v3908 = vpop.xlane.xlu0 %3907
      %3909 = vadd.xlane.f32.xlu0 %v3846
      %v3910 = vpop.xlane.xlu0 %3909
      %3911 = vadd.xlane.f32.xlu0 %v3848
      %v3912 = vpop.xlane.xlu0 %3911
      %3913 = vadd.xlane.f32.xlu0 %v3850
      %v3914 = vpop.xlane.xlu0 %3913
      %3915 = vadd.xlane.f32.xlu0 %v3852
      %v3916 = vpop.xlane.xlu0 %3915
      %3917 = vadd.xlane.f32.xlu0 %v3854
      %v3918 = vpop.xlane.xlu0 %3917
      %3919 = vadd.xlane.f32.xlu0 %v3856
      %v3920 = vpop.xlane.xlu0 %3919
      %3921 = vadd.xlane.f32.xlu0 %v3858
      %v3922 = vpop.xlane.xlu0 %3921
      %3923 = vadd.xlane.f32.xlu0 %v3860
      %v3924 = vpop.xlane.xlu0 %3923
      %3925 = vadd.xlane.f32.xlu0 %v3862
      %v3926 = vpop.xlane.xlu0 %3925
      %3927 = vadd.xlane.f32.xlu0 %v3864
      %v3928 = vpop.xlane.xlu0 %3927
      %3929 = vadd.xlane.f32.xlu0 %v3866
      %v3930 = vpop.xlane.xlu0 %3929
      %3931 = vadd.xlane.f32.xlu0 %v3868
      %v3932 = vpop.xlane.xlu0 %3931
      %3933 = vadd.xlane.f32.xlu0 %v3870
      %v3934 = vpop.xlane.xlu0 %3933
      %3935 = vadd.xlane.f32.xlu0 %v3872
      %v3936 = vpop.xlane.xlu0 %3935
      %v3937 = vadd.f32 %v3889, %v3906
      %v3938 = vadd.f32 %v3890, %v3908
      %v3939 = vadd.f32 %v3891, %v3910
      %v3940 = vadd.f32 %v3892, %v3912
      %v3941 = vadd.f32 %v3893, %v3914
      %v3942 = vadd.f32 %v3894, %v3916
      %v3943 = vadd.f32 %v3895, %v3918
      %v3944 = vadd.f32 %v3896, %v3920
      %v3945 = vadd.f32 %v3897, %v3922
      %v3946 = vadd.f32 %v3898, %v3924
      %v3947 = vadd.f32 %v3899, %v3926
      %v3948 = vadd.f32 %v3900, %v3928
      %v3949 = vadd.f32 %v3901, %v3930
      %v3950 = vadd.f32 %v3902, %v3932
      %v3951 = vadd.f32 %v3903, %v3934
      %v3952 = vadd.f32 %v3904, %v3936
      %vm3953 = vcmask 31768
      %3954 = vst.msk [vmem:[#allocation5] sm:$0xff] %vm3953, %v3937
      %3955 = vst.msk [vmem:[#allocation5 + $0x8] sm:$0xff] %vm3953, %v3938
      %3956 = vst.msk [vmem:[#allocation5 + $0x10] sm:$0xff] %vm3953, %v3939
      %3957 = vst.msk [vmem:[#allocation5 + $0x18] sm:$0xff] %vm3953, %v3940
      %3958 = vst.msk [vmem:[#allocation5 + $0x20] sm:$0xff] %vm3953, %v3941
      %3959 = vst.msk [vmem:[#allocation5 + $0x28] sm:$0xff] %vm3953, %v3942
      %3960 = vst.msk [vmem:[#allocation5 + $0x30] sm:$0xff] %vm3953, %v3943
      %3961 = vst.msk [vmem:[#allocation5 + $0x38] sm:$0xff] %vm3953, %v3944
      %3962 = vst.msk [vmem:[#allocation5 + $0x40] sm:$0xff] %vm3953, %v3945
      %3963 = vst.msk [vmem:[#allocation5 + $0x48] sm:$0xff] %vm3953, %v3946
      %3964 = vst.msk [vmem:[#allocation5 + $0x50] sm:$0xff] %vm3953, %v3947
      %3965 = vst.msk [vmem:[#allocation5 + $0x58] sm:$0xff] %vm3953, %v3948
      %3966 = vst.msk [vmem:[#allocation5 + $0x60] sm:$0xff] %vm3953, %v3949
      %3967 = vst.msk [vmem:[#allocation5 + $0x68] sm:$0xff] %vm3953, %v3950
      %3968 = vst.msk [vmem:[#allocation5 + $0x70] sm:$0xff] %vm3953, %v3951
      %3969 = vst.msk [vmem:[#allocation5 + $0x78] sm:$0xff] %vm3953, %v3952
      %v3970 = vld [vmem:[#allocation3] sm:$0xff]
      %v3971 = vld [vmem:[#allocation3 + $0x8] sm:$0xff]
      %v3972 = vld [vmem:[#allocation3 + $0x10] sm:$0xff]
      %v3973 = vld [vmem:[#allocation3 + $0x18] sm:$0xff]
      %v3974 = vld [vmem:[#allocation3 + $0x20] sm:$0xff]
      %v3975 = vld [vmem:[#allocation3 + $0x28] sm:$0xff]
      %v3976 = vld [vmem:[#allocation3 + $0x30] sm:$0xff]
      %v3977 = vld [vmem:[#allocation3 + $0x38] sm:$0xff]
      %v3978 = vld [vmem:[#allocation3 + $0x40] sm:$0xff]
      %v3979 = vld [vmem:[#allocation3 + $0x48] sm:$0xff]
      %v3980 = vld [vmem:[#allocation3 + $0x50] sm:$0xff]
      %v3981 = vld [vmem:[#allocation3 + $0x58] sm:$0xff]
      %v3982 = vld [vmem:[#allocation3 + $0x60] sm:$0xff]
      %v3983 = vld [vmem:[#allocation3 + $0x68] sm:$0xff]
      %v3984 = vld [vmem:[#allocation3 + $0x70] sm:$0xff]
      %v3985 = vld [vmem:[#allocation3 + $0x78] sm:$0xff]
      %3987 = vset.pattern.permute.xlu0 3
      %3988 = vperm.xlu0 %3987, %v3714
      %v3989 = vpop.permute.xlu0 %3988
      %3992 = vset.pattern.permute.xlu0 3
      %3993 = vperm.xlu0 %3992, %v3716
      %v3994 = vpop.permute.xlu0 %3993
      %3997 = vset.pattern.permute.xlu0 3
      %3998 = vperm.xlu0 %3997, %v3718
      %v3999 = vpop.permute.xlu0 %3998
      %4002 = vset.pattern.permute.xlu0 3
      %4003 = vperm.xlu0 %4002, %v3720
      %v4004 = vpop.permute.xlu0 %4003
      %4007 = vset.pattern.permute.xlu0 3
      %4008 = vperm.xlu0 %4007, %v3722
      %v4009 = vpop.permute.xlu0 %4008
      %4012 = vset.pattern.permute.xlu0 3
      %4013 = vperm.xlu0 %4012, %v3724
      %v4014 = vpop.permute.xlu0 %4013
      %4017 = vset.pattern.permute.xlu0 3
      %4018 = vperm.xlu0 %4017, %v3726
      %v4019 = vpop.permute.xlu0 %4018
      %4022 = vset.pattern.permute.xlu0 3
      %4023 = vperm.xlu0 %4022, %v3728
      %v4024 = vpop.permute.xlu0 %4023
      %4027 = vset.pattern.permute.xlu0 3
      %4028 = vperm.xlu0 %4027, %v3730
      %v4029 = vpop.permute.xlu0 %4028
      %4032 = vset.pattern.permute.xlu0 3
      %4033 = vperm.xlu0 %4032, %v3732
      %v4034 = vpop.permute.xlu0 %4033
      %4037 = vset.pattern.permute.xlu0 3
      %4038 = vperm.xlu0 %4037, %v3734
      %v4039 = vpop.permute.xlu0 %4038
      %4042 = vset.pattern.permute.xlu0 3
      %4043 = vperm.xlu0 %4042, %v3736
      %v4044 = vpop.permute.xlu0 %4043
      %4047 = vset.pattern.permute.xlu0 3
      %4048 = vperm.xlu0 %4047, %v3738
      %v4049 = vpop.permute.xlu0 %4048
      %4052 = vset.pattern.permute.xlu0 3
      %4053 = vperm.xlu0 %4052, %v3740
      %v4054 = vpop.permute.xlu0 %4053
      %4057 = vset.pattern.permute.xlu0 3
      %4058 = vperm.xlu0 %4057, %v3742
      %v4059 = vpop.permute.xlu0 %4058
      %4062 = vset.pattern.permute.xlu0 3
      %4063 = vperm.xlu0 %4062, %v3744
      %v4064 = vpop.permute.xlu0 %4063
      %v4066 = vmul.f32 %v3989, %v3970
      %v4067 = vmul.f32 %v3994, %v3971
      %v4068 = vmul.f32 %v3999, %v3972
      %v4069 = vmul.f32 %v4004, %v3973
      %v4070 = vmul.f32 %v4009, %v3974
      %v4071 = vmul.f32 %v4014, %v3975
      %v4072 = vmul.f32 %v4019, %v3976
      %v4073 = vmul.f32 %v4024, %v3977
      %v4074 = vmul.f32 %v4029, %v3978
      %v4075 = vmul.f32 %v4034, %v3979
      %v4076 = vmul.f32 %v4039, %v3980
      %v4077 = vmul.f32 %v4044, %v3981
      %v4078 = vmul.f32 %v4049, %v3982
      %v4079 = vmul.f32 %v4054, %v3983
      %v4080 = vmul.f32 %v4059, %v3984
      %v4081 = vmul.f32 %v4064, %v3985
      %v4082 = vpack.c.bf16 %v3844, %v3842
      %v4083 = vpack.c.bf16 %v3848, %v3846
      %v4084 = vpack.c.bf16 %v3852, %v3850
      %v4085 = vpack.c.bf16 %v3856, %v3854
      %v4086 = vpack.c.bf16 %v3860, %v3858
      %v4087 = vpack.c.bf16 %v3864, %v3862
      %v4088 = vpack.c.bf16 %v3868, %v3866
      %v4089 = vpack.c.bf16 %v3872, %v3870
      %4090 = vrot.lane.b32.xlu0 %v1847, 104
      %v4091 = vpop.permute.xlu0 %4090
      %4092 = vrot.lane.b32.xlu0 %v1848, 104
      %v4093 = vpop.permute.xlu0 %4092
      %4094 = vrot.lane.b32.xlu0 %v1849, 104
      %v4095 = vpop.permute.xlu0 %4094
      %4096 = vrot.lane.b32.xlu0 %v1850, 104
      %v4097 = vpop.permute.xlu0 %4096
      %4098 = vrot.lane.b32.xlu0 %v1851, 104
      %v4099 = vpop.permute.xlu0 %4098
      %4100 = vrot.lane.b32.xlu0 %v1852, 104
      %v4101 = vpop.permute.xlu0 %4100
      %4102 = vrot.lane.b32.xlu0 %v1853, 104
      %v4103 = vpop.permute.xlu0 %4102
      %4104 = vrot.lane.b32.xlu0 %v1854, 104
      %v4105 = vpop.permute.xlu0 %4104
      %4114 = vmatpush.bf16.msra.mxu0 %v4105
      %4115 = vmatpush.bf16.msra.mxu0 %v4103
      %4116 = vmatpush.bf16.msra.mxu0 %v4101
      %4117 = vmatpush.bf16.msra.mxu0 %v4099
      %4118 = vmatpush.bf16.msra.mxu0 %v4097
      %4119 = vmatpush.bf16.msra.mxu0 %v4095
      %4120 = vmatpush.bf16.msra.mxu0 %v4093
      %4121 = vmatpush.bf16.msra.mxu0 %v4091
      %4122 = vmatmul.bf16.gmra.mxu0 %v4082
      %v4123 = vpop.f32.mrf.mxu0
      %v4124 = vadd.f32 0.0, %v4123
      %v4125 = vpop.f32.mrf.mxu0
      %v4126 = vadd.f32 0.0, %v4125
      %4127 = vmatmul.bf16.gmra.mxu0 %v4083
      %v4128 = vpop.f32.mrf.mxu0
      %v4129 = vadd.f32 0.0, %v4128
      %v4130 = vpop.f32.mrf.mxu0
      %v4131 = vadd.f32 0.0, %v4130
      %4132 = vmatmul.bf16.gmra.mxu0 %v4084
      %v4133 = vpop.f32.mrf.mxu0
      %v4134 = vadd.f32 0.0, %v4133
      %v4135 = vpop.f32.mrf.mxu0
      %v4136 = vadd.f32 0.0, %v4135
      %4137 = vmatmul.bf16.gmra.mxu0 %v4085
      %v4138 = vpop.f32.mrf.mxu0
      %v4139 = vadd.f32 0.0, %v4138
      %v4140 = vpop.f32.mrf.mxu0
      %v4141 = vadd.f32 0.0, %v4140
      %4142 = vmatmul.bf16.gmra.mxu0 %v4086
      %v4143 = vpop.f32.mrf.mxu0
      %v4144 = vadd.f32 0.0, %v4143
      %v4145 = vpop.f32.mrf.mxu0
      %v4146 = vadd.f32 0.0, %v4145
      %4147 = vmatmul.bf16.gmra.mxu0 %v4087
      %v4148 = vpop.f32.mrf.mxu0
      %v4149 = vadd.f32 0.0, %v4148
      %v4150 = vpop.f32.mrf.mxu0
      %v4151 = vadd.f32 0.0, %v4150
      %4152 = vmatmul.bf16.gmra.mxu0 %v4088
      %v4153 = vpop.f32.mrf.mxu0
      %v4154 = vadd.f32 0.0, %v4153
      %v4155 = vpop.f32.mrf.mxu0
      %v4156 = vadd.f32 0.0, %v4155
      %4157 = vmatmul.bf16.gmra.mxu0 %v4089
      %v4158 = vpop.f32.mrf.mxu0
      %v4159 = vadd.f32 0.0, %v4158
      %v4160 = vpop.f32.mrf.mxu0
      %v4161 = vadd.f32 0.0, %v4160
      %4162 = vdwg.mxu0
      %4179 = vrot.lane.b32.xlu0 %v4124, 24
      %v4180 = vpop.permute.xlu0 %4179
      %4181 = vrot.lane.b32.xlu0 %v4126, 24
      %v4182 = vpop.permute.xlu0 %4181
      %4183 = vrot.lane.b32.xlu0 %v4129, 24
      %v4184 = vpop.permute.xlu0 %4183
      %4185 = vrot.lane.b32.xlu0 %v4131, 24
      %v4186 = vpop.permute.xlu0 %4185
      %4187 = vrot.lane.b32.xlu0 %v4134, 24
      %v4188 = vpop.permute.xlu0 %4187
      %4189 = vrot.lane.b32.xlu0 %v4136, 24
      %v4190 = vpop.permute.xlu0 %4189
      %4191 = vrot.lane.b32.xlu0 %v4139, 24
      %v4192 = vpop.permute.xlu0 %4191
      %4193 = vrot.lane.b32.xlu0 %v4141, 24
      %v4194 = vpop.permute.xlu0 %4193
      %4195 = vrot.lane.b32.xlu0 %v4144, 24
      %v4196 = vpop.permute.xlu0 %4195
      %4197 = vrot.lane.b32.xlu0 %v4146, 24
      %v4198 = vpop.permute.xlu0 %4197
      %4199 = vrot.lane.b32.xlu0 %v4149, 24
      %v4200 = vpop.permute.xlu0 %4199
      %4201 = vrot.lane.b32.xlu0 %v4151, 24
      %v4202 = vpop.permute.xlu0 %4201
      %4203 = vrot.lane.b32.xlu0 %v4154, 24
      %v4204 = vpop.permute.xlu0 %4203
      %4205 = vrot.lane.b32.xlu0 %v4156, 24
      %v4206 = vpop.permute.xlu0 %4205
      %4207 = vrot.lane.b32.xlu0 %v4159, 24
      %v4208 = vpop.permute.xlu0 %4207
      %4209 = vrot.lane.b32.xlu0 %v4161, 24
      %v4210 = vpop.permute.xlu0 %4209
      %v4227 = vadd.f32 %v4066, %v4180
      %v4228 = vadd.f32 %v4067, %v4182
      %v4229 = vadd.f32 %v4068, %v4184
      %v4230 = vadd.f32 %v4069, %v4186
      %v4231 = vadd.f32 %v4070, %v4188
      %v4232 = vadd.f32 %v4071, %v4190
      %v4233 = vadd.f32 %v4072, %v4192
      %v4234 = vadd.f32 %v4073, %v4194
      %v4235 = vadd.f32 %v4074, %v4196
      %v4236 = vadd.f32 %v4075, %v4198
      %v4237 = vadd.f32 %v4076, %v4200
      %v4238 = vadd.f32 %v4077, %v4202
      %v4239 = vadd.f32 %v4078, %v4204
      %v4240 = vadd.f32 %v4079, %v4206
      %v4241 = vadd.f32 %v4080, %v4208
      %v4242 = vadd.f32 %v4081, %v4210
      %vm4243 = vcmask 261312
      %4244 = vst.msk [vmem:[#allocation3] sm:$0xff] %vm4243, %v4227
      %4245 = vst.msk [vmem:[#allocation3 + $0x8] sm:$0xff] %vm4243, %v4228
      %4246 = vst.msk [vmem:[#allocation3 + $0x10] sm:$0xff] %vm4243, %v4229
      %4247 = vst.msk [vmem:[#allocation3 + $0x18] sm:$0xff] %vm4243, %v4230
      %4248 = vst.msk [vmem:[#allocation3 + $0x20] sm:$0xff] %vm4243, %v4231
      %4249 = vst.msk [vmem:[#allocation3 + $0x28] sm:$0xff] %vm4243, %v4232
      %4250 = vst.msk [vmem:[#allocation3 + $0x30] sm:$0xff] %vm4243, %v4233
      %4251 = vst.msk [vmem:[#allocation3 + $0x38] sm:$0xff] %vm4243, %v4234
      %4252 = vst.msk [vmem:[#allocation3 + $0x40] sm:$0xff] %vm4243, %v4235
      %4253 = vst.msk [vmem:[#allocation3 + $0x48] sm:$0xff] %vm4243, %v4236
      %4254 = vst.msk [vmem:[#allocation3 + $0x50] sm:$0xff] %vm4243, %v4237
      %4255 = vst.msk [vmem:[#allocation3 + $0x58] sm:$0xff] %vm4243, %v4238
      %4256 = vst.msk [vmem:[#allocation3 + $0x60] sm:$0xff] %vm4243, %v4239
      %4257 = vst.msk [vmem:[#allocation3 + $0x68] sm:$0xff] %vm4243, %v4240
      %4258 = vst.msk [vmem:[#allocation3 + $0x70] sm:$0xff] %vm4243, %v4241
      %4259 = vst.msk [vmem:[#allocation3 + $0x78] sm:$0xff] %vm4243, %v4242
      %4260 = vst.msk [vmem:[#allocation4] sm:$0xff] %vm3953, %v3681
      %4261 = vst.msk [vmem:[#allocation4 + $0x8] sm:$0xff] %vm3953, %v3682
      %4262 = vst.msk [vmem:[#allocation4 + $0x10] sm:$0xff] %vm3953, %v3683
      %4263 = vst.msk [vmem:[#allocation4 + $0x18] sm:$0xff] %vm3953, %v3684
      %4264 = vst.msk [vmem:[#allocation4 + $0x20] sm:$0xff] %vm3953, %v3685
      %4265 = vst.msk [vmem:[#allocation4 + $0x28] sm:$0xff] %vm3953, %v3686
      %4266 = vst.msk [vmem:[#allocation4 + $0x30] sm:$0xff] %vm3953, %v3687
      %4267 = vst.msk [vmem:[#allocation4 + $0x38] sm:$0xff] %vm3953, %v3688
      %4268 = vst.msk [vmem:[#allocation4 + $0x40] sm:$0xff] %vm3953, %v3689
      %4269 = vst.msk [vmem:[#allocation4 + $0x48] sm:$0xff] %vm3953, %v3690
      %4270 = vst.msk [vmem:[#allocation4 + $0x50] sm:$0xff] %vm3953, %v3691
      %4271 = vst.msk [vmem:[#allocation4 + $0x58] sm:$0xff] %vm3953, %v3692
      %4272 = vst.msk [vmem:[#allocation4 + $0x60] sm:$0xff] %vm3953, %v3693
      %4273 = vst.msk [vmem:[#allocation4 + $0x68] sm:$0xff] %vm3953, %v3694
      %4274 = vst.msk [vmem:[#allocation4 + $0x70] sm:$0xff] %vm3953, %v3695
      %4275 = vst.msk [vmem:[#allocation4 + $0x78] sm:$0xff] %vm3953, %v3696
      %p4276 = scmp.eq.s32.totalorder %s25, 1
      // Predicated region
      $region61: #{tpu_custom_call.1} parent=55 // pred_check
        %p4277 = pneg %p4276
      $region62: #{tpu_custom_call.1} parent=55 // pred_check_branch
        %4279 = sbr.rel (%p4277) target = $region64
      $region63: #{tpu_custom_call.1} parent=55 // pred_region
        %v4280 = vld [vmem:[#allocation5] sm:$0xff]
        %v4281 = vld [vmem:[#allocation5 + $0x8] sm:$0xff]
        %v4282 = vld [vmem:[#allocation5 + $0x10] sm:$0xff]
        %v4283 = vld [vmem:[#allocation5 + $0x18] sm:$0xff]
        %v4284 = vld [vmem:[#allocation5 + $0x20] sm:$0xff]
        %v4285 = vld [vmem:[#allocation5 + $0x28] sm:$0xff]
        %v4286 = vld [vmem:[#allocation5 + $0x30] sm:$0xff]
        %v4287 = vld [vmem:[#allocation5 + $0x38] sm:$0xff]
        %v4288 = vld [vmem:[#allocation5 + $0x40] sm:$0xff]
        %v4289 = vld [vmem:[#allocation5 + $0x48] sm:$0xff]
        %v4290 = vld [vmem:[#allocation5 + $0x50] sm:$0xff]
        %v4291 = vld [vmem:[#allocation5 + $0x58] sm:$0xff]
        %v4292 = vld [vmem:[#allocation5 + $0x60] sm:$0xff]
        %v4293 = vld [vmem:[#allocation5 + $0x68] sm:$0xff]
        %v4294 = vld [vmem:[#allocation5 + $0x70] sm:$0xff]
        %v4295 = vld [vmem:[#allocation5 + $0x78] sm:$0xff]
        %v4296 = vrcp.pop %v4280
        %v4297 = vrcp.pop %v4281
        %v4298 = vrcp.pop %v4282
        %v4299 = vrcp.pop %v4283
        %v4300 = vrcp.pop %v4284
        %v4301 = vrcp.pop %v4285
        %v4302 = vrcp.pop %v4286
        %v4303 = vrcp.pop %v4287
        %v4304 = vrcp.pop %v4288
        %v4305 = vrcp.pop %v4289
        %v4306 = vrcp.pop %v4290
        %v4307 = vrcp.pop %v4291
        %v4308 = vrcp.pop %v4292
        %v4309 = vrcp.pop %v4293
        %v4310 = vrcp.pop %v4294
        %v4311 = vrcp.pop %v4295
        %v4312 = vld [vmem:[#allocation3] sm:$0xff]
        %v4313 = vld [vmem:[#allocation3 + $0x8] sm:$0xff]
        %v4314 = vld [vmem:[#allocation3 + $0x10] sm:$0xff]
        %v4315 = vld [vmem:[#allocation3 + $0x18] sm:$0xff]
        %v4316 = vld [vmem:[#allocation3 + $0x20] sm:$0xff]
        %v4317 = vld [vmem:[#allocation3 + $0x28] sm:$0xff]
        %v4318 = vld [vmem:[#allocation3 + $0x30] sm:$0xff]
        %v4319 = vld [vmem:[#allocation3 + $0x38] sm:$0xff]
        %v4320 = vld [vmem:[#allocation3 + $0x40] sm:$0xff]
        %v4321 = vld [vmem:[#allocation3 + $0x48] sm:$0xff]
        %v4322 = vld [vmem:[#allocation3 + $0x50] sm:$0xff]
        %v4323 = vld [vmem:[#allocation3 + $0x58] sm:$0xff]
        %v4324 = vld [vmem:[#allocation3 + $0x60] sm:$0xff]
        %v4325 = vld [vmem:[#allocation3 + $0x68] sm:$0xff]
        %v4326 = vld [vmem:[#allocation3 + $0x70] sm:$0xff]
        %v4327 = vld [vmem:[#allocation3 + $0x78] sm:$0xff]
        %4329 = vset.pattern.permute.xlu0 0
        %4330 = vperm.xlu0 %4329, %v4296
        %v4331 = vpop.permute.xlu0 %4330
        %4334 = vset.pattern.permute.xlu0 0
        %4335 = vperm.xlu0 %4334, %v4297
        %v4336 = vpop.permute.xlu0 %4335
        %4339 = vset.pattern.permute.xlu0 0
        %4340 = vperm.xlu0 %4339, %v4298
        %v4341 = vpop.permute.xlu0 %4340
        %4344 = vset.pattern.permute.xlu0 0
        %4345 = vperm.xlu0 %4344, %v4299
        %v4346 = vpop.permute.xlu0 %4345
        %4349 = vset.pattern.permute.xlu0 0
        %4350 = vperm.xlu0 %4349, %v4300
        %v4351 = vpop.permute.xlu0 %4350
        %4354 = vset.pattern.permute.xlu0 0
        %4355 = vperm.xlu0 %4354, %v4301
        %v4356 = vpop.permute.xlu0 %4355
        %4359 = vset.pattern.permute.xlu0 0
        %4360 = vperm.xlu0 %4359, %v4302
        %v4361 = vpop.permute.xlu0 %4360
        %4364 = vset.pattern.permute.xlu0 0
        %4365 = vperm.xlu0 %4364, %v4303
        %v4366 = vpop.permute.xlu0 %4365
        %4369 = vset.pattern.permute.xlu0 0
        %4370 = vperm.xlu0 %4369, %v4304
        %v4371 = vpop.permute.xlu0 %4370
        %4374 = vset.pattern.permute.xlu0 0
        %4375 = vperm.xlu0 %4374, %v4305
        %v4376 = vpop.permute.xlu0 %4375
        %4379 = vset.pattern.permute.xlu0 0
        %4380 = vperm.xlu0 %4379, %v4306
        %v4381 = vpop.permute.xlu0 %4380
        %4384 = vset.pattern.permute.xlu0 0
        %4385 = vperm.xlu0 %4384, %v4307
        %v4386 = vpop.permute.xlu0 %4385
        %4389 = vset.pattern.permute.xlu0 0
        %4390 = vperm.xlu0 %4389, %v4308
        %v4391 = vpop.permute.xlu0 %4390
        %4394 = vset.pattern.permute.xlu0 0
        %4395 = vperm.xlu0 %4394, %v4309
        %v4396 = vpop.permute.xlu0 %4395
        %4399 = vset.pattern.permute.xlu0 0
        %4400 = vperm.xlu0 %4399, %v4310
        %v4401 = vpop.permute.xlu0 %4400
        %4404 = vset.pattern.permute.xlu0 0
        %4405 = vperm.xlu0 %4404, %v4311
        %v4406 = vpop.permute.xlu0 %4405
        %v4408 = vmul.f32 %v4312, %v4331
        %v4409 = vmul.f32 %v4313, %v4336
        %v4410 = vmul.f32 %v4314, %v4341
        %v4411 = vmul.f32 %v4315, %v4346
        %v4412 = vmul.f32 %v4316, %v4351
        %v4413 = vmul.f32 %v4317, %v4356
        %v4414 = vmul.f32 %v4318, %v4361
        %v4415 = vmul.f32 %v4319, %v4366
        %v4416 = vmul.f32 %v4320, %v4371
        %v4417 = vmul.f32 %v4321, %v4376
        %v4418 = vmul.f32 %v4322, %v4381
        %v4419 = vmul.f32 %v4323, %v4386
        %v4420 = vmul.f32 %v4324, %v4391
        %v4421 = vmul.f32 %v4325, %v4396
        %v4422 = vmul.f32 %v4326, %v4401
        %v4423 = vmul.f32 %v4327, %v4406
        %4424 = vst.msk [vmem:[#allocation3] sm:$0xff] %vm1260, %v4408
        %4425 = vst.msk [vmem:[#allocation3 + $0x8] sm:$0xff] %vm1260, %v4409
        %4426 = vst.msk [vmem:[#allocation3 + $0x10] sm:$0xff] %vm1260, %v4410
        %4427 = vst.msk [vmem:[#allocation3 + $0x18] sm:$0xff] %vm1260, %v4411
        %4428 = vst.msk [vmem:[#allocation3 + $0x20] sm:$0xff] %vm1260, %v4412
        %4429 = vst.msk [vmem:[#allocation3 + $0x28] sm:$0xff] %vm1260, %v4413
        %4430 = vst.msk [vmem:[#allocation3 + $0x30] sm:$0xff] %vm1260, %v4414
        %4431 = vst.msk [vmem:[#allocation3 + $0x38] sm:$0xff] %vm1260, %v4415
        %4432 = vst.msk [vmem:[#allocation3 + $0x40] sm:$0xff] %vm1260, %v4416
        %4433 = vst.msk [vmem:[#allocation3 + $0x48] sm:$0xff] %vm1260, %v4417
        %4434 = vst.msk [vmem:[#allocation3 + $0x50] sm:$0xff] %vm1260, %v4418
        %4435 = vst.msk [vmem:[#allocation3 + $0x58] sm:$0xff] %vm1260, %v4419
        %4436 = vst.msk [vmem:[#allocation3 + $0x60] sm:$0xff] %vm1260, %v4420
        %4437 = vst.msk [vmem:[#allocation3 + $0x68] sm:$0xff] %vm1260, %v4421
        %4438 = vst.msk [vmem:[#allocation3 + $0x70] sm:$0xff] %vm1260, %v4422
        %4439 = vst.msk [vmem:[#allocation3 + $0x78] sm:$0xff] %vm1260, %v4423
        %v4440 = vld [vmem:[#allocation5] sm:$0xff]
        %v4441 = vld [vmem:[#allocation5 + $0x8] sm:$0xff]
        %v4442 = vld [vmem:[#allocation5 + $0x10] sm:$0xff]
        %v4443 = vld [vmem:[#allocation5 + $0x18] sm:$0xff]
        %v4444 = vld [vmem:[#allocation5 + $0x20] sm:$0xff]
        %v4445 = vld [vmem:[#allocation5 + $0x28] sm:$0xff]
        %v4446 = vld [vmem:[#allocation5 + $0x30] sm:$0xff]
        %v4447 = vld [vmem:[#allocation5 + $0x38] sm:$0xff]
        %v4448 = vld [vmem:[#allocation5 + $0x40] sm:$0xff]
        %v4449 = vld [vmem:[#allocation5 + $0x48] sm:$0xff]
        %v4450 = vld [vmem:[#allocation5 + $0x50] sm:$0xff]
        %v4451 = vld [vmem:[#allocation5 + $0x58] sm:$0xff]
        %v4452 = vld [vmem:[#allocation5 + $0x60] sm:$0xff]
        %v4453 = vld [vmem:[#allocation5 + $0x68] sm:$0xff]
        %v4454 = vld [vmem:[#allocation5 + $0x70] sm:$0xff]
        %v4455 = vld [vmem:[#allocation5 + $0x78] sm:$0xff]
        %v4456 = vrcp.pop %v4440
        %v4457 = vrcp.pop %v4441
        %v4458 = vrcp.pop %v4442
        %v4459 = vrcp.pop %v4443
        %v4460 = vrcp.pop %v4444
        %v4461 = vrcp.pop %v4445
        %v4462 = vrcp.pop %v4446
        %v4463 = vrcp.pop %v4447
        %v4464 = vrcp.pop %v4448
        %v4465 = vrcp.pop %v4449
        %v4466 = vrcp.pop %v4450
        %v4467 = vrcp.pop %v4451
        %v4468 = vrcp.pop %v4452
        %v4469 = vrcp.pop %v4453
        %v4470 = vrcp.pop %v4454
        %v4471 = vrcp.pop %v4455
        %v4472 = vld [vmem:[#allocation3] sm:$0xff]
        %v4473 = vld [vmem:[#allocation3 + $0x8] sm:$0xff]
        %v4474 = vld [vmem:[#allocation3 + $0x10] sm:$0xff]
        %v4475 = vld [vmem:[#allocation3 + $0x18] sm:$0xff]
        %v4476 = vld [vmem:[#allocation3 + $0x20] sm:$0xff]
        %v4477 = vld [vmem:[#allocation3 + $0x28] sm:$0xff]
        %v4478 = vld [vmem:[#allocation3 + $0x30] sm:$0xff]
        %v4479 = vld [vmem:[#allocation3 + $0x38] sm:$0xff]
        %v4480 = vld [vmem:[#allocation3 + $0x40] sm:$0xff]
        %v4481 = vld [vmem:[#allocation3 + $0x48] sm:$0xff]
        %v4482 = vld [vmem:[#allocation3 + $0x50] sm:$0xff]
        %v4483 = vld [vmem:[#allocation3 + $0x58] sm:$0xff]
        %v4484 = vld [vmem:[#allocation3 + $0x60] sm:$0xff]
        %v4485 = vld [vmem:[#allocation3 + $0x68] sm:$0xff]
        %v4486 = vld [vmem:[#allocation3 + $0x70] sm:$0xff]
        %v4487 = vld [vmem:[#allocation3 + $0x78] sm:$0xff]
        %4489 = vset.pattern.permute.xlu0 1
        %4490 = vperm.xlu0 %4489, %v4456
        %v4491 = vpop.permute.xlu0 %4490
        %4494 = vset.pattern.permute.xlu0 1
        %4495 = vperm.xlu0 %4494, %v4457
        %v4496 = vpop.permute.xlu0 %4495
        %4499 = vset.pattern.permute.xlu0 1
        %4500 = vperm.xlu0 %4499, %v4458
        %v4501 = vpop.permute.xlu0 %4500
        %4504 = vset.pattern.permute.xlu0 1
        %4505 = vperm.xlu0 %4504, %v4459
        %v4506 = vpop.permute.xlu0 %4505
        %4509 = vset.pattern.permute.xlu0 1
        %4510 = vperm.xlu0 %4509, %v4460
        %v4511 = vpop.permute.xlu0 %4510
        %4514 = vset.pattern.permute.xlu0 1
        %4515 = vperm.xlu0 %4514, %v4461
        %v4516 = vpop.permute.xlu0 %4515
        %4519 = vset.pattern.permute.xlu0 1
        %4520 = vperm.xlu0 %4519, %v4462
        %v4521 = vpop.permute.xlu0 %4520
        %4524 = vset.pattern.permute.xlu0 1
        %4525 = vperm.xlu0 %4524, %v4463
        %v4526 = vpop.permute.xlu0 %4525
        %4529 = vset.pattern.permute.xlu0 1
        %4530 = vperm.xlu0 %4529, %v4464
        %v4531 = vpop.permute.xlu0 %4530
        %4534 = vset.pattern.permute.xlu0 1
        %4535 = vperm.xlu0 %4534, %v4465
        %v4536 = vpop.permute.xlu0 %4535
        %4539 = vset.pattern.permute.xlu0 1
        %4540 = vperm.xlu0 %4539, %v4466
        %v4541 = vpop.permute.xlu0 %4540
        %4544 = vset.pattern.permute.xlu0 1
        %4545 = vperm.xlu0 %4544, %v4467
        %v4546 = vpop.permute.xlu0 %4545
        %4549 = vset.pattern.permute.xlu0 1
        %4550 = vperm.xlu0 %4549, %v4468
        %v4551 = vpop.permute.xlu0 %4550
        %4554 = vset.pattern.permute.xlu0 1
        %4555 = vperm.xlu0 %4554, %v4469
        %v4556 = vpop.permute.xlu0 %4555
        %4559 = vset.pattern.permute.xlu0 1
        %4560 = vperm.xlu0 %4559, %v4470
        %v4561 = vpop.permute.xlu0 %4560
        %4564 = vset.pattern.permute.xlu0 1
        %4565 = vperm.xlu0 %4564, %v4471
        %v4566 = vpop.permute.xlu0 %4565
        %v4568 = vmul.f32 %v4472, %v4491
        %v4569 = vmul.f32 %v4473, %v4496
        %v4570 = vmul.f32 %v4474, %v4501
        %v4571 = vmul.f32 %v4475, %v4506
        %v4572 = vmul.f32 %v4476, %v4511
        %v4573 = vmul.f32 %v4477, %v4516
        %v4574 = vmul.f32 %v4478, %v4521
        %v4575 = vmul.f32 %v4479, %v4526
        %v4576 = vmul.f32 %v4480, %v4531
        %v4577 = vmul.f32 %v4481, %v4536
        %v4578 = vmul.f32 %v4482, %v4541
        %v4579 = vmul.f32 %v4483, %v4546
        %v4580 = vmul.f32 %v4484, %v4551
        %v4581 = vmul.f32 %v4485, %v4556
        %v4582 = vmul.f32 %v4486, %v4561
        %v4583 = vmul.f32 %v4487, %v4566
        %4584 = vst.msk [vmem:[#allocation3] sm:$0xff] %vm2699, %v4568
        %4585 = vst.msk [vmem:[#allocation3 + $0x8] sm:$0xff] %vm2699, %v4569
        %4586 = vst.msk [vmem:[#allocation3 + $0x10] sm:$0xff] %vm2699, %v4570
        %4587 = vst.msk [vmem:[#allocation3 + $0x18] sm:$0xff] %vm2699, %v4571
        %4588 = vst.msk [vmem:[#allocation3 + $0x20] sm:$0xff] %vm2699, %v4572
        %4589 = vst.msk [vmem:[#allocation3 + $0x28] sm:$0xff] %vm2699, %v4573
        %4590 = vst.msk [vmem:[#allocation3 + $0x30] sm:$0xff] %vm2699, %v4574
        %4591 = vst.msk [vmem:[#allocation3 + $0x38] sm:$0xff] %vm2699, %v4575
        %4592 = vst.msk [vmem:[#allocation3 + $0x40] sm:$0xff] %vm2699, %v4576
        %4593 = vst.msk [vmem:[#allocation3 + $0x48] sm:$0xff] %vm2699, %v4577
        %4594 = vst.msk [vmem:[#allocation3 + $0x50] sm:$0xff] %vm2699, %v4578
        %4595 = vst.msk [vmem:[#allocation3 + $0x58] sm:$0xff] %vm2699, %v4579
        %4596 = vst.msk [vmem:[#allocation3 + $0x60] sm:$0xff] %vm2699, %v4580
        %4597 = vst.msk [vmem:[#allocation3 + $0x68] sm:$0xff] %vm2699, %v4581
        %4598 = vst.msk [vmem:[#allocation3 + $0x70] sm:$0xff] %vm2699, %v4582
        %4599 = vst.msk [vmem:[#allocation3 + $0x78] sm:$0xff] %vm2699, %v4583
        %v4600 = vld [vmem:[#allocation5] sm:$0xff]
        %v4601 = vld [vmem:[#allocation5 + $0x8] sm:$0xff]
        %v4602 = vld [vmem:[#allocation5 + $0x10] sm:$0xff]
        %v4603 = vld [vmem:[#allocation5 + $0x18] sm:$0xff]
        %v4604 = vld [vmem:[#allocation5 + $0x20] sm:$0xff]
        %v4605 = vld [vmem:[#allocation5 + $0x28] sm:$0xff]
        %v4606 = vld [vmem:[#allocation5 + $0x30] sm:$0xff]
        %v4607 = vld [vmem:[#allocation5 + $0x38] sm:$0xff]
        %v4608 = vld [vmem:[#allocation5 + $0x40] sm:$0xff]
        %v4609 = vld [vmem:[#allocation5 + $0x48] sm:$0xff]
        %v4610 = vld [vmem:[#allocation5 + $0x50] sm:$0xff]
        %v4611 = vld [vmem:[#allocation5 + $0x58] sm:$0xff]
        %v4612 = vld [vmem:[#allocation5 + $0x60] sm:$0xff]
        %v4613 = vld [vmem:[#allocation5 + $0x68] sm:$0xff]
        %v4614 = vld [vmem:[#allocation5 + $0x70] sm:$0xff]
        %v4615 = vld [vmem:[#allocation5 + $0x78] sm:$0xff]
        %v4616 = vrcp.pop %v4600
        %v4617 = vrcp.pop %v4601
        %v4618 = vrcp.pop %v4602
        %v4619 = vrcp.pop %v4603
        %v4620 = vrcp.pop %v4604
        %v4621 = vrcp.pop %v4605
        %v4622 = vrcp.pop %v4606
        %v4623 = vrcp.pop %v4607
        %v4624 = vrcp.pop %v4608
        %v4625 = vrcp.pop %v4609
        %v4626 = vrcp.pop %v4610
        %v4627 = vrcp.pop %v4611
        %v4628 = vrcp.pop %v4612
        %v4629 = vrcp.pop %v4613
        %v4630 = vrcp.pop %v4614
        %v4631 = vrcp.pop %v4615
        %v4632 = vld [vmem:[#allocation3] sm:$0xff]
        %v4633 = vld [vmem:[#allocation3 + $0x8] sm:$0xff]
        %v4634 = vld [vmem:[#allocation3 + $0x10] sm:$0xff]
        %v4635 = vld [vmem:[#allocation3 + $0x18] sm:$0xff]
        %v4636 = vld [vmem:[#allocation3 + $0x20] sm:$0xff]
        %v4637 = vld [vmem:[#allocation3 + $0x28] sm:$0xff]
        %v4638 = vld [vmem:[#allocation3 + $0x30] sm:$0xff]
        %v4639 = vld [vmem:[#allocation3 + $0x38] sm:$0xff]
        %v4640 = vld [vmem:[#allocation3 + $0x40] sm:$0xff]
        %v4641 = vld [vmem:[#allocation3 + $0x48] sm:$0xff]
        %v4642 = vld [vmem:[#allocation3 + $0x50] sm:$0xff]
        %v4643 = vld [vmem:[#allocation3 + $0x58] sm:$0xff]
        %v4644 = vld [vmem:[#allocation3 + $0x60] sm:$0xff]
        %v4645 = vld [vmem:[#allocation3 + $0x68] sm:$0xff]
        %v4646 = vld [vmem:[#allocation3 + $0x70] sm:$0xff]
        %v4647 = vld [vmem:[#allocation3 + $0x78] sm:$0xff]
        %4649 = vset.pattern.permute.xlu0 2
        %4650 = vperm.xlu0 %4649, %v4616
        %v4651 = vpop.permute.xlu0 %4650
        %4654 = vset.pattern.permute.xlu0 2
        %4655 = vperm.xlu0 %4654, %v4617
        %v4656 = vpop.permute.xlu0 %4655
        %4659 = vset.pattern.permute.xlu0 2
        %4660 = vperm.xlu0 %4659, %v4618
        %v4661 = vpop.permute.xlu0 %4660
        %4664 = vset.pattern.permute.xlu0 2
        %4665 = vperm.xlu0 %4664, %v4619
        %v4666 = vpop.permute.xlu0 %4665
        %4669 = vset.pattern.permute.xlu0 2
        %4670 = vperm.xlu0 %4669, %v4620
        %v4671 = vpop.permute.xlu0 %4670
        %4674 = vset.pattern.permute.xlu0 2
        %4675 = vperm.xlu0 %4674, %v4621
        %v4676 = vpop.permute.xlu0 %4675
        %4679 = vset.pattern.permute.xlu0 2
        %4680 = vperm.xlu0 %4679, %v4622
        %v4681 = vpop.permute.xlu0 %4680
        %4684 = vset.pattern.permute.xlu0 2
        %4685 = vperm.xlu0 %4684, %v4623
        %v4686 = vpop.permute.xlu0 %4685
        %4689 = vset.pattern.permute.xlu0 2
        %4690 = vperm.xlu0 %4689, %v4624
        %v4691 = vpop.permute.xlu0 %4690
        %4694 = vset.pattern.permute.xlu0 2
        %4695 = vperm.xlu0 %4694, %v4625
        %v4696 = vpop.permute.xlu0 %4695
        %4699 = vset.pattern.permute.xlu0 2
        %4700 = vperm.xlu0 %4699, %v4626
        %v4701 = vpop.permute.xlu0 %4700
        %4704 = vset.pattern.permute.xlu0 2
        %4705 = vperm.xlu0 %4704, %v4627
        %v4706 = vpop.permute.xlu0 %4705
        %4709 = vset.pattern.permute.xlu0 2
        %4710 = vperm.xlu0 %4709, %v4628
        %v4711 = vpop.permute.xlu0 %4710
        %4714 = vset.pattern.permute.xlu0 2
        %4715 = vperm.xlu0 %4714, %v4629
        %v4716 = vpop.permute.xlu0 %4715
        %4719 = vset.pattern.permute.xlu0 2
        %4720 = vperm.xlu0 %4719, %v4630
        %v4721 = vpop.permute.xlu0 %4720
        %4724 = vset.pattern.permute.xlu0 2
        %4725 = vperm.xlu0 %4724, %v4631
        %v4726 = vpop.permute.xlu0 %4725
        %v4728 = vmul.f32 %v4632, %v4651
        %v4729 = vmul.f32 %v4633, %v4656
        %v4730 = vmul.f32 %v4634, %v4661
        %v4731 = vmul.f32 %v4635, %v4666
        %v4732 = vmul.f32 %v4636, %v4671
        %v4733 = vmul.f32 %v4637, %v4676
        %v4734 = vmul.f32 %v4638, %v4681
        %v4735 = vmul.f32 %v4639, %v4686
        %v4736 = vmul.f32 %v4640, %v4691
        %v4737 = vmul.f32 %v4641, %v4696
        %v4738 = vmul.f32 %v4642, %v4701
        %v4739 = vmul.f32 %v4643, %v4706
        %v4740 = vmul.f32 %v4644, %v4711
        %v4741 = vmul.f32 %v4645, %v4716
        %v4742 = vmul.f32 %v4646, %v4721
        %v4743 = vmul.f32 %v4647, %v4726
        %4744 = vst.msk [vmem:[#allocation3] sm:$0xff] %vm3471, %v4728
        %4745 = vst.msk [vmem:[#allocation3 + $0x8] sm:$0xff] %vm3471, %v4729
        %4746 = vst.msk [vmem:[#allocation3 + $0x10] sm:$0xff] %vm3471, %v4730
        %4747 = vst.msk [vmem:[#allocation3 + $0x18] sm:$0xff] %vm3471, %v4731
        %4748 = vst.msk [vmem:[#allocation3 + $0x20] sm:$0xff] %vm3471, %v4732
        %4749 = vst.msk [vmem:[#allocation3 + $0x28] sm:$0xff] %vm3471, %v4733
        %4750 = vst.msk [vmem:[#allocation3 + $0x30] sm:$0xff] %vm3471, %v4734
        %4751 = vst.msk [vmem:[#allocation3 + $0x38] sm:$0xff] %vm3471, %v4735
        %4752 = vst.msk [vmem:[#allocation3 + $0x40] sm:$0xff] %vm3471, %v4736
        %4753 = vst.msk [vmem:[#allocation3 + $0x48] sm:$0xff] %vm3471, %v4737
        %4754 = vst.msk [vmem:[#allocation3 + $0x50] sm:$0xff] %vm3471, %v4738
        %4755 = vst.msk [vmem:[#allocation3 + $0x58] sm:$0xff] %vm3471, %v4739
        %4756 = vst.msk [vmem:[#allocation3 + $0x60] sm:$0xff] %vm3471, %v4740
        %4757 = vst.msk [vmem:[#allocation3 + $0x68] sm:$0xff] %vm3471, %v4741
        %4758 = vst.msk [vmem:[#allocation3 + $0x70] sm:$0xff] %vm3471, %v4742
        %4759 = vst.msk [vmem:[#allocation3 + $0x78] sm:$0xff] %vm3471, %v4743
        %v4760 = vld [vmem:[#allocation5] sm:$0xff]
        %v4761 = vld [vmem:[#allocation5 + $0x8] sm:$0xff]
        %v4762 = vld [vmem:[#allocation5 + $0x10] sm:$0xff]
        %v4763 = vld [vmem:[#allocation5 + $0x18] sm:$0xff]
        %v4764 = vld [vmem:[#allocation5 + $0x20] sm:$0xff]
        %v4765 = vld [vmem:[#allocation5 + $0x28] sm:$0xff]
        %v4766 = vld [vmem:[#allocation5 + $0x30] sm:$0xff]
        %v4767 = vld [vmem:[#allocation5 + $0x38] sm:$0xff]
        %v4768 = vld [vmem:[#allocation5 + $0x40] sm:$0xff]
        %v4769 = vld [vmem:[#allocation5 + $0x48] sm:$0xff]
        %v4770 = vld [vmem:[#allocation5 + $0x50] sm:$0xff]
        %v4771 = vld [vmem:[#allocation5 + $0x58] sm:$0xff]
        %v4772 = vld [vmem:[#allocation5 + $0x60] sm:$0xff]
        %v4773 = vld [vmem:[#allocation5 + $0x68] sm:$0xff]
        %v4774 = vld [vmem:[#allocation5 + $0x70] sm:$0xff]
        %v4775 = vld [vmem:[#allocation5 + $0x78] sm:$0xff]
        %v4776 = vrcp.pop %v4760
        %v4777 = vrcp.pop %v4761
        %v4778 = vrcp.pop %v4762
        %v4779 = vrcp.pop %v4763
        %v4780 = vrcp.pop %v4764
        %v4781 = vrcp.pop %v4765
        %v4782 = vrcp.pop %v4766
        %v4783 = vrcp.pop %v4767
        %v4784 = vrcp.pop %v4768
        %v4785 = vrcp.pop %v4769
        %v4786 = vrcp.pop %v4770
        %v4787 = vrcp.pop %v4771
        %v4788 = vrcp.pop %v4772
        %v4789 = vrcp.pop %v4773
        %v4790 = vrcp.pop %v4774
        %v4791 = vrcp.pop %v4775
        %v4792 = vld [vmem:[#allocation3] sm:$0xff]
        %v4793 = vld [vmem:[#allocation3 + $0x8] sm:$0xff]
        %v4794 = vld [vmem:[#allocation3 + $0x10] sm:$0xff]
        %v4795 = vld [vmem:[#allocation3 + $0x18] sm:$0xff]
        %v4796 = vld [vmem:[#allocation3 + $0x20] sm:$0xff]
        %v4797 = vld [vmem:[#allocation3 + $0x28] sm:$0xff]
        %v4798 = vld [vmem:[#allocation3 + $0x30] sm:$0xff]
        %v4799 = vld [vmem:[#allocation3 + $0x38] sm:$0xff]
        %v4800 = vld [vmem:[#allocation3 + $0x40] sm:$0xff]
        %v4801 = vld [vmem:[#allocation3 + $0x48] sm:$0xff]
        %v4802 = vld [vmem:[#allocation3 + $0x50] sm:$0xff]
        %v4803 = vld [vmem:[#allocation3 + $0x58] sm:$0xff]
        %v4804 = vld [vmem:[#allocation3 + $0x60] sm:$0xff]
        %v4805 = vld [vmem:[#allocation3 + $0x68] sm:$0xff]
        %v4806 = vld [vmem:[#allocation3 + $0x70] sm:$0xff]
        %v4807 = vld [vmem:[#allocation3 + $0x78] sm:$0xff]
        %4809 = vset.pattern.permute.xlu0 3
        %4810 = vperm.xlu0 %4809, %v4776
        %v4811 = vpop.permute.xlu0 %4810
        %4814 = vset.pattern.permute.xlu0 3
        %4815 = vperm.xlu0 %4814, %v4777
        %v4816 = vpop.permute.xlu0 %4815
        %4819 = vset.pattern.permute.xlu0 3
        %4820 = vperm.xlu0 %4819, %v4778
        %v4821 = vpop.permute.xlu0 %4820
        %4824 = vset.pattern.permute.xlu0 3
        %4825 = vperm.xlu0 %4824, %v4779
        %v4826 = vpop.permute.xlu0 %4825
        %4829 = vset.pattern.permute.xlu0 3
        %4830 = vperm.xlu0 %4829, %v4780
        %v4831 = vpop.permute.xlu0 %4830
        %4834 = vset.pattern.permute.xlu0 3
        %4835 = vperm.xlu0 %4834, %v4781
        %v4836 = vpop.permute.xlu0 %4835
        %4839 = vset.pattern.permute.xlu0 3
        %4840 = vperm.xlu0 %4839, %v4782
        %v4841 = vpop.permute.xlu0 %4840
        %4844 = vset.pattern.permute.xlu0 3
        %4845 = vperm.xlu0 %4844, %v4783
        %v4846 = vpop.permute.xlu0 %4845
        %4849 = vset.pattern.permute.xlu0 3
        %4850 = vperm.xlu0 %4849, %v4784
        %v4851 = vpop.permute.xlu0 %4850
        %4854 = vset.pattern.permute.xlu0 3
        %4855 = vperm.xlu0 %4854, %v4785
        %v4856 = vpop.permute.xlu0 %4855
        %4859 = vset.pattern.permute.xlu0 3
        %4860 = vperm.xlu0 %4859, %v4786
        %v4861 = vpop.permute.xlu0 %4860
        %4864 = vset.pattern.permute.xlu0 3
        %4865 = vperm.xlu0 %4864, %v4787
        %v4866 = vpop.permute.xlu0 %4865
        %4869 = vset.pattern.permute.xlu0 3
        %4870 = vperm.xlu0 %4869, %v4788
        %v4871 = vpop.permute.xlu0 %4870
        %4874 = vset.pattern.permute.xlu0 3
        %4875 = vperm.xlu0 %4874, %v4789
        %v4876 = vpop.permute.xlu0 %4875
        %4879 = vset.pattern.permute.xlu0 3
        %4880 = vperm.xlu0 %4879, %v4790
        %v4881 = vpop.permute.xlu0 %4880
        %4884 = vset.pattern.permute.xlu0 3
        %4885 = vperm.xlu0 %4884, %v4791
        %v4886 = vpop.permute.xlu0 %4885
        %v4888 = vmul.f32 %v4792, %v4811
        %v4889 = vmul.f32 %v4793, %v4816
        %v4890 = vmul.f32 %v4794, %v4821
        %v4891 = vmul.f32 %v4795, %v4826
        %v4892 = vmul.f32 %v4796, %v4831
        %v4893 = vmul.f32 %v4797, %v4836
        %v4894 = vmul.f32 %v4798, %v4841
        %v4895 = vmul.f32 %v4799, %v4846
        %v4896 = vmul.f32 %v4800, %v4851
        %v4897 = vmul.f32 %v4801, %v4856
        %v4898 = vmul.f32 %v4802, %v4861
        %v4899 = vmul.f32 %v4803, %v4866
        %v4900 = vmul.f32 %v4804, %v4871
        %v4901 = vmul.f32 %v4805, %v4876
        %v4902 = vmul.f32 %v4806, %v4881
        %v4903 = vmul.f32 %v4807, %v4886
        %4904 = vst.msk [vmem:[#allocation3] sm:$0xff] %vm4243, %v4888
        %4905 = vst.msk [vmem:[#allocation3 + $0x8] sm:$0xff] %vm4243, %v4889
        %4906 = vst.msk [vmem:[#allocation3 + $0x10] sm:$0xff] %vm4243, %v4890
        %4907 = vst.msk [vmem:[#allocation3 + $0x18] sm:$0xff] %vm4243, %v4891
        %4908 = vst.msk [vmem:[#allocation3 + $0x20] sm:$0xff] %vm4243, %v4892
        %4909 = vst.msk [vmem:[#allocation3 + $0x28] sm:$0xff] %vm4243, %v4893
        %4910 = vst.msk [vmem:[#allocation3 + $0x30] sm:$0xff] %vm4243, %v4894
        %4911 = vst.msk [vmem:[#allocation3 + $0x38] sm:$0xff] %vm4243, %v4895
        %4912 = vst.msk [vmem:[#allocation3 + $0x40] sm:$0xff] %vm4243, %v4896
        %4913 = vst.msk [vmem:[#allocation3 + $0x48] sm:$0xff] %vm4243, %v4897
        %4914 = vst.msk [vmem:[#allocation3 + $0x50] sm:$0xff] %vm4243, %v4898
        %4915 = vst.msk [vmem:[#allocation3 + $0x58] sm:$0xff] %vm4243, %v4899
        %4916 = vst.msk [vmem:[#allocation3 + $0x60] sm:$0xff] %vm4243, %v4900
        %4917 = vst.msk [vmem:[#allocation3 + $0x68] sm:$0xff] %vm4243, %v4901
        %4918 = vst.msk [vmem:[#allocation3 + $0x70] sm:$0xff] %vm4243, %v4902
        %4919 = vst.msk [vmem:[#allocation3 + $0x78] sm:$0xff] %vm4243, %v4903
        %v4920 = vld [vmem:[#allocation3] sm:$0xff]
        %v4921 = vld [vmem:[#allocation3 + $0x8] sm:$0xff]
        %v4922 = vld [vmem:[#allocation3 + $0x10] sm:$0xff]
        %v4923 = vld [vmem:[#allocation3 + $0x18] sm:$0xff]
        %v4924 = vld [vmem:[#allocation3 + $0x20] sm:$0xff]
        %v4925 = vld [vmem:[#allocation3 + $0x28] sm:$0xff]
        %v4926 = vld [vmem:[#allocation3 + $0x30] sm:$0xff]
        %v4927 = vld [vmem:[#allocation3 + $0x38] sm:$0xff]
        %v4928 = vld [vmem:[#allocation3 + $0x40] sm:$0xff]
        %v4929 = vld [vmem:[#allocation3 + $0x48] sm:$0xff]
        %v4930 = vld [vmem:[#allocation3 + $0x50] sm:$0xff]
        %v4931 = vld [vmem:[#allocation3 + $0x58] sm:$0xff]
        %v4932 = vld [vmem:[#allocation3 + $0x60] sm:$0xff]
        %v4933 = vld [vmem:[#allocation3 + $0x68] sm:$0xff]
        %v4934 = vld [vmem:[#allocation3 + $0x70] sm:$0xff]
        %v4935 = vld [vmem:[#allocation3 + $0x78] sm:$0xff]
        %v4936 = vld [vmem:[%s7] sm:$0xff]
        %v4937 = vld [vmem:[%s7 + $0x8] sm:$0xff]
        %v4938 = vld [vmem:[%s7 + $0x10] sm:$0xff]
        %v4939 = vld [vmem:[%s7 + $0x18] sm:$0xff]
        %v4940 = vperm.slane %v472, 3
        %4945 = vrot.lane.b32.xlu0 %v4936, 32
        %v4946 = vpop.permute.xlu0 %4945
        %4947 = vrot.lane.b32.xlu0 %v4937, 32
        %v4948 = vpop.permute.xlu0 %4947
        %4949 = vrot.lane.b32.xlu0 %v4938, 32
        %v4950 = vpop.permute.xlu0 %4949
        %4951 = vrot.lane.b32.xlu0 %v4939, 32
        %v4952 = vpop.permute.xlu0 %4951
        %v4958 = vsel %vm778, %v4920, 0
        %v4961 = vsel %vm778, %v4921, 0
        %v4964 = vsel %vm778, %v4922, 0
        %v4967 = vsel %vm778, %v4923, 0
        %v4970 = vsel %vm778, %v4924, 0
        %v4973 = vsel %vm778, %v4925, 0
        %v4976 = vsel %vm778, %v4926, 0
        %v4979 = vsel %vm778, %v4927, 0
        %v4982 = vsel %vm778, %v4928, 0
        %v4985 = vsel %vm778, %v4929, 0
        %v4988 = vsel %vm778, %v4930, 0
        %v4991 = vsel %vm778, %v4931, 0
        %v4994 = vsel %vm778, %v4932, 0
        %v4997 = vsel %vm778, %v4933, 0
        %v5000 = vsel %vm778, %v4934, 0
        %v5003 = vsel %vm778, %v4935, 0
        %5005 = vmatpush.msra.mxu0 0.0
        %5006 = vmatpush.msra.mxu0 0.0
        %5007 = vmatpush.msra.mxu0 0.0
        %5008 = vmatpush.msra.mxu0 0.0
        %5009 = vmatpush.msra.mxu0 0.0
        %5010 = vmatpush.msra.mxu0 0.0
        %5011 = vmatpush.msra.mxu0 0.0
        %5012 = vmatpush.msra.mxu0 0.0
        %5013 = vmatpush.msra.mxu0 0.0
        %5014 = vmatpush.msra.mxu0 0.0
        %5015 = vmatpush.msra.mxu0 0.0
        %5016 = vmatpush.msra.mxu0 0.0
        %5017 = vmatpush.msra.mxu0 %v4952
        %5018 = vmatpush.msra.mxu0 %v4950
        %5019 = vmatpush.msra.mxu0 %v4948
        %5020 = vmatpush.msra.mxu0 %v4946
        %5021 = vmatmul.f32.gmra.mxu0 %v4958
        %v5022 = vpop.f32.mrf.mxu0
        %v5023 = vadd.f32 %v4940, %v5022
        %5024 = vmatmul.f32.gmra.mxu0 %v4961
        %v5025 = vpop.f32.mrf.mxu0
        %v5026 = vadd.f32 %v4940, %v5025
        %5027 = vmatmul.f32.gmra.mxu0 %v4964
        %v5028 = vpop.f32.mrf.mxu0
        %v5029 = vadd.f32 %v4940, %v5028
        %5030 = vmatmul.f32.gmra.mxu0 %v4967
        %v5031 = vpop.f32.mrf.mxu0
        %v5032 = vadd.f32 %v4940, %v5031
        %5033 = vmatmul.f32.gmra.mxu0 %v4970
        %v5034 = vpop.f32.mrf.mxu0
        %v5035 = vadd.f32 %v4940, %v5034
        %5036 = vmatmul.f32.gmra.mxu0 %v4973
        %v5037 = vpop.f32.mrf.mxu0
        %v5038 = vadd.f32 %v4940, %v5037
        %5039 = vmatmul.f32.gmra.mxu0 %v4976
        %v5040 = vpop.f32.mrf.mxu0
        %v5041 = vadd.f32 %v4940, %v5040
        %5042 = vmatmul.f32.gmra.mxu0 %v4979
        %v5043 = vpop.f32.mrf.mxu0
        %v5044 = vadd.f32 %v4940, %v5043
        %5045 = vmatmul.f32.gmra.mxu0 %v4982
        %v5046 = vpop.f32.mrf.mxu0
        %v5047 = vadd.f32 %v4940, %v5046
        %5048 = vmatmul.f32.gmra.mxu0 %v4985
        %v5049 = vpop.f32.mrf.mxu0
        %v5050 = vadd.f32 %v4940, %v5049
        %5051 = vmatmul.f32.gmra.mxu0 %v4988
        %v5052 = vpop.f32.mrf.mxu0
        %v5053 = vadd.f32 %v4940, %v5052
        %5054 = vmatmul.f32.gmra.mxu0 %v4991
        %v5055 = vpop.f32.mrf.mxu0
        %v5056 = vadd.f32 %v4940, %v5055
        %5057 = vmatmul.f32.gmra.mxu0 %v4994
        %v5058 = vpop.f32.mrf.mxu0
        %v5059 = vadd.f32 %v4940, %v5058
        %5060 = vmatmul.f32.gmra.mxu0 %v4997
        %v5061 = vpop.f32.mrf.mxu0
        %v5062 = vadd.f32 %v4940, %v5061
        %5063 = vmatmul.f32.gmra.mxu0 %v5000
        %v5064 = vpop.f32.mrf.mxu0
        %v5065 = vadd.f32 %v4940, %v5064
        %5066 = vmatmul.f32.gmra.mxu0 %v5003
        %v5067 = vpop.f32.mrf.mxu0
        %v5068 = vadd.f32 %v4940, %v5067
        %5069 = vdwg.mxu0
        %v5070 = vld [vmem:[%s455] sm:$0xff]
        %v5071 = vld [vmem:[%s455 + $0x8] sm:$0xff]
        %v5072 = vld [vmem:[%s455 + $0x10] sm:$0xff]
        %v5073 = vld [vmem:[%s455 + $0x18] sm:$0xff]
        %v5074 = vld [vmem:[%s455 + $0x20] sm:$0xff]
        %v5075 = vld [vmem:[%s455 + $0x28] sm:$0xff]
        %v5076 = vld [vmem:[%s455 + $0x30] sm:$0xff]
        %v5077 = vld [vmem:[%s455 + $0x38] sm:$0xff]
        %v5078 = vld [vmem:[%s455 + $0x40] sm:$0xff]
        %v5079 = vld [vmem:[%s455 + $0x48] sm:$0xff]
        %v5080 = vld [vmem:[%s455 + $0x50] sm:$0xff]
        %v5081 = vld [vmem:[%s455 + $0x58] sm:$0xff]
        %v5082 = vld [vmem:[%s455 + $0x60] sm:$0xff]
        %v5083 = vld [vmem:[%s455 + $0x68] sm:$0xff]
        %v5084 = vld [vmem:[%s455 + $0x70] sm:$0xff]
        %v5085 = vld [vmem:[%s455 + $0x78] sm:$0xff]
        %v5086 = vadd.f32 %v5023, %v5070
        %v5087 = vadd.f32 %v5026, %v5071
        %v5088 = vadd.f32 %v5029, %v5072
        %v5089 = vadd.f32 %v5032, %v5073
        %v5090 = vadd.f32 %v5035, %v5074
        %v5091 = vadd.f32 %v5038, %v5075
        %v5092 = vadd.f32 %v5041, %v5076
        %v5093 = vadd.f32 %v5044, %v5077
        %v5094 = vadd.f32 %v5047, %v5078
        %v5095 = vadd.f32 %v5050, %v5079
        %v5096 = vadd.f32 %v5053, %v5080
        %v5097 = vadd.f32 %v5056, %v5081
        %v5098 = vadd.f32 %v5059, %v5082
        %v5099 = vadd.f32 %v5062, %v5083
        %v5100 = vadd.f32 %v5065, %v5084
        %v5101 = vadd.f32 %v5068, %v5085
        %v5102 = vld [vmem:[%s431] sm:$0xff]
        %v5103 = vld [vmem:[%s431 + $0x8] sm:$0xff]
        %v5104 = vld [vmem:[%s431 + $0x10] sm:$0xff]
        %v5105 = vld [vmem:[%s431 + $0x18] sm:$0xff]
        %v5106 = vld [vmem:[%s431 + $0x20] sm:$0xff]
        %v5107 = vld [vmem:[%s431 + $0x28] sm:$0xff]
        %v5108 = vld [vmem:[%s431 + $0x30] sm:$0xff]
        %v5109 = vld [vmem:[%s431 + $0x38] sm:$0xff]
        %v5110 = vld [vmem:[%s431 + $0x40] sm:$0xff]
        %v5111 = vld [vmem:[%s431 + $0x48] sm:$0xff]
        %v5112 = vld [vmem:[%s431 + $0x50] sm:$0xff]
        %v5113 = vld [vmem:[%s431 + $0x58] sm:$0xff]
        %v5114 = vld [vmem:[%s431 + $0x60] sm:$0xff]
        %v5115 = vld [vmem:[%s431 + $0x68] sm:$0xff]
        %v5116 = vld [vmem:[%s431 + $0x70] sm:$0xff]
        %v5117 = vld [vmem:[%s431 + $0x78] sm:$0xff]
        %v5118 = vadd.f32 %v5086, %v5102
        %v5119 = vadd.f32 %v5087, %v5103
        %v5120 = vadd.f32 %v5088, %v5104
        %v5121 = vadd.f32 %v5089, %v5105
        %v5122 = vadd.f32 %v5090, %v5106
        %v5123 = vadd.f32 %v5091, %v5107
        %v5124 = vadd.f32 %v5092, %v5108
        %v5125 = vadd.f32 %v5093, %v5109
        %v5126 = vadd.f32 %v5094, %v5110
        %v5127 = vadd.f32 %v5095, %v5111
        %v5128 = vadd.f32 %v5096, %v5112
        %v5129 = vadd.f32 %v5097, %v5113
        %v5130 = vadd.f32 %v5098, %v5114
        %v5131 = vadd.f32 %v5099, %v5115
        %v5132 = vadd.f32 %v5100, %v5116
        %v5133 = vadd.f32 %v5101, %v5117
        %v5134 = vsel %vm778, %v5118, 0.0
        %5135 = vadd.xlane.f32.xlu0 %v5134
        %v5136 = vpop.xlane.xlu0 %5135
        %v5137 = vsel %vm778, %v5119, 0.0
        %5138 = vadd.xlane.f32.xlu0 %v5137
        %v5139 = vpop.xlane.xlu0 %5138
        %v5140 = vsel %vm778, %v5120, 0.0
        %5141 = vadd.xlane.f32.xlu0 %v5140
        %v5142 = vpop.xlane.xlu0 %5141
        %v5143 = vsel %vm778, %v5121, 0.0
        %5144 = vadd.xlane.f32.xlu0 %v5143
        %v5145 = vpop.xlane.xlu0 %5144
        %v5146 = vsel %vm778, %v5122, 0.0
        %5147 = vadd.xlane.f32.xlu0 %v5146
        %v5148 = vpop.xlane.xlu0 %5147
        %v5149 = vsel %vm778, %v5123, 0.0
        %5150 = vadd.xlane.f32.xlu0 %v5149
        %v5151 = vpop.xlane.xlu0 %5150
        %v5152 = vsel %vm778, %v5124, 0.0
        %5153 = vadd.xlane.f32.xlu0 %v5152
        %v5154 = vpop.xlane.xlu0 %5153
        %v5155 = vsel %vm778, %v5125, 0.0
        %5156 = vadd.xlane.f32.xlu0 %v5155
        %v5157 = vpop.xlane.xlu0 %5156
        %v5158 = vsel %vm778, %v5126, 0.0
        %5159 = vadd.xlane.f32.xlu0 %v5158
        %v5160 = vpop.xlane.xlu0 %5159
        %v5161 = vsel %vm778, %v5127, 0.0
        %5162 = vadd.xlane.f32.xlu0 %v5161
        %v5163 = vpop.xlane.xlu0 %5162
        %v5164 = vsel %vm778, %v5128, 0.0
        %5165 = vadd.xlane.f32.xlu0 %v5164
        %v5166 = vpop.xlane.xlu0 %5165
        %v5167 = vsel %vm778, %v5129, 0.0
        %5168 = vadd.xlane.f32.xlu0 %v5167
        %v5169 = vpop.xlane.xlu0 %5168
        %v5170 = vsel %vm778, %v5130, 0.0
        %5171 = vadd.xlane.f32.xlu0 %v5170
        %v5172 = vpop.xlane.xlu0 %5171
        %v5173 = vsel %vm778, %v5131, 0.0
        %5174 = vadd.xlane.f32.xlu0 %v5173
        %v5175 = vpop.xlane.xlu0 %5174
        %v5176 = vsel %vm778, %v5132, 0.0
        %5177 = vadd.xlane.f32.xlu0 %v5176
        %v5178 = vpop.xlane.xlu0 %5177
        %v5179 = vsel %vm778, %v5133, 0.0
        %5180 = vadd.xlane.f32.xlu0 %v5179
        %v5181 = vpop.xlane.xlu0 %5180
        %v5182 = vrcp.pop 32.0
        %v5183 = vmul.f32 32.0, %v5182
        %v5184 = vsub.f32 1.0, %v5183
        %v5185 = vmul.f32 %v5182, %v5184
        %v5186 = vadd.f32 %v5182, %v5185
        %vm5187 = vweird.f32 %v5182
        %v5188 = vsel %vm5187, %v5182, %v5186
        %v5189 = vmul.f32 %v5136, %v5188
        %v5190 = vmul.f32 %v5139, %v5188
        %v5191 = vmul.f32 %v5142, %v5188
        %v5192 = vmul.f32 %v5145, %v5188
        %v5193 = vmul.f32 %v5148, %v5188
        %v5194 = vmul.f32 %v5151, %v5188
        %v5195 = vmul.f32 %v5154, %v5188
        %v5196 = vmul.f32 %v5157, %v5188
        %v5197 = vmul.f32 %v5160, %v5188
        %v5198 = vmul.f32 %v5163, %v5188
        %v5199 = vmul.f32 %v5166, %v5188
        %v5200 = vmul.f32 %v5169, %v5188
        %v5201 = vmul.f32 %v5172, %v5188
        %v5202 = vmul.f32 %v5175, %v5188
        %v5203 = vmul.f32 %v5178, %v5188
        %v5204 = vmul.f32 %v5181, %v5188
        %v5205 = vsub.f32 %v5118, %v5189
        %v5206 = vsub.f32 %v5119, %v5190
        %v5207 = vsub.f32 %v5120, %v5191
        %v5208 = vsub.f32 %v5121, %v5192
        %v5209 = vsub.f32 %v5122, %v5193
        %v5210 = vsub.f32 %v5123, %v5194
        %v5211 = vsub.f32 %v5124, %v5195
        %v5212 = vsub.f32 %v5125, %v5196
        %v5213 = vsub.f32 %v5126, %v5197
        %v5214 = vsub.f32 %v5127, %v5198
        %v5215 = vsub.f32 %v5128, %v5199
        %v5216 = vsub.f32 %v5129, %v5200
        %v5217 = vsub.f32 %v5130, %v5201
        %v5218 = vsub.f32 %v5131, %v5202
        %v5219 = vsub.f32 %v5132, %v5203
        %v5220 = vsub.f32 %v5133, %v5204
        %v5221 = vmul.f32 %v5205, %v5205
        %v5222 = vmul.f32 %v5206, %v5206
        %v5223 = vmul.f32 %v5207, %v5207
        %v5224 = vmul.f32 %v5208, %v5208
        %v5225 = vmul.f32 %v5209, %v5209
        %v5226 = vmul.f32 %v5210, %v5210
        %v5227 = vmul.f32 %v5211, %v5211
        %v5228 = vmul.f32 %v5212, %v5212
        %v5229 = vmul.f32 %v5213, %v5213
        %v5230 = vmul.f32 %v5214, %v5214
        %v5231 = vmul.f32 %v5215, %v5215
        %v5232 = vmul.f32 %v5216, %v5216
        %v5233 = vmul.f32 %v5217, %v5217
        %v5234 = vmul.f32 %v5218, %v5218
        %v5235 = vmul.f32 %v5219, %v5219
        %v5236 = vmul.f32 %v5220, %v5220
        %v5237 = vsel %vm778, %v5221, 0.0
        %5238 = vadd.xlane.f32.xlu0 %v5237
        %v5239 = vpop.xlane.xlu0 %5238
        %v5240 = vsel %vm778, %v5222, 0.0
        %5241 = vadd.xlane.f32.xlu0 %v5240
        %v5242 = vpop.xlane.xlu0 %5241
        %v5243 = vsel %vm778, %v5223, 0.0
        %5244 = vadd.xlane.f32.xlu0 %v5243
        %v5245 = vpop.xlane.xlu0 %5244
        %v5246 = vsel %vm778, %v5224, 0.0
        %5247 = vadd.xlane.f32.xlu0 %v5246
        %v5248 = vpop.xlane.xlu0 %5247
        %v5249 = vsel %vm778, %v5225, 0.0
        %5250 = vadd.xlane.f32.xlu0 %v5249
        %v5251 = vpop.xlane.xlu0 %5250
        %v5252 = vsel %vm778, %v5226, 0.0
        %5253 = vadd.xlane.f32.xlu0 %v5252
        %v5254 = vpop.xlane.xlu0 %5253
        %v5255 = vsel %vm778, %v5227, 0.0
        %5256 = vadd.xlane.f32.xlu0 %v5255
        %v5257 = vpop.xlane.xlu0 %5256
        %v5258 = vsel %vm778, %v5228, 0.0
        %5259 = vadd.xlane.f32.xlu0 %v5258
        %v5260 = vpop.xlane.xlu0 %5259
        %v5261 = vsel %vm778, %v5229, 0.0
        %5262 = vadd.xlane.f32.xlu0 %v5261
        %v5263 = vpop.xlane.xlu0 %5262
        %v5264 = vsel %vm778, %v5230, 0.0
        %5265 = vadd.xlane.f32.xlu0 %v5264
        %v5266 = vpop.xlane.xlu0 %5265
        %v5267 = vsel %vm778, %v5231, 0.0
        %5268 = vadd.xlane.f32.xlu0 %v5267
        %v5269 = vpop.xlane.xlu0 %5268
        %v5270 = vsel %vm778, %v5232, 0.0
        %5271 = vadd.xlane.f32.xlu0 %v5270
        %v5272 = vpop.xlane.xlu0 %5271
        %v5273 = vsel %vm778, %v5233, 0.0
        %5274 = vadd.xlane.f32.xlu0 %v5273
        %v5275 = vpop.xlane.xlu0 %5274
        %v5276 = vsel %vm778, %v5234, 0.0
        %5277 = vadd.xlane.f32.xlu0 %v5276
        %v5278 = vpop.xlane.xlu0 %5277
        %v5279 = vsel %vm778, %v5235, 0.0
        %5280 = vadd.xlane.f32.xlu0 %v5279
        %v5281 = vpop.xlane.xlu0 %5280
        %v5282 = vsel %vm778, %v5236, 0.0
        %5283 = vadd.xlane.f32.xlu0 %v5282
        %v5284 = vpop.xlane.xlu0 %5283
        %v5285 = vmul.f32 %v5239, %v5188
        %v5286 = vmul.f32 %v5242, %v5188
        %v5287 = vmul.f32 %v5245, %v5188
        %v5288 = vmul.f32 %v5248, %v5188
        %v5289 = vmul.f32 %v5251, %v5188
        %v5290 = vmul.f32 %v5254, %v5188
        %v5291 = vmul.f32 %v5257, %v5188
        %v5292 = vmul.f32 %v5260, %v5188
        %v5293 = vmul.f32 %v5263, %v5188
        %v5294 = vmul.f32 %v5266, %v5188
        %v5295 = vmul.f32 %v5269, %v5188
        %v5296 = vmul.f32 %v5272, %v5188
        %v5297 = vmul.f32 %v5275, %v5188
        %v5298 = vmul.f32 %v5278, %v5188
        %v5299 = vmul.f32 %v5281, %v5188
        %v5300 = vmul.f32 %v5284, %v5188
        %v5301 = vadd.f32 %v5285, 1e-05
        %v5302 = vadd.f32 %v5286, 1e-05
        %v5303 = vadd.f32 %v5287, 1e-05
        %v5304 = vadd.f32 %v5288, 1e-05
        %v5305 = vadd.f32 %v5289, 1e-05
        %v5306 = vadd.f32 %v5290, 1e-05
        %v5307 = vadd.f32 %v5291, 1e-05
        %v5308 = vadd.f32 %v5292, 1e-05
        %v5309 = vadd.f32 %v5293, 1e-05
        %v5310 = vadd.f32 %v5294, 1e-05
        %v5311 = vadd.f32 %v5295, 1e-05
        %v5312 = vadd.f32 %v5296, 1e-05
        %v5313 = vadd.f32 %v5297, 1e-05
        %v5314 = vadd.f32 %v5298, 1e-05
        %v5315 = vadd.f32 %v5299, 1e-05
        %v5316 = vadd.f32 %v5300, 1e-05
        %v5317 = vrsqrt.pop %v5301
        %v5318 = vmul.f32 %v5317, %v5301
        %v5319 = vmul.f32 %v5318, %v5317
        %v5320 = vmul.f32 0.5, %v5319
        %v5321 = vsub.f32 1.5, %v5320
        %v5322 = vmul.f32 %v5317, %v5321
        %vm5323 = vweird.f32 %v5301
        %vm5324 = vweird.f32 %v5317
        %vm5325 = vmor %vm5323, %vm5324
        %v5326 = vsel %vm5325, %v5317, %v5322
        %v5327 = vrsqrt.pop %v5302
        %v5328 = vmul.f32 %v5327, %v5302
        %v5329 = vmul.f32 %v5328, %v5327
        %v5330 = vmul.f32 0.5, %v5329
        %v5331 = vsub.f32 1.5, %v5330
        %v5332 = vmul.f32 %v5327, %v5331
        %vm5333 = vweird.f32 %v5302
        %vm5334 = vweird.f32 %v5327
        %vm5335 = vmor %vm5333, %vm5334
        %v5336 = vsel %vm5335, %v5327, %v5332
        %v5337 = vrsqrt.pop %v5303
        %v5338 = vmul.f32 %v5337, %v5303
        %v5339 = vmul.f32 %v5338, %v5337
        %v5340 = vmul.f32 0.5, %v5339
        %v5341 = vsub.f32 1.5, %v5340
        %v5342 = vmul.f32 %v5337, %v5341
        %vm5343 = vweird.f32 %v5303
        %vm5344 = vweird.f32 %v5337
        %vm5345 = vmor %vm5343, %vm5344
        %v5346 = vsel %vm5345, %v5337, %v5342
        %v5347 = vrsqrt.pop %v5304
        %v5348 = vmul.f32 %v5347, %v5304
        %v5349 = vmul.f32 %v5348, %v5347
        %v5350 = vmul.f32 0.5, %v5349
        %v5351 = vsub.f32 1.5, %v5350
        %v5352 = vmul.f32 %v5347, %v5351
        %vm5353 = vweird.f32 %v5304
        %vm5354 = vweird.f32 %v5347
        %vm5355 = vmor %vm5353, %vm5354
        %v5356 = vsel %vm5355, %v5347, %v5352
        %v5357 = vrsqrt.pop %v5305
        %v5358 = vmul.f32 %v5357, %v5305
        %v5359 = vmul.f32 %v5358, %v5357
        %v5360 = vmul.f32 0.5, %v5359
        %v5361 = vsub.f32 1.5, %v5360
        %v5362 = vmul.f32 %v5357, %v5361
        %vm5363 = vweird.f32 %v5305
        %vm5364 = vweird.f32 %v5357
        %vm5365 = vmor %vm5363, %vm5364
        %v5366 = vsel %vm5365, %v5357, %v5362
        %v5367 = vrsqrt.pop %v5306
        %v5368 = vmul.f32 %v5367, %v5306
        %v5369 = vmul.f32 %v5368, %v5367
        %v5370 = vmul.f32 0.5, %v5369
        %v5371 = vsub.f32 1.5, %v5370
        %v5372 = vmul.f32 %v5367, %v5371
        %vm5373 = vweird.f32 %v5306
        %vm5374 = vweird.f32 %v5367
        %vm5375 = vmor %vm5373, %vm5374
        %v5376 = vsel %vm5375, %v5367, %v5372
        %v5377 = vrsqrt.pop %v5307
        %v5378 = vmul.f32 %v5377, %v5307
        %v5379 = vmul.f32 %v5378, %v5377
        %v5380 = vmul.f32 0.5, %v5379
        %v5381 = vsub.f32 1.5, %v5380
        %v5382 = vmul.f32 %v5377, %v5381
        %vm5383 = vweird.f32 %v5307
        %vm5384 = vweird.f32 %v5377
        %vm5385 = vmor %vm5383, %vm5384
        %v5386 = vsel %vm5385, %v5377, %v5382
        %v5387 = vrsqrt.pop %v5308
        %v5388 = vmul.f32 %v5387, %v5308
        %v5389 = vmul.f32 %v5388, %v5387
        %v5390 = vmul.f32 0.5, %v5389
        %v5391 = vsub.f32 1.5, %v5390
        %v5392 = vmul.f32 %v5387, %v5391
        %vm5393 = vweird.f32 %v5308
        %vm5394 = vweird.f32 %v5387
        %vm5395 = vmor %vm5393, %vm5394
        %v5396 = vsel %vm5395, %v5387, %v5392
        %v5397 = vrsqrt.pop %v5309
        %v5398 = vmul.f32 %v5397, %v5309
        %v5399 = vmul.f32 %v5398, %v5397
        %v5400 = vmul.f32 0.5, %v5399
        %v5401 = vsub.f32 1.5, %v5400
        %v5402 = vmul.f32 %v5397, %v5401
        %vm5403 = vweird.f32 %v5309
        %vm5404 = vweird.f32 %v5397
        %vm5405 = vmor %vm5403, %vm5404
        %v5406 = vsel %vm5405, %v5397, %v5402
        %v5407 = vrsqrt.pop %v5310
        %v5408 = vmul.f32 %v5407, %v5310
        %v5409 = vmul.f32 %v5408, %v5407
        %v5410 = vmul.f32 0.5, %v5409
        %v5411 = vsub.f32 1.5, %v5410
        %v5412 = vmul.f32 %v5407, %v5411
        %vm5413 = vweird.f32 %v5310
        %vm5414 = vweird.f32 %v5407
        %vm5415 = vmor %vm5413, %vm5414
        %v5416 = vsel %vm5415, %v5407, %v5412
        %v5417 = vrsqrt.pop %v5311
        %v5418 = vmul.f32 %v5417, %v5311
        %v5419 = vmul.f32 %v5418, %v5417
        %v5420 = vmul.f32 0.5, %v5419
        %v5421 = vsub.f32 1.5, %v5420
        %v5422 = vmul.f32 %v5417, %v5421
        %vm5423 = vweird.f32 %v5311
        %vm5424 = vweird.f32 %v5417
        %vm5425 = vmor %vm5423, %vm5424
        %v5426 = vsel %vm5425, %v5417, %v5422
        %v5427 = vrsqrt.pop %v5312
        %v5428 = vmul.f32 %v5427, %v5312
        %v5429 = vmul.f32 %v5428, %v5427
        %v5430 = vmul.f32 0.5, %v5429
        %v5431 = vsub.f32 1.5, %v5430
        %v5432 = vmul.f32 %v5427, %v5431
        %vm5433 = vweird.f32 %v5312
        %vm5434 = vweird.f32 %v5427
        %vm5435 = vmor %vm5433, %vm5434
        %v5436 = vsel %vm5435, %v5427, %v5432
        %v5437 = vrsqrt.pop %v5313
        %v5438 = vmul.f32 %v5437, %v5313
        %v5439 = vmul.f32 %v5438, %v5437
        %v5440 = vmul.f32 0.5, %v5439
        %v5441 = vsub.f32 1.5, %v5440
        %v5442 = vmul.f32 %v5437, %v5441
        %vm5443 = vweird.f32 %v5313
        %vm5444 = vweird.f32 %v5437
        %vm5445 = vmor %vm5443, %vm5444
        %v5446 = vsel %vm5445, %v5437, %v5442
        %v5447 = vrsqrt.pop %v5314
        %v5448 = vmul.f32 %v5447, %v5314
        %v5449 = vmul.f32 %v5448, %v5447
        %v5450 = vmul.f32 0.5, %v5449
        %v5451 = vsub.f32 1.5, %v5450
        %v5452 = vmul.f32 %v5447, %v5451
        %vm5453 = vweird.f32 %v5314
        %vm5454 = vweird.f32 %v5447
        %vm5455 = vmor %vm5453, %vm5454
        %v5456 = vsel %vm5455, %v5447, %v5452
        %v5457 = vrsqrt.pop %v5315
        %v5458 = vmul.f32 %v5457, %v5315
        %v5459 = vmul.f32 %v5458, %v5457
        %v5460 = vmul.f32 0.5, %v5459
        %v5461 = vsub.f32 1.5, %v5460
        %v5462 = vmul.f32 %v5457, %v5461
        %vm5463 = vweird.f32 %v5315
        %vm5464 = vweird.f32 %v5457
        %vm5465 = vmor %vm5463, %vm5464
        %v5466 = vsel %vm5465, %v5457, %v5462
        %v5467 = vrsqrt.pop %v5316
        %v5468 = vmul.f32 %v5467, %v5316
        %v5469 = vmul.f32 %v5468, %v5467
        %v5470 = vmul.f32 0.5, %v5469
        %v5471 = vsub.f32 1.5, %v5470
        %v5472 = vmul.f32 %v5467, %v5471
        %vm5473 = vweird.f32 %v5316
        %vm5474 = vweird.f32 %v5467
        %vm5475 = vmor %vm5473, %vm5474
        %v5476 = vsel %vm5475, %v5467, %v5472
        %v5477 = vmul.f32 %v5205, %v5326
        %v5478 = vmul.f32 %v5206, %v5336
        %v5479 = vmul.f32 %v5207, %v5346
        %v5480 = vmul.f32 %v5208, %v5356
        %v5481 = vmul.f32 %v5209, %v5366
        %v5482 = vmul.f32 %v5210, %v5376
        %v5483 = vmul.f32 %v5211, %v5386
        %v5484 = vmul.f32 %v5212, %v5396
        %v5485 = vmul.f32 %v5213, %v5406
        %v5486 = vmul.f32 %v5214, %v5416
        %v5487 = vmul.f32 %v5215, %v5426
        %v5488 = vmul.f32 %v5216, %v5436
        %v5489 = vmul.f32 %v5217, %v5446
        %v5490 = vmul.f32 %v5218, %v5456
        %v5491 = vmul.f32 %v5219, %v5466
        %v5492 = vmul.f32 %v5220, %v5476
        %v5493 = vperm.slane %v472, 4
        %v5494 = vmul.f32 %v5477, %v5493
        %v5495 = vmul.f32 %v5478, %v5493
        %v5496 = vmul.f32 %v5479, %v5493
        %v5497 = vmul.f32 %v5480, %v5493
        %v5498 = vmul.f32 %v5481, %v5493
        %v5499 = vmul.f32 %v5482, %v5493
        %v5500 = vmul.f32 %v5483, %v5493
        %v5501 = vmul.f32 %v5484, %v5493
        %v5502 = vmul.f32 %v5485, %v5493
        %v5503 = vmul.f32 %v5486, %v5493
        %v5504 = vmul.f32 %v5487, %v5493
        %v5505 = vmul.f32 %v5488, %v5493
        %v5506 = vmul.f32 %v5489, %v5493
        %v5507 = vmul.f32 %v5490, %v5493
        %v5508 = vmul.f32 %v5491, %v5493
        %v5509 = vmul.f32 %v5492, %v5493
        %v5510 = vperm.slane %v472, 5
        %v5511 = vadd.f32 %v5494, %v5510
        %v5512 = vadd.f32 %v5495, %v5510
        %v5513 = vadd.f32 %v5496, %v5510
        %v5514 = vadd.f32 %v5497, %v5510
        %v5515 = vadd.f32 %v5498, %v5510
        %v5516 = vadd.f32 %v5499, %v5510
        %v5517 = vadd.f32 %v5500, %v5510
        %v5518 = vadd.f32 %v5501, %v5510
        %v5519 = vadd.f32 %v5502, %v5510
        %v5520 = vadd.f32 %v5503, %v5510
        %v5521 = vadd.f32 %v5504, %v5510
        %v5522 = vadd.f32 %v5505, %v5510
        %v5523 = vadd.f32 %v5506, %v5510
        %v5524 = vadd.f32 %v5507, %v5510
        %v5525 = vadd.f32 %v5508, %v5510
        %v5526 = vadd.f32 %v5509, %v5510
        %5527 = vst.msk [vmem:[%s470] sm:$0xff] %vm778, %v5511
        %5528 = vst.msk [vmem:[%s470 + $0x8] sm:$0xff] %vm778, %v5512
        %5529 = vst.msk [vmem:[%s470 + $0x10] sm:$0xff] %vm778, %v5513
        %5530 = vst.msk [vmem:[%s470 + $0x18] sm:$0xff] %vm778, %v5514
        %5531 = vst.msk [vmem:[%s470 + $0x20] sm:$0xff] %vm778, %v5515
        %5532 = vst.msk [vmem:[%s470 + $0x28] sm:$0xff] %vm778, %v5516
        %5533 = vst.msk [vmem:[%s470 + $0x30] sm:$0xff] %vm778, %v5517
        %5534 = vst.msk [vmem:[%s470 + $0x38] sm:$0xff] %vm778, %v5518
        %5535 = vst.msk [vmem:[%s470 + $0x40] sm:$0xff] %vm778, %v5519
        %5536 = vst.msk [vmem:[%s470 + $0x48] sm:$0xff] %vm778, %v5520
        %5537 = vst.msk [vmem:[%s470 + $0x50] sm:$0xff] %vm778, %v5521
        %5538 = vst.msk [vmem:[%s470 + $0x58] sm:$0xff] %vm778, %v5522
        %5539 = vst.msk [vmem:[%s470 + $0x60] sm:$0xff] %vm778, %v5523
        %5540 = vst.msk [vmem:[%s470 + $0x68] sm:$0xff] %vm778, %v5524
        %5541 = vst.msk [vmem:[%s470 + $0x70] sm:$0xff] %vm778, %v5525
        %5542 = vst.msk [vmem:[%s470 + $0x78] sm:$0xff] %vm778, %v5526
      $region64: #{tpu_custom_call.1} parent=55 // pred_fallthru
        _
      %s5543 = smul.u32 16, %s24
      %p5544 = scmp.lt.s32.totalorder %s5543, 31
      %s5545 = scalar_select %p5544, %s5543, 31
      %s5546 = smul.addr %s5545, 8
      %s5547 = scalar_lea.vmem %s9, %s5546
      // Predicated region
      $region65: #{tpu_custom_call.1} parent=55 // pred_check
        %p5548 = pneg %p274
      $region66: #{tpu_custom_call.1} parent=55 // pred_check_branch
        %5550 = sbr.rel (%p5548) target = $region68
      $region67: #{tpu_custom_call.1} parent=55 // pred_region
        %s5551 = smul.u32 16, %s24
      $region68: #{tpu_custom_call.1} parent=55 // pred_fallthru
        _
    $region56: #{tpu_custom_call.1} parent=5 // pred_fallthru
      _
    %p5552 = scmp.le.s32.totalorder 2, %s15
    // Predicated region
    $region69: #{tpu_custom_call.1} parent=5 // pred_check
      %p5553 = pneg %p5552
    $region70: #{tpu_custom_call.1} parent=5 // pred_check_branch
      %5555 = sbr.rel (%p5553) target = $region72
    $region71: #{tpu_custom_call.1} parent=5 // pred_region
      %s5556 = ssub.s32 %s15, 2
      // Predicated region
      $region73: #{tpu_custom_call.1} parent=71 // pred_check
        %p5557 = pneg %p280
      $region74: #{tpu_custom_call.1} parent=71 // pred_check_branch
        %5559 = sbr.rel (%p5557) target = $region76
      $region75: #{tpu_custom_call.1} parent=71 // pred_region
        %s5560 = smul.u32 16, %s26
        %p5561 = scmp.lt.s32.totalorder %s5560, 31
        %s5562 = scalar_select %p5561, %s5560, 31
        %s5563 = smul.addr %s5562, 8
        %s5564 = scalar_lea.vmem %s9, %s5563
      $region76: #{tpu_custom_call.1} parent=71 // pred_fallthru
        _
    $region72: #{tpu_custom_call.1} parent=5 // pred_fallthru
      _
  $region6: #{tpu_custom_call.1} parent=0 // loop_footer
    %s19 = sadd.s32 1, %s15
  $region7: #{tpu_custom_call.1} parent=0 // loop_footer_branch
    %14 = sbr.rel target = $region3
  $region8: #{tpu_custom_call.1} parent=0 // loop_exit
    _

</llo_original>
